<compile_context>
chip_gen: v5e
topology: v5e:2x2
jax: 0.10.0
libtpu: 0.0.40
codegen_flags: <defaults>
</compile_context>

<pallas_src>
import functools

import jax
import jax.numpy as jnp
from jax.experimental import pallas as pl
from jax.experimental.pallas import tpu as pltpu

NEG_SLOPE = 0.05  # LeakyReLU slope used throughout RFDN


def _round_up(x, m):
    return ((x + m - 1) // m) * m


def _cdiv(a, b):
    return (a + b - 1) // b


def _choose_lane_tile(M, cap=1024):
    """Pick a lane tile (multiple of 128, <= cap) that splits M with minimal padding."""
    m128 = _round_up(max(M, 1), 128)
    if m128 <= cap:
        return m128
    n_tiles = _cdiv(m128, cap)
    return _round_up(_cdiv(m128, n_tiles), 128)


# ---------------------------------------------------------------------------
# Pallas kernels: fused transposed matmul + bias + activation [+ residual|gate]
# Block layout:  x: (1, K, TM) bf16 ; w: (Cout, K) bf16 ; b: (Cout, 1) f32
#                extra/out: (1, Cout, TM) f32   (TM on lanes -> dense stores)
# ---------------------------------------------------------------------------
def _make_matmul_kernel(act, mode):
    def act_fn(y):
        if act == "relu":
            return jnp.maximum(y, 0.0)
        if act == "lrelu":
            return jnp.where(y >= 0, y, NEG_SLOPE * y)
        return y

    if mode == "plain":
        def kernel(x_ref, w_ref, b_ref, o_ref):
            y = jnp.dot(w_ref[...], x_ref[0],
                        preferred_element_type=jnp.float32)      # (Cout, TM) f32
            o_ref[0] = act_fn(y + b_ref[...])
    elif mode == "residual":
        def kernel(x_ref, w_ref, b_ref, r_ref, o_ref):
            y = jnp.dot(w_ref[...], x_ref[0],
                        preferred_element_type=jnp.float32)
            o_ref[0] = act_fn(y + b_ref[...] + r_ref[0])
    else:  # "gate": out = gate * sigmoid(conv(x) + b)   (ESA tail)
        def kernel(x_ref, w_ref, b_ref, g_ref, o_ref):
            y = jnp.dot(w_ref[...], x_ref[0],
                        preferred_element_type=jnp.float32)
            o_ref[0] = g_ref[0] * jax.nn.sigmoid(y + b_ref[...])
    return kernel


def _matmul_bias_act(xm, wm, b2, act, mode, extra=None):
    # xm: (N, K, M) bf16 ; wm: (Cout, K) bf16 ; b2: (Cout, 1) f32
    # extra: (N, Cout, M) f32 or None
    N, K, M = xm.shape
    Cout = wm.shape[0]

    TM = _choose_lane_tile(M)
    M_pad = _round_up(M, TM)
    if M_pad != M:
        xm = jnp.pad(xm, ((0, 0), (0, 0), (0, M_pad - M)))
        if extra is not None:
            extra = jnp.pad(extra, ((0, 0), (0, 0), (0, M_pad - M)))

    grid = (N, M_pad // TM)
    kernel = _make_matmul_kernel(act, mode)

    in_specs = [
        pl.BlockSpec((1, K, TM), lambda n, m: (n, 0, m)),      # patches tile
        pl.BlockSpec((Cout, K), lambda n, m: (0, 0)),          # weights (resident)
        pl.BlockSpec((Cout, 1), lambda n, m: (0, 0)),          # bias (resident)
    ]
    args = [xm, wm, b2]
    if mode != "plain":
        in_specs.append(pl.BlockSpec((1, Cout, TM), lambda n, m: (n, 0, m)))
        args.append(extra.astype(jnp.float32))

    out = pl.pallas_call(
        kernel,
        out_shape=jax.ShapeDtypeStruct((N, Cout, M_pad), jnp.float32),
        grid=grid,
        in_specs=in_specs,
        out_specs=pl.BlockSpec((1, Cout, TM), lambda n, m: (n, 0, m)),
        compiler_params=pltpu.CompilerParams(
            dimension_semantics=("parallel", "parallel"),
            vmem_limit_bytes=32 * 1024 * 1024,   # safe on v5e/v6e/v7x
        ),
    )(*args)

    if M_pad != M:
        out = out[:, :, :M]
    return out


# ---------------------------------------------------------------------------
# Conv2d wrapper (NCHW). Padding / patch extraction is JAX glue; the matmul,
# bias, activation and residual/gate epilogues run inside the Pallas kernel.
# ---------------------------------------------------------------------------
def conv2d(x, w, b, *, stride=1, padding=0, act=None, residual=None, gate=None):
    # x: (N, Cin, H, W) f32 ; w: (KH, KW, Cin, Cout) ; b: (Cout,)
    N, Cin, H, W = x.shape
    KH, KW, _, Cout = w.shape

    xb = x.astype(jnp.bfloat16)  # bf16 patches -> native MXU + half the traffic
    if padding > 0:
        xb = jnp.pad(xb, ((0, 0), (0, 0), (padding, padding), (padding, padding)))
    Hp, Wp = xb.shape[2], xb.shape[3]
    OH = (Hp - KH) // stride + 1
    OW = (Wp - KW) // stride + 1

    if KH == 1 and KW == 1 and stride == 1:
        patches = xb                                            # (N, Cin, H, W)
    else:
        cols = []
        for i in range(KH):
            for j in range(KW):
                cols.append(
                    xb[:, :, i:i + stride * (OH - 1) + 1:stride,
                       j:j + stride * (OW - 1) + 1:stride])
        patches = jnp.concatenate(cols, axis=1)                 # (N, K, OH, OW)

    K = KH * KW * Cin
    M = OH * OW
    xm = patches.reshape(N, K, M)
    wm = jnp.transpose(w.reshape(K, Cout)).astype(jnp.bfloat16)  # (Cout, K)
    b2 = b.reshape(Cout, 1).astype(jnp.float32)

    if gate is not None:
        mode, extra = "gate", gate.reshape(N, Cout, M)
    elif residual is not None:
        mode, extra = "residual", residual.reshape(N, Cout, M)
    else:
        mode, extra = "plain", None

    out = _matmul_bias_act(xm, wm, b2, act, mode, extra)        # (N, Cout, M)
    return out.reshape(N, Cout, OH, OW)


# ---------------------------------------------------------------------------
# Small spatial ops kept in plain JAX (data-movement glue, NCHW)
# ---------------------------------------------------------------------------
def max_pool2d(x, k, s):
    n, c, h, w = x.shape
    oh = (h - k) // s + 1
    ow = (w - k) // s + 1
    vals = [x[:, :, i:i + s * (oh - 1) + 1:s, j:j + s * (ow - 1) + 1:s]
            for i in range(k) for j in range(k)]
    return jnp.max(jnp.stack(vals, axis=0), axis=0)


def bilinear_resize(x, out_h, out_w):
    # PyTorch F.interpolate(mode='bilinear', align_corners=False) semantics.
    n, c, h, w = x.shape
    if (h, w) == (out_h, out_w):
        return x
    scale_h = h / out_h
    scale_w = w / out_w
    sy = jnp.maximum((jnp.arange(out_h, dtype=jnp.float32) + 0.5) * scale_h - 0.5, 0.0)
    sx = jnp.maximum((jnp.arange(out_w, dtype=jnp.float32) + 0.5) * scale_w - 0.5, 0.0)
    y0 = jnp.clip(jnp.floor(sy).astype(jnp.int32), 0, h - 1)
    x0 = jnp.clip(jnp.floor(sx).astype(jnp.int32), 0, w - 1)
    y1 = jnp.clip(y0 + 1, 0, h - 1)
    x1 = jnp.clip(x0 + 1, 0, w - 1)
    wy = (sy - y0.astype(jnp.float32))[None, None, :, None]
    wx = (sx - x0.astype(jnp.float32))[None, None, None, :]

    def g(yi, xi):
        return x[:, :, yi, :][:, :, :, xi]

    top = g(y0, x0) * (1.0 - wx) + g(y0, x1) * wx
    bot = g(y1, x0) * (1.0 - wx) + g(y1, x1) * wx
    return top * (1.0 - wy) + bot * wy


# ---------------------------------------------------------------------------
# Parameter initialization (deterministic, PyTorch Conv2d-style uniform bounds)
# ---------------------------------------------------------------------------
def _conv_params(key, kh, kw, cin, cout):
    kw_key, kb_key = jax.random.split(key)
    fan_in = kh * kw * cin
    bound = 1.0 / (fan_in ** 0.5)
    w = jax.random.uniform(kw_key, (kh, kw, cin, cout), jnp.float32, -bound, bound)
    b = jax.random.uniform(kb_key, (cout,), jnp.float32, -bound, bound)
    return {"w": w, "b": b}


def init_esa(key, n_feats):
    f = n_feats // 4
    ks = jax.random.split(key, 7)
    return {
        "conv1": _conv_params(ks[0], 1, 1, n_feats, f),
        "conv_f": _conv_params(ks[1], 1, 1, f, f),
        "conv_max": _conv_params(ks[2], 3, 3, f, f),
        "conv2": _conv_params(ks[3], 3, 3, f, f),
        "conv3": _conv_params(ks[4], 3, 3, f, f),
        "conv3_": _conv_params(ks[5], 3, 3, f, f),
        "conv4": _conv_params(ks[6], 1, 1, f, n_feats),
    }


def init_rfdb(key, c):
    dc = c // 2
    ks = jax.random.split(key, 9)
    return {
        "c1_d": _conv_params(ks[0], 1, 1, c, dc),
        "c1_r": _conv_params(ks[1], 3, 3, c, c),
        "c2_d": _conv_params(ks[2], 1, 1, c, dc),
        "c2_r": _conv_params(ks[3], 3, 3, c, c),
        "c3_d": _conv_params(ks[4], 1, 1, c, dc),
        "c3_r": _conv_params(ks[5], 3, 3, c, c),
        "c4": _conv_params(ks[6], 3, 3, c, dc),
        "c5": _conv_params(ks[7], 1, 1, dc * 4, c),
        "esa": init_esa(ks[8], c),
    }


def init_rfdn(key, in_nc, nf, num_modules=4):
    ks = jax.random.split(key, num_modules + 3)
    return {
        "fea_conv": _conv_params(ks[0], 3, 3, in_nc, nf),
        "B": [init_rfdb(ks[1 + i], nf) for i in range(num_modules)],
        "c": _conv_params(ks[num_modules + 1], 1, 1, nf * num_modules, nf),
        "LR_conv": _conv_params(ks[num_modules + 2], 3, 3, nf, nf),
    }


# ---------------------------------------------------------------------------
# Forward passes (ESA / RFDB / RFDN), mirroring the PyTorch module exactly
# ---------------------------------------------------------------------------
def esa_forward(p, x):
    n, c, h, w = x.shape
    c1_ = conv2d(x, p["conv1"]["w"], p["conv1"]["b"], padding=0)
    c1 = conv2d(c1_, p["conv2"]["w"], p["conv2"]["b"], stride=2, padding=0)
    v_max = max_pool2d(c1, 7, 3)
    v_range = conv2d(v_max, p["conv_max"]["w"], p["conv_max"]["b"], padding=1, act="relu")
    c3 = conv2d(v_range, p["conv3"]["w"], p["conv3"]["b"], padding=1, act="relu")
    c3 = conv2d(c3, p["conv3_"]["w"], p["conv3_"]["b"], padding=1)
    c3 = bilinear_resize(c3, h, w)
    # cf = conv_f(c1_);  conv4 input is (c3 + cf) -> fuse the add into conv_f
    cf = conv2d(c1_, p["conv_f"]["w"], p["conv_f"]["b"], padding=0, residual=c3)
    # m = sigmoid(conv4(c3+cf)); return x * m  -> fused gate epilogue
    return conv2d(cf, p["conv4"]["w"], p["conv4"]["b"], padding=0, gate=x)


def _pack_dr(pd, pr):
    # Embed the 1x1 distill conv as the centre tap of the 3x3 remaining conv
    # and concatenate along Cout -> one wider matmul reading the input once.
    kh, kw, cin, _ = pr["w"].shape
    dc = pd["w"].shape[-1]
    wd3 = jnp.zeros((kh, kw, cin, dc), jnp.float32).at[kh // 2, kw // 2].set(pd["w"][0, 0])
    w = jnp.concatenate([wd3, pr["w"]], axis=-1)           # (3,3,Cin,dc+c)
    b = jnp.concatenate([pd["b"], pr["b"]], axis=0)
    return w, b


def rfdb_forward(p, x):
    n, c, h, w_ = x.shape
    dc = p["c1_d"]["w"].shape[-1]
    zeros_d = jnp.zeros((n, dc, h, w_), jnp.float32)

    def dr(pd, pr, inp):
        wdr, bdr = _pack_dr(pd, pr)
        # d channels: lrelu(conv1x1(inp)); r channels: lrelu(conv3x3(inp) + inp)
        o = conv2d(inp, wdr, bdr, padding=1, act="lrelu",
                   residual=jnp.concatenate([zeros_d, inp], axis=1))
        return o[:, :dc], o[:, dc:]

    d1, r1 = dr(p["c1_d"], p["c1_r"], x)
    d2, r2 = dr(p["c2_d"], p["c2_r"], r1)
    d3, r3 = dr(p["c3_d"], p["c3_r"], r2)
    r4 = conv2d(r3, p["c4"]["w"], p["c4"]["b"], padding=1, act="lrelu")
    out = jnp.concatenate([d1, d2, d3, r4], axis=1)
    out = conv2d(out, p["c5"]["w"], p["c5"]["b"], padding=0)
    return esa_forward(p["esa"], out)


def rfdn_forward(params, x_nchw):
    x = x_nchw.astype(jnp.float32)  # internal layout == NCHW, no transposes
    fea = conv2d(x, params["fea_conv"]["w"], params["fea_conv"]["b"], padding=1)
    b1 = rfdb_forward(params["B"][0], fea)
    b2 = rfdb_forward(params["B"][1], b1)
    b3 = rfdb_forward(params["B"][2], b2)
    b4 = rfdb_forward(params["B"][3], b3)
    cat = jnp.concatenate([b1, b2, b3, b4], axis=1)
    out_b = conv2d(cat, params["c"]["w"], params["c"]["b"], padding=0, act="lrelu")
    # out_lr = LR_conv(out_B) + out_fea  -> residual fused into the conv kernel
    out_lr = conv2d(out_b, params["LR_conv"]["w"], params["LR_conv"]["b"],
                    padding=1, residual=fea)
    return out_lr


# ---------------------------------------------------------------------------
if __name__ == "__main__":
    key = jax.random.PRNGKey(0)
    kp, kx = jax.random.split(key)

    in_nc, nf, num_modules = 4, 8, 4
    params = init_rfdn(kp, in_nc, nf, num_modules=num_modules)

    x = jax.random.normal(kx, (2, in_nc, 16, 16), dtype=jnp.float32)

    fwd = jax.jit(functools.partial(rfdn_forward, params))
    out = fwd(x)
    jax.block_until_ready(out)

    assert out.shape == (2, nf, 16, 16), out.shape
    assert jnp.all(jnp.isfinite(out))
    print("KERNEL_OK")
</pallas_src>

<mosaic_0001>
module attributes {stable_mosaic.version = 11 : i64} {
  func.func @kernel(%arg0: i32, %arg1: i32, %arg2: memref<1x36x256xbf16, #tpu.memory_space<vmem>>, %arg3: memref<8x36xbf16, #tpu.memory_space<vmem>>, %arg4: memref<8x1xf32, #tpu.memory_space<vmem>>, %arg5: memref<1x8x256xf32, #tpu.memory_space<vmem>>) attributes {dimension_semantics = [#tpu.dimension_semantics<parallel>, #tpu.dimension_semantics<parallel>], iteration_bounds = array<i64: 2, 1>, scalar_prefetch = 0 : i64, scratch_operands = 0 : i64, tpu.core_type = #tpu.core_type<tc>, window_params = [{transform_indices = @transform_0, window_bounds = array<i64: 1, 36, 256>}, {pipeline_mode = #tpu.pipeline_mode<synchronous>, transform_indices = @transform_1, window_bounds = array<i64: 8, 36>}, {pipeline_mode = #tpu.pipeline_mode<synchronous>, transform_indices = @transform_2, window_bounds = array<i64: 8, 1>}, {transform_indices = @transform_3, window_bounds = array<i64: 1, 8, 256>}]} {
    %c0 = arith.constant 0 : index
    %c0_0 = arith.constant 0 : index
    %0 = vector.load %arg3[%c0, %c0_0] : memref<8x36xbf16, #tpu.memory_space<vmem>>, vector<8x36xbf16>
    %c0_1 = arith.constant 0 : index
    %c0_2 = arith.constant 0 : index
    %c0_3 = arith.constant 0 : index
    %1 = vector.load %arg2[%c0_1, %c0_2, %c0_3] : memref<1x36x256xbf16, #tpu.memory_space<vmem>>, vector<1x36x256xbf16>
    %2 = vector.shape_cast %1 : vector<1x36x256xbf16> to vector<36x256xbf16>
    %cst = arith.constant dense<0.000000e+00> : vector<8x256xf32>
    %3 = tpu.matmul %0, %2, %cst {dimension_numbers = #tpu.dot_dimension_numbers<[1], [0], [0], [1], [0, 0, 1, 1], [], []>} : vector<8x36xbf16>, vector<36x256xbf16>, vector<8x256xf32> -> vector<8x256xf32>
    %c0_4 = arith.constant 0 : index
    %c0_5 = arith.constant 0 : index
    %4 = vector.load %arg4[%c0_4, %c0_5] : memref<8x1xf32, #tpu.memory_space<vmem>>, vector<8x1xf32>
    %5 = vector.broadcast %4 : vector<8x1xf32> to vector<8x256xf32>
    %6 = arith.addf %3, %5 : vector<8x256xf32>
    %c0_6 = arith.constant 0 : index
    %c0_7 = arith.constant 0 : index
    %c0_8 = arith.constant 0 : index
    %7 = vector.load %arg5[%c0_6, %c0_7, %c0_8] : memref<1x8x256xf32, #tpu.memory_space<vmem>>, vector<1x8x256xf32>
    %8 = vector.shape_cast %7 : vector<1x8x256xf32> to vector<8x256xf32>
    %9 = vector.shape_cast %6 : vector<8x256xf32> to vector<1x8x256xf32>
    tpu.vector_store %arg5[%c0_6, %c0_7, %c0_8], %9 {strides = array<i32>} : memref<1x8x256xf32, #tpu.memory_space<vmem>>, vector<1x8x256xf32>,
    return
  }
  func.func @transform_0(%arg0: i32, %arg1: i32) -> (i32, i32, i32) {
    %c0_i32 = arith.constant 0 : i32
    %c0_i32_0 = arith.constant 0 : i32
    return %arg0, %c0_i32, %arg1 : i32, i32, i32
  }
  func.func @transform_1(%arg0: i32, %arg1: i32) -> (i32, i32) {
    %c0_i32 = arith.constant 0 : i32
    %c0_i32_0 = arith.constant 0 : i32
    %c0_i32_1 = arith.constant 0 : i32
    return %c0_i32, %c0_i32_0 : i32, i32
  }
  func.func @transform_2(%arg0: i32, %arg1: i32) -> (i32, i32) {
    %c0_i32 = arith.constant 0 : i32
    %c0_i32_0 = arith.constant 0 : i32
    %c0_i32_1 = arith.constant 0 : i32
    return %c0_i32, %c0_i32_0 : i32, i32
  }
  func.func @transform_3(%arg0: i32, %arg1: i32) -> (i32, i32, i32) {
    %c0_i32 = arith.constant 0 : i32
    %c0_i32_0 = arith.constant 0 : i32
    return %arg0, %c0_i32, %arg1 : i32, i32, i32
  }
}

module attributes {stable_mosaic.version = 11 : i64} {
  func.func @kernel(%arg0: i32, %arg1: i32, %arg2: memref<1x72x256xbf16, #tpu.memory_space<vmem>>, %arg3: memref<12x72xbf16, #tpu.memory_space<vmem>>, %arg4: memref<12x1xf32, #tpu.memory_space<vmem>>, %arg5: memref<1x12x256xf32, #tpu.memory_space<vmem>>, %arg6: memref<1x12x256xf32, #tpu.memory_space<vmem>>) attributes {dimension_semantics = [#tpu.dimension_semantics<parallel>, #tpu.dimension_semantics<parallel>], iteration_bounds = array<i64: 2, 1>, scalar_prefetch = 0 : i64, scratch_operands = 0 : i64, tpu.core_type = #tpu.core_type<tc>, window_params = [{transform_indices = @transform_0, window_bounds = array<i64: 1, 72, 256>}, {pipeline_mode = #tpu.pipeline_mode<synchronous>, transform_indices = @transform_1, window_bounds = array<i64: 12, 72>}, {pipeline_mode = #tpu.pipeline_mode<synchronous>, transform_indices = @transform_2, window_bounds = array<i64: 12, 1>}, {transform_indices = @transform_3, window_bounds = array<i64: 1, 12, 256>}, {transform_indices = @transform_4, window_bounds = array<i64: 1, 12, 256>}]} {
    %c0 = arith.constant 0 : index
    %c0_0 = arith.constant 0 : index
    %0 = vector.load %arg3[%c0, %c0_0] : memref<12x72xbf16, #tpu.memory_space<vmem>>, vector<12x72xbf16>
    %c0_1 = arith.constant 0 : index
    %c0_2 = arith.constant 0 : index
    %c0_3 = arith.constant 0 : index
    %1 = vector.load %arg2[%c0_1, %c0_2, %c0_3] : memref<1x72x256xbf16, #tpu.memory_space<vmem>>, vector<1x72x256xbf16>
    %2 = vector.shape_cast %1 : vector<1x72x256xbf16> to vector<72x256xbf16>
    %cst = arith.constant dense<0.000000e+00> : vector<12x256xf32>
    %3 = tpu.matmul %0, %2, %cst {dimension_numbers = #tpu.dot_dimension_numbers<[1], [0], [0], [1], [0, 0, 1, 1], [], []>} : vector<12x72xbf16>, vector<72x256xbf16>, vector<12x256xf32> -> vector<12x256xf32>
    %c0_4 = arith.constant 0 : index
    %c0_5 = arith.constant 0 : index
    %4 = vector.load %arg4[%c0_4, %c0_5] : memref<12x1xf32, #tpu.memory_space<vmem>>, vector<12x1xf32>
    %5 = vector.broadcast %4 : vector<12x1xf32> to vector<12x256xf32>
    %6 = arith.addf %3, %5 : vector<12x256xf32>
    %c0_6 = arith.constant 0 : index
    %c0_7 = arith.constant 0 : index
    %c0_8 = arith.constant 0 : index
    %7 = vector.load %arg5[%c0_6, %c0_7, %c0_8] : memref<1x12x256xf32, #tpu.memory_space<vmem>>, vector<1x12x256xf32>
    %8 = vector.shape_cast %7 : vector<1x12x256xf32> to vector<12x256xf32>
    %9 = arith.addf %6, %8 : vector<12x256xf32>
    %cst_9 = arith.constant 0.000000e+00 : f32
    %10 = vector.broadcast %cst_9 : f32 to vector<12x256xf32>
    %11 = arith.cmpf oge, %9, %10 : vector<12x256xf32>
    %cst_10 = arith.constant 5.000000e-02 : f32
    %12 = vector.broadcast %cst_10 : f32 to vector<12x256xf32>
    %13 = arith.mulf %12, %9 : vector<12x256xf32>
    %14 = arith.select %11, %9, %13 : vector<12x256xi1>, vector<12x256xf32>
    %c0_11 = arith.constant 0 : index
    %c0_12 = arith.constant 0 : index
    %c0_13 = arith.constant 0 : index
    %15 = vector.load %arg6[%c0_11, %c0_12, %c0_13] : memref<1x12x256xf32, #tpu.memory_space<vmem>>, vector<1x12x256xf32>
    %16 = vector.shape_cast %15 : vector<1x12x256xf32> to vector<12x256xf32>
    %17 = vector.shape_cast %14 : vector<12x256xf32> to vector<1x12x256xf32>
    tpu.vector_store %arg6[%c0_11, %c0_12, %c0_13], %17 {strides = array<i32>} : memref<1x12x256xf32, #tpu.memory_space<vmem>>, vector<1x12x256xf32>,
    return
  }
  func.func @transform_0(%arg0: i32, %arg1: i32) -> (i32, i32, i32) {
    %c0_i32 = arith.constant 0 : i32
    %c0_i32_0 = arith.constant 0 : i32
    return %arg0, %c0_i32, %arg1 : i32, i32, i32
  }
  func.func @transform_1(%arg0: i32, %arg1: i32) -> (i32, i32) {
    %c0_i32 = arith.constant 0 : i32
    %c0_i32_0 = arith.constant 0 : i32
    %c0_i32_1 = arith.constant 0 : i32
    return %c0_i32, %c0_i32_0 : i32, i32
  }
  func.func @transform_2(%arg0: i32, %arg1: i32) -> (i32, i32) {
    %c0_i32 = arith.constant 0 : i32
    %c0_i32_0 = arith.constant 0 : i32
    %c0_i32_1 = arith.constant 0 : i32
    return %c0_i32, %c0_i32_0 : i32, i32
  }
  func.func @transform_3(%arg0: i32, %arg1: i32) -> (i32, i32, i32) {
    %c0_i32 = arith.constant 0 : i32
    %c0_i32_0 = arith.constant 0 : i32
    return %arg0, %c0_i32, %arg1 : i32, i32, i32
  }
  func.func @transform_4(%arg0: i32, %arg1: i32) -> (i32, i32, i32) {
    %c0_i32 = arith.constant 0 : i32
    %c0_i32_0 = arith.constant 0 : i32
    return %arg0, %c0_i32, %arg1 : i32, i32, i32
  }
}

module attributes {stable_mosaic.version = 11 : i64} {
  func.func @kernel(%arg0: i32, %arg1: i32, %arg2: memref<1x16x256xbf16, #tpu.memory_space<vmem>>, %arg3: memref<8x16xbf16, #tpu.memory_space<vmem>>, %arg4: memref<8x1xf32, #tpu.memory_space<vmem>>, %arg5: memref<1x8x256xf32, #tpu.memory_space<vmem>>) attributes {dimension_semantics = [#tpu.dimension_semantics<parallel>, #tpu.dimension_semantics<parallel>], iteration_bounds = array<i64: 2, 1>, scalar_prefetch = 0 : i64, scratch_operands = 0 : i64, tpu.core_type = #tpu.core_type<tc>, window_params = [{transform_indices = @transform_0, window_bounds = array<i64: 1, 16, 256>}, {pipeline_mode = #tpu.pipeline_mode<synchronous>, transform_indices = @transform_1, window_bounds = array<i64: 8, 16>}, {pipeline_mode = #tpu.pipeline_mode<synchronous>, transform_indices = @transform_2, window_bounds = array<i64: 8, 1>}, {transform_indices = @transform_3, window_bounds = array<i64: 1, 8, 256>}]} {
    %c0 = arith.constant 0 : index
    %c0_0 = arith.constant 0 : index
    %0 = vector.load %arg3[%c0, %c0_0] : memref<8x16xbf16, #tpu.memory_space<vmem>>, vector<8x16xbf16>
    %c0_1 = arith.constant 0 : index
    %c0_2 = arith.constant 0 : index
    %c0_3 = arith.constant 0 : index
    %1 = vector.load %arg2[%c0_1, %c0_2, %c0_3] : memref<1x16x256xbf16, #tpu.memory_space<vmem>>, vector<1x16x256xbf16>
    %2 = vector.shape_cast %1 : vector<1x16x256xbf16> to vector<16x256xbf16>
    %cst = arith.constant dense<0.000000e+00> : vector<8x256xf32>
    %3 = tpu.matmul %0, %2, %cst {dimension_numbers = #tpu.dot_dimension_numbers<[1], [0], [0], [1], [0, 0, 1, 1], [], []>} : vector<8x16xbf16>, vector<16x256xbf16>, vector<8x256xf32> -> vector<8x256xf32>
    %c0_4 = arith.constant 0 : index
    %c0_5 = arith.constant 0 : index
    %4 = vector.load %arg4[%c0_4, %c0_5] : memref<8x1xf32, #tpu.memory_space<vmem>>, vector<8x1xf32>
    %5 = vector.broadcast %4 : vector<8x1xf32> to vector<8x256xf32>
    %6 = arith.addf %3, %5 : vector<8x256xf32>
    %c0_6 = arith.constant 0 : index
    %c0_7 = arith.constant 0 : index
    %c0_8 = arith.constant 0 : index
    %7 = vector.load %arg5[%c0_6, %c0_7, %c0_8] : memref<1x8x256xf32, #tpu.memory_space<vmem>>, vector<1x8x256xf32>
    %8 = vector.shape_cast %7 : vector<1x8x256xf32> to vector<8x256xf32>
    %9 = vector.shape_cast %6 : vector<8x256xf32> to vector<1x8x256xf32>
    tpu.vector_store %arg5[%c0_6, %c0_7, %c0_8], %9 {strides = array<i32>} : memref<1x8x256xf32, #tpu.memory_space<vmem>>, vector<1x8x256xf32>,
    return
  }
  func.func @transform_0(%arg0: i32, %arg1: i32) -> (i32, i32, i32) {
    %c0_i32 = arith.constant 0 : i32
    %c0_i32_0 = arith.constant 0 : i32
    return %arg0, %c0_i32, %arg1 : i32, i32, i32
  }
  func.func @transform_1(%arg0: i32, %arg1: i32) -> (i32, i32) {
    %c0_i32 = arith.constant 0 : i32
    %c0_i32_0 = arith.constant 0 : i32
    %c0_i32_1 = arith.constant 0 : i32
    return %c0_i32, %c0_i32_0 : i32, i32
  }
  func.func @transform_2(%arg0: i32, %arg1: i32) -> (i32, i32) {
    %c0_i32 = arith.constant 0 : i32
    %c0_i32_0 = arith.constant 0 : i32
    %c0_i32_1 = arith.constant 0 : i32
    return %c0_i32, %c0_i32_0 : i32, i32
  }
  func.func @transform_3(%arg0: i32, %arg1: i32) -> (i32, i32, i32) {
    %c0_i32 = arith.constant 0 : i32
    %c0_i32_0 = arith.constant 0 : i32
    return %arg0, %c0_i32, %arg1 : i32, i32, i32
  }
}

module attributes {stable_mosaic.version = 11 : i64} {
  func.func @kernel(%arg0: i32, %arg1: i32, %arg2: memref<1x72x256xbf16, #tpu.memory_space<vmem>>, %arg3: memref<4x72xbf16, #tpu.memory_space<vmem>>, %arg4: memref<4x1xf32, #tpu.memory_space<vmem>>, %arg5: memref<1x4x256xf32, #tpu.memory_space<vmem>>) attributes {dimension_semantics = [#tpu.dimension_semantics<parallel>, #tpu.dimension_semantics<parallel>], iteration_bounds = array<i64: 2, 1>, scalar_prefetch = 0 : i64, scratch_operands = 0 : i64, tpu.core_type = #tpu.core_type<tc>, window_params = [{transform_indices = @transform_0, window_bounds = array<i64: 1, 72, 256>}, {pipeline_mode = #tpu.pipeline_mode<synchronous>, transform_indices = @transform_1, window_bounds = array<i64: 4, 72>}, {pipeline_mode = #tpu.pipeline_mode<synchronous>, transform_indices = @transform_2, window_bounds = array<i64: 4, 1>}, {transform_indices = @transform_3, window_bounds = array<i64: 1, 4, 256>}]} {
    %c0 = arith.constant 0 : index
    %c0_0 = arith.constant 0 : index
    %0 = vector.load %arg3[%c0, %c0_0] : memref<4x72xbf16, #tpu.memory_space<vmem>>, vector<4x72xbf16>
    %c0_1 = arith.constant 0 : index
    %c0_2 = arith.constant 0 : index
    %c0_3 = arith.constant 0 : index
    %1 = vector.load %arg2[%c0_1, %c0_2, %c0_3] : memref<1x72x256xbf16, #tpu.memory_space<vmem>>, vector<1x72x256xbf16>
    %2 = vector.shape_cast %1 : vector<1x72x256xbf16> to vector<72x256xbf16>
    %cst = arith.constant dense<0.000000e+00> : vector<4x256xf32>
    %3 = tpu.matmul %0, %2, %cst {dimension_numbers = #tpu.dot_dimension_numbers<[1], [0], [0], [1], [0, 0, 1, 1], [], []>} : vector<4x72xbf16>, vector<72x256xbf16>, vector<4x256xf32> -> vector<4x256xf32>
    %c0_4 = arith.constant 0 : index
    %c0_5 = arith.constant 0 : index
    %4 = vector.load %arg4[%c0_4, %c0_5] : memref<4x1xf32, #tpu.memory_space<vmem>>, vector<4x1xf32>
    %5 = vector.broadcast %4 : vector<4x1xf32> to vector<4x256xf32>
    %6 = arith.addf %3, %5 : vector<4x256xf32>
    %cst_6 = arith.constant 0.000000e+00 : f32
    %7 = vector.broadcast %cst_6 : f32 to vector<4x256xf32>
    %8 = arith.cmpf oge, %6, %7 : vector<4x256xf32>
    %cst_7 = arith.constant 5.000000e-02 : f32
    %9 = vector.broadcast %cst_7 : f32 to vector<4x256xf32>
    %10 = arith.mulf %9, %6 : vector<4x256xf32>
    %11 = arith.select %8, %6, %10 : vector<4x256xi1>, vector<4x256xf32>
    %c0_8 = arith.constant 0 : index
    %c0_9 = arith.constant 0 : index
    %c0_10 = arith.constant 0 : index
    %12 = vector.load %arg5[%c0_8, %c0_9, %c0_10] : memref<1x4x256xf32, #tpu.memory_space<vmem>>, vector<1x4x256xf32>
    %13 = vector.shape_cast %12 : vector<1x4x256xf32> to vector<4x256xf32>
    %14 = vector.shape_cast %11 : vector<4x256xf32> to vector<1x4x256xf32>
    tpu.vector_store %arg5[%c0_8, %c0_9, %c0_10], %14 {strides = array<i32>} : memref<1x4x256xf32, #tpu.memory_space<vmem>>, vector<1x4x256xf32>,
    return
  }
  func.func @transform_0(%arg0: i32, %arg1: i32) -> (i32, i32, i32) {
    %c0_i32 = arith.constant 0 : i32
    %c0_i32_0 = arith.constant 0 : i32
    return %arg0, %c0_i32, %arg1 : i32, i32, i32
  }
  func.func @transform_1(%arg0: i32, %arg1: i32) -> (i32, i32) {
    %c0_i32 = arith.constant 0 : i32
    %c0_i32_0 = arith.constant 0 : i32
    %c0_i32_1 = arith.constant 0 : i32
    return %c0_i32, %c0_i32_0 : i32, i32
  }
  func.func @transform_2(%arg0: i32, %arg1: i32) -> (i32, i32) {
    %c0_i32 = arith.constant 0 : i32
    %c0_i32_0 = arith.constant 0 : i32
    %c0_i32_1 = arith.constant 0 : i32
    return %c0_i32, %c0_i32_0 : i32, i32
  }
  func.func @transform_3(%arg0: i32, %arg1: i32) -> (i32, i32, i32) {
    %c0_i32 = arith.constant 0 : i32
    %c0_i32_0 = arith.constant 0 : i32
    return %arg0, %c0_i32, %arg1 : i32, i32, i32
  }
}

module attributes {stable_mosaic.version = 11 : i64} {
  func.func @kernel(%arg0: i32, %arg1: i32, %arg2: memref<1x8x256xbf16, #tpu.memory_space<vmem>>, %arg3: memref<2x8xbf16, #tpu.memory_space<vmem>>, %arg4: memref<2x1xf32, #tpu.memory_space<vmem>>, %arg5: memref<1x2x256xf32, #tpu.memory_space<vmem>>) attributes {dimension_semantics = [#tpu.dimension_semantics<parallel>, #tpu.dimension_semantics<parallel>], iteration_bounds = array<i64: 2, 1>, scalar_prefetch = 0 : i64, scratch_operands = 0 : i64, tpu.core_type = #tpu.core_type<tc>, window_params = [{transform_indices = @transform_0, window_bounds = array<i64: 1, 8, 256>}, {pipeline_mode = #tpu.pipeline_mode<synchronous>, transform_indices = @transform_1, window_bounds = array<i64: 2, 8>}, {pipeline_mode = #tpu.pipeline_mode<synchronous>, transform_indices = @transform_2, window_bounds = array<i64: 2, 1>}, {transform_indices = @transform_3, window_bounds = array<i64: 1, 2, 256>}]} {
    %c0 = arith.constant 0 : index
    %c0_0 = arith.constant 0 : index
    %0 = vector.load %arg3[%c0, %c0_0] : memref<2x8xbf16, #tpu.memory_space<vmem>>, vector<2x8xbf16>
    %c0_1 = arith.constant 0 : index
    %c0_2 = arith.constant 0 : index
    %c0_3 = arith.constant 0 : index
    %1 = vector.load %arg2[%c0_1, %c0_2, %c0_3] : memref<1x8x256xbf16, #tpu.memory_space<vmem>>, vector<1x8x256xbf16>
    %2 = vector.shape_cast %1 : vector<1x8x256xbf16> to vector<8x256xbf16>
    %cst = arith.constant dense<0.000000e+00> : vector<2x256xf32>
    %3 = tpu.matmul %0, %2, %cst {dimension_numbers = #tpu.dot_dimension_numbers<[1], [0], [0], [1], [0, 0, 1, 1], [], []>} : vector<2x8xbf16>, vector<8x256xbf16>, vector<2x256xf32> -> vector<2x256xf32>
    %c0_4 = arith.constant 0 : index
    %c0_5 = arith.constant 0 : index
    %4 = vector.load %arg4[%c0_4, %c0_5] : memref<2x1xf32, #tpu.memory_space<vmem>>, vector<2x1xf32>
    %5 = vector.broadcast %4 : vector<2x1xf32> to vector<2x256xf32>
    %6 = arith.addf %3, %5 : vector<2x256xf32>
    %c0_6 = arith.constant 0 : index
    %c0_7 = arith.constant 0 : index
    %c0_8 = arith.constant 0 : index
    %7 = vector.load %arg5[%c0_6, %c0_7, %c0_8] : memref<1x2x256xf32, #tpu.memory_space<vmem>>, vector<1x2x256xf32>
    %8 = vector.shape_cast %7 : vector<1x2x256xf32> to vector<2x256xf32>
    %9 = vector.shape_cast %6 : vector<2x256xf32> to vector<1x2x256xf32>
    tpu.vector_store %arg5[%c0_6, %c0_7, %c0_8], %9 {strides = array<i32>} : memref<1x2x256xf32, #tpu.memory_space<vmem>>, vector<1x2x256xf32>,
    return
  }
  func.func @transform_0(%arg0: i32, %arg1: i32) -> (i32, i32, i32) {
    %c0_i32 = arith.constant 0 : i32
    %c0_i32_0 = arith.constant 0 : i32
    return %arg0, %c0_i32, %arg1 : i32, i32, i32
  }
  func.func @transform_1(%arg0: i32, %arg1: i32) -> (i32, i32) {
    %c0_i32 = arith.constant 0 : i32
    %c0_i32_0 = arith.constant 0 : i32
    %c0_i32_1 = arith.constant 0 : i32
    return %c0_i32, %c0_i32_0 : i32, i32
  }
  func.func @transform_2(%arg0: i32, %arg1: i32) -> (i32, i32) {
    %c0_i32 = arith.constant 0 : i32
    %c0_i32_0 = arith.constant 0 : i32
    %c0_i32_1 = arith.constant 0 : i32
    return %c0_i32, %c0_i32_0 : i32, i32
  }
  func.func @transform_3(%arg0: i32, %arg1: i32) -> (i32, i32, i32) {
    %c0_i32 = arith.constant 0 : i32
    %c0_i32_0 = arith.constant 0 : i32
    return %arg0, %c0_i32, %arg1 : i32, i32, i32
  }
}

module attributes {stable_mosaic.version = 11 : i64} {
  func.func @kernel(%arg0: i32, %arg1: i32, %arg2: memref<1x18x128xbf16, #tpu.memory_space<vmem>>, %arg3: memref<2x18xbf16, #tpu.memory_space<vmem>>, %arg4: memref<2x1xf32, #tpu.memory_space<vmem>>, %arg5: memref<1x2x128xf32, #tpu.memory_space<vmem>>) attributes {dimension_semantics = [#tpu.dimension_semantics<parallel>, #tpu.dimension_semantics<parallel>], iteration_bounds = array<i64: 2, 1>, scalar_prefetch = 0 : i64, scratch_operands = 0 : i64, tpu.core_type = #tpu.core_type<tc>, window_params = [{transform_indices = @transform_0, window_bounds = array<i64: 1, 18, 128>}, {pipeline_mode = #tpu.pipeline_mode<synchronous>, transform_indices = @transform_1, window_bounds = array<i64: 2, 18>}, {pipeline_mode = #tpu.pipeline_mode<synchronous>, transform_indices = @transform_2, window_bounds = array<i64: 2, 1>}, {transform_indices = @transform_3, window_bounds = array<i64: 1, 2, 128>}]} {
    %c0 = arith.constant 0 : index
    %c0_0 = arith.constant 0 : index
    %0 = vector.load %arg3[%c0, %c0_0] : memref<2x18xbf16, #tpu.memory_space<vmem>>, vector<2x18xbf16>
    %c0_1 = arith.constant 0 : index
    %c0_2 = arith.constant 0 : index
    %c0_3 = arith.constant 0 : index
    %1 = vector.load %arg2[%c0_1, %c0_2, %c0_3] : memref<1x18x128xbf16, #tpu.memory_space<vmem>>, vector<1x18x128xbf16>
    %2 = vector.shape_cast %1 : vector<1x18x128xbf16> to vector<18x128xbf16>
    %cst = arith.constant dense<0.000000e+00> : vector<2x128xf32>
    %3 = tpu.matmul %0, %2, %cst {dimension_numbers = #tpu.dot_dimension_numbers<[1], [0], [0], [1], [0, 0, 1, 1], [], []>} : vector<2x18xbf16>, vector<18x128xbf16>, vector<2x128xf32> -> vector<2x128xf32>
    %c0_4 = arith.constant 0 : index
    %c0_5 = arith.constant 0 : index
    %4 = vector.load %arg4[%c0_4, %c0_5] : memref<2x1xf32, #tpu.memory_space<vmem>>, vector<2x1xf32>
    %5 = vector.broadcast %4 : vector<2x1xf32> to vector<2x128xf32>
    %6 = arith.addf %3, %5 : vector<2x128xf32>
    %c0_6 = arith.constant 0 : index
    %c0_7 = arith.constant 0 : index
    %c0_8 = arith.constant 0 : index
    %7 = vector.load %arg5[%c0_6, %c0_7, %c0_8] : memref<1x2x128xf32, #tpu.memory_space<vmem>>, vector<1x2x128xf32>
    %8 = vector.shape_cast %7 : vector<1x2x128xf32> to vector<2x128xf32>
    %9 = vector.shape_cast %6 : vector<2x128xf32> to vector<1x2x128xf32>
    tpu.vector_store %arg5[%c0_6, %c0_7, %c0_8], %9 {strides = array<i32>} : memref<1x2x128xf32, #tpu.memory_space<vmem>>, vector<1x2x128xf32>,
    return
  }
  func.func @transform_0(%arg0: i32, %arg1: i32) -> (i32, i32, i32) {
    %c0_i32 = arith.constant 0 : i32
    %c0_i32_0 = arith.constant 0 : i32
    return %arg0, %c0_i32, %arg1 : i32, i32, i32
  }
  func.func @transform_1(%arg0: i32, %arg1: i32) -> (i32, i32) {
    %c0_i32 = arith.constant 0 : i32
    %c0_i32_0 = arith.constant 0 : i32
    %c0_i32_1 = arith.constant 0 : i32
    return %c0_i32, %c0_i32_0 : i32, i32
  }
  func.func @transform_2(%arg0: i32, %arg1: i32) -> (i32, i32) {
    %c0_i32 = arith.constant 0 : i32
    %c0_i32_0 = arith.constant 0 : i32
    %c0_i32_1 = arith.constant 0 : i32
    return %c0_i32, %c0_i32_0 : i32, i32
  }
  func.func @transform_3(%arg0: i32, %arg1: i32) -> (i32, i32, i32) {
    %c0_i32 = arith.constant 0 : i32
    %c0_i32_0 = arith.constant 0 : i32
    return %arg0, %c0_i32, %arg1 : i32, i32, i32
  }
}

module attributes {stable_mosaic.version = 11 : i64} {
  func.func @kernel(%arg0: i32, %arg1: i32, %arg2: memref<1x18x128xbf16, #tpu.memory_space<vmem>>, %arg3: memref<2x18xbf16, #tpu.memory_space<vmem>>, %arg4: memref<2x1xf32, #tpu.memory_space<vmem>>, %arg5: memref<1x2x128xf32, #tpu.memory_space<vmem>>) attributes {dimension_semantics = [#tpu.dimension_semantics<parallel>, #tpu.dimension_semantics<parallel>], iteration_bounds = array<i64: 2, 1>, scalar_prefetch = 0 : i64, scratch_operands = 0 : i64, tpu.core_type = #tpu.core_type<tc>, window_params = [{transform_indices = @transform_0, window_bounds = array<i64: 1, 18, 128>}, {pipeline_mode = #tpu.pipeline_mode<synchronous>, transform_indices = @transform_1, window_bounds = array<i64: 2, 18>}, {pipeline_mode = #tpu.pipeline_mode<synchronous>, transform_indices = @transform_2, window_bounds = array<i64: 2, 1>}, {transform_indices = @transform_3, window_bounds = array<i64: 1, 2, 128>}]} {
    %c0 = arith.constant 0 : index
    %c0_0 = arith.constant 0 : index
    %0 = vector.load %arg3[%c0, %c0_0] : memref<2x18xbf16, #tpu.memory_space<vmem>>, vector<2x18xbf16>
    %c0_1 = arith.constant 0 : index
    %c0_2 = arith.constant 0 : index
    %c0_3 = arith.constant 0 : index
    %1 = vector.load %arg2[%c0_1, %c0_2, %c0_3] : memref<1x18x128xbf16, #tpu.memory_space<vmem>>, vector<1x18x128xbf16>
    %2 = vector.shape_cast %1 : vector<1x18x128xbf16> to vector<18x128xbf16>
    %cst = arith.constant dense<0.000000e+00> : vector<2x128xf32>
    %3 = tpu.matmul %0, %2, %cst {dimension_numbers = #tpu.dot_dimension_numbers<[1], [0], [0], [1], [0, 0, 1, 1], [], []>} : vector<2x18xbf16>, vector<18x128xbf16>, vector<2x128xf32> -> vector<2x128xf32>
    %c0_4 = arith.constant 0 : index
    %c0_5 = arith.constant 0 : index
    %4 = vector.load %arg4[%c0_4, %c0_5] : memref<2x1xf32, #tpu.memory_space<vmem>>, vector<2x1xf32>
    %5 = vector.broadcast %4 : vector<2x1xf32> to vector<2x128xf32>
    %6 = arith.addf %3, %5 : vector<2x128xf32>
    %cst_6 = arith.constant 0.000000e+00 : f32
    %7 = vector.broadcast %cst_6 : f32 to vector<2x128xf32>
    %8 = arith.maximumf %6, %7 : vector<2x128xf32>
    %c0_7 = arith.constant 0 : index
    %c0_8 = arith.constant 0 : index
    %c0_9 = arith.constant 0 : index
    %9 = vector.load %arg5[%c0_7, %c0_8, %c0_9] : memref<1x2x128xf32, #tpu.memory_space<vmem>>, vector<1x2x128xf32>
    %10 = vector.shape_cast %9 : vector<1x2x128xf32> to vector<2x128xf32>
    %11 = vector.shape_cast %8 : vector<2x128xf32> to vector<1x2x128xf32>
    tpu.vector_store %arg5[%c0_7, %c0_8, %c0_9], %11 {strides = array<i32>} : memref<1x2x128xf32, #tpu.memory_space<vmem>>, vector<1x2x128xf32>,
    return
  }
  func.func @transform_0(%arg0: i32, %arg1: i32) -> (i32, i32, i32) {
    %c0_i32 = arith.constant 0 : i32
    %c0_i32_0 = arith.constant 0 : i32
    return %arg0, %c0_i32, %arg1 : i32, i32, i32
  }
  func.func @transform_1(%arg0: i32, %arg1: i32) -> (i32, i32) {
    %c0_i32 = arith.constant 0 : i32
    %c0_i32_0 = arith.constant 0 : i32
    %c0_i32_1 = arith.constant 0 : i32
    return %c0_i32, %c0_i32_0 : i32, i32
  }
  func.func @transform_2(%arg0: i32, %arg1: i32) -> (i32, i32) {
    %c0_i32 = arith.constant 0 : i32
    %c0_i32_0 = arith.constant 0 : i32
    %c0_i32_1 = arith.constant 0 : i32
    return %c0_i32, %c0_i32_0 : i32, i32
  }
  func.func @transform_3(%arg0: i32, %arg1: i32) -> (i32, i32, i32) {
    %c0_i32 = arith.constant 0 : i32
    %c0_i32_0 = arith.constant 0 : i32
    return %arg0, %c0_i32, %arg1 : i32, i32, i32
  }
}

module attributes {stable_mosaic.version = 11 : i64} {
  func.func @kernel(%arg0: i32, %arg1: i32, %arg2: memref<1x2x256xbf16, #tpu.memory_space<vmem>>, %arg3: memref<2x2xbf16, #tpu.memory_space<vmem>>, %arg4: memref<2x1xf32, #tpu.memory_space<vmem>>, %arg5: memref<1x2x256xf32, #tpu.memory_space<vmem>>, %arg6: memref<1x2x256xf32, #tpu.memory_space<vmem>>) attributes {dimension_semantics = [#tpu.dimension_semantics<parallel>, #tpu.dimension_semantics<parallel>], iteration_bounds = array<i64: 2, 1>, scalar_prefetch = 0 : i64, scratch_operands = 0 : i64, tpu.core_type = #tpu.core_type<tc>, window_params = [{transform_indices = @transform_0, window_bounds = array<i64: 1, 2, 256>}, {pipeline_mode = #tpu.pipeline_mode<synchronous>, transform_indices = @transform_1, window_bounds = array<i64: 2, 2>}, {pipeline_mode = #tpu.pipeline_mode<synchronous>, transform_indices = @transform_2, window_bounds = array<i64: 2, 1>}, {transform_indices = @transform_3, window_bounds = array<i64: 1, 2, 256>}, {transform_indices = @transform_4, window_bounds = array<i64: 1, 2, 256>}]} {
    %c0 = arith.constant 0 : index
    %c0_0 = arith.constant 0 : index
    %0 = vector.load %arg3[%c0, %c0_0] : memref<2x2xbf16, #tpu.memory_space<vmem>>, vector<2x2xbf16>
    %c0_1 = arith.constant 0 : index
    %c0_2 = arith.constant 0 : index
    %c0_3 = arith.constant 0 : index
    %1 = vector.load %arg2[%c0_1, %c0_2, %c0_3] : memref<1x2x256xbf16, #tpu.memory_space<vmem>>, vector<1x2x256xbf16>
    %2 = vector.shape_cast %1 : vector<1x2x256xbf16> to vector<2x256xbf16>
    %cst = arith.constant dense<0.000000e+00> : vector<2x256xf32>
    %3 = tpu.matmul %0, %2, %cst {dimension_numbers = #tpu.dot_dimension_numbers<[1], [0], [0], [1], [0, 0, 1, 1], [], []>} : vector<2x2xbf16>, vector<2x256xbf16>, vector<2x256xf32> -> vector<2x256xf32>
    %c0_4 = arith.constant 0 : index
    %c0_5 = arith.constant 0 : index
    %4 = vector.load %arg4[%c0_4, %c0_5] : memref<2x1xf32, #tpu.memory_space<vmem>>, vector<2x1xf32>
    %5 = vector.broadcast %4 : vector<2x1xf32> to vector<2x256xf32>
    %6 = arith.addf %3, %5 : vector<2x256xf32>
    %c0_6 = arith.constant 0 : index
    %c0_7 = arith.constant 0 : index
    %c0_8 = arith.constant 0 : index
    %7 = vector.load %arg5[%c0_6, %c0_7, %c0_8] : memref<1x2x256xf32, #tpu.memory_space<vmem>>, vector<1x2x256xf32>
    %8 = vector.shape_cast %7 : vector<1x2x256xf32> to vector<2x256xf32>
    %9 = arith.addf %6, %8 : vector<2x256xf32>
    %c0_9 = arith.constant 0 : index
    %c0_10 = arith.constant 0 : index
    %c0_11 = arith.constant 0 : index
    %10 = vector.load %arg6[%c0_9, %c0_10, %c0_11] : memref<1x2x256xf32, #tpu.memory_space<vmem>>, vector<1x2x256xf32>
    %11 = vector.shape_cast %10 : vector<1x2x256xf32> to vector<2x256xf32>
    %12 = vector.shape_cast %9 : vector<2x256xf32> to vector<1x2x256xf32>
    tpu.vector_store %arg6[%c0_9, %c0_10, %c0_11], %12 {strides = array<i32>} : memref<1x2x256xf32, #tpu.memory_space<vmem>>, vector<1x2x256xf32>,
    return
  }
  func.func @transform_0(%arg0: i32, %arg1: i32) -> (i32, i32, i32) {
    %c0_i32 = arith.constant 0 : i32
    %c0_i32_0 = arith.constant 0 : i32
    return %arg0, %c0_i32, %arg1 : i32, i32, i32
  }
  func.func @transform_1(%arg0: i32, %arg1: i32) -> (i32, i32) {
    %c0_i32 = arith.constant 0 : i32
    %c0_i32_0 = arith.constant 0 : i32
    %c0_i32_1 = arith.constant 0 : i32
    return %c0_i32, %c0_i32_0 : i32, i32
  }
  func.func @transform_2(%arg0: i32, %arg1: i32) -> (i32, i32) {
    %c0_i32 = arith.constant 0 : i32
    %c0_i32_0 = arith.constant 0 : i32
    %c0_i32_1 = arith.constant 0 : i32
    return %c0_i32, %c0_i32_0 : i32, i32
  }
  func.func @transform_3(%arg0: i32, %arg1: i32) -> (i32, i32, i32) {
    %c0_i32 = arith.constant 0 : i32
    %c0_i32_0 = arith.constant 0 : i32
    return %arg0, %c0_i32, %arg1 : i32, i32, i32
  }
  func.func @transform_4(%arg0: i32, %arg1: i32) -> (i32, i32, i32) {
    %c0_i32 = arith.constant 0 : i32
    %c0_i32_0 = arith.constant 0 : i32
    return %arg0, %c0_i32, %arg1 : i32, i32, i32
  }
}

module attributes {stable_mosaic.version = 11 : i64} {
  func.func @kernel(%arg0: i32, %arg1: i32, %arg2: memref<1x2x256xbf16, #tpu.memory_space<vmem>>, %arg3: memref<8x2xbf16, #tpu.memory_space<vmem>>, %arg4: memref<8x1xf32, #tpu.memory_space<vmem>>, %arg5: memref<1x8x256xf32, #tpu.memory_space<vmem>>, %arg6: memref<1x8x256xf32, #tpu.memory_space<vmem>>) attributes {dimension_semantics = [#tpu.dimension_semantics<parallel>, #tpu.dimension_semantics<parallel>], iteration_bounds = array<i64: 2, 1>, scalar_prefetch = 0 : i64, scratch_operands = 0 : i64, tpu.core_type = #tpu.core_type<tc>, window_params = [{transform_indices = @transform_0, window_bounds = array<i64: 1, 2, 256>}, {pipeline_mode = #tpu.pipeline_mode<synchronous>, transform_indices = @transform_1, window_bounds = array<i64: 8, 2>}, {pipeline_mode = #tpu.pipeline_mode<synchronous>, transform_indices = @transform_2, window_bounds = array<i64: 8, 1>}, {transform_indices = @transform_3, window_bounds = array<i64: 1, 8, 256>}, {transform_indices = @transform_4, window_bounds = array<i64: 1, 8, 256>}]} {
    %c0 = arith.constant 0 : index
    %c0_0 = arith.constant 0 : index
    %0 = vector.load %arg3[%c0, %c0_0] : memref<8x2xbf16, #tpu.memory_space<vmem>>, vector<8x2xbf16>
    %c0_1 = arith.constant 0 : index
    %c0_2 = arith.constant 0 : index
    %c0_3 = arith.constant 0 : index
    %1 = vector.load %arg2[%c0_1, %c0_2, %c0_3] : memref<1x2x256xbf16, #tpu.memory_space<vmem>>, vector<1x2x256xbf16>
    %2 = vector.shape_cast %1 : vector<1x2x256xbf16> to vector<2x256xbf16>
    %cst = arith.constant dense<0.000000e+00> : vector<8x256xf32>
    %3 = tpu.matmul %0, %2, %cst {dimension_numbers = #tpu.dot_dimension_numbers<[1], [0], [0], [1], [0, 0, 1, 1], [], []>} : vector<8x2xbf16>, vector<2x256xbf16>, vector<8x256xf32> -> vector<8x256xf32>
    %c0_4 = arith.constant 0 : index
    %c0_5 = arith.constant 0 : index
    %c0_6 = arith.constant 0 : index
    %4 = vector.load %arg5[%c0_4, %c0_5, %c0_6] : memref<1x8x256xf32, #tpu.memory_space<vmem>>, vector<1x8x256xf32>
    %5 = vector.shape_cast %4 : vector<1x8x256xf32> to vector<8x256xf32>
    %c0_7 = arith.constant 0 : index
    %c0_8 = arith.constant 0 : index
    %6 = vector.load %arg4[%c0_7, %c0_8] : memref<8x1xf32, #tpu.memory_space<vmem>>, vector<8x1xf32>
    %7 = vector.broadcast %6 : vector<8x1xf32> to vector<8x256xf32>
    %8 = arith.addf %3, %7 : vector<8x256xf32>
    %9 = arith.negf %8 : vector<8x256xf32>
    %10 = math.exp %9 : vector<8x256xf32>
    %cst_9 = arith.constant 1.000000e+00 : f32
    %11 = vector.broadcast %cst_9 : f32 to vector<8x256xf32>
    %12 = arith.addf %11, %10 : vector<8x256xf32>
    %13 = arith.divf %11, %12 : vector<8x256xf32>
    %14 = arith.mulf %5, %13 : vector<8x256xf32>
    %c0_10 = arith.constant 0 : index
    %c0_11 = arith.constant 0 : index
    %c0_12 = arith.constant 0 : index
    %15 = vector.load %arg6[%c0_10, %c0_11, %c0_12] : memref<1x8x256xf32, #tpu.memory_space<vmem>>, vector<1x8x256xf32>
    %16 = vector.shape_cast %15 : vector<1x8x256xf32> to vector<8x256xf32>
    %17 = vector.shape_cast %14 : vector<8x256xf32> to vector<1x8x256xf32>
    tpu.vector_store %arg6[%c0_10, %c0_11, %c0_12], %17 {strides = array<i32>} : memref<1x8x256xf32, #tpu.memory_space<vmem>>, vector<1x8x256xf32>,
    return
  }
  func.func @transform_0(%arg0: i32, %arg1: i32) -> (i32, i32, i32) {
    %c0_i32 = arith.constant 0 : i32
    %c0_i32_0 = arith.constant 0 : i32
    return %arg0, %c0_i32, %arg1 : i32, i32, i32
  }
  func.func @transform_1(%arg0: i32, %arg1: i32) -> (i32, i32) {
    %c0_i32 = arith.constant 0 : i32
    %c0_i32_0 = arith.constant 0 : i32
    %c0_i32_1 = arith.constant 0 : i32
    return %c0_i32, %c0_i32_0 : i32, i32
  }
  func.func @transform_2(%arg0: i32, %arg1: i32) -> (i32, i32) {
    %c0_i32 = arith.constant 0 : i32
    %c0_i32_0 = arith.constant 0 : i32
    %c0_i32_1 = arith.constant 0 : i32
    return %c0_i32, %c0_i32_0 : i32, i32
  }
  func.func @transform_3(%arg0: i32, %arg1: i32) -> (i32, i32, i32) {
    %c0_i32 = arith.constant 0 : i32
    %c0_i32_0 = arith.constant 0 : i32
    return %arg0, %c0_i32, %arg1 : i32, i32, i32
  }
  func.func @transform_4(%arg0: i32, %arg1: i32) -> (i32, i32, i32) {
    %c0_i32 = arith.constant 0 : i32
    %c0_i32_0 = arith.constant 0 : i32
    return %arg0, %c0_i32, %arg1 : i32, i32, i32
  }
}

module attributes {stable_mosaic.version = 11 : i64} {
  func.func @kernel(%arg0: i32, %arg1: i32, %arg2: memref<1x32x256xbf16, #tpu.memory_space<vmem>>, %arg3: memref<8x32xbf16, #tpu.memory_space<vmem>>, %arg4: memref<8x1xf32, #tpu.memory_space<vmem>>, %arg5: memref<1x8x256xf32, #tpu.memory_space<vmem>>) attributes {dimension_semantics = [#tpu.dimension_semantics<parallel>, #tpu.dimension_semantics<parallel>], iteration_bounds = array<i64: 2, 1>, scalar_prefetch = 0 : i64, scratch_operands = 0 : i64, tpu.core_type = #tpu.core_type<tc>, window_params = [{transform_indices = @transform_0, window_bounds = array<i64: 1, 32, 256>}, {pipeline_mode = #tpu.pipeline_mode<synchronous>, transform_indices = @transform_1, window_bounds = array<i64: 8, 32>}, {pipeline_mode = #tpu.pipeline_mode<synchronous>, transform_indices = @transform_2, window_bounds = array<i64: 8, 1>}, {transform_indices = @transform_3, window_bounds = array<i64: 1, 8, 256>}]} {
    %c0 = arith.constant 0 : index
    %c0_0 = arith.constant 0 : index
    %0 = vector.load %arg3[%c0, %c0_0] : memref<8x32xbf16, #tpu.memory_space<vmem>>, vector<8x32xbf16>
    %c0_1 = arith.constant 0 : index
    %c0_2 = arith.constant 0 : index
    %c0_3 = arith.constant 0 : index
    %1 = vector.load %arg2[%c0_1, %c0_2, %c0_3] : memref<1x32x256xbf16, #tpu.memory_space<vmem>>, vector<1x32x256xbf16>
    %2 = vector.shape_cast %1 : vector<1x32x256xbf16> to vector<32x256xbf16>
    %cst = arith.constant dense<0.000000e+00> : vector<8x256xf32>
    %3 = tpu.matmul %0, %2, %cst {dimension_numbers = #tpu.dot_dimension_numbers<[1], [0], [0], [1], [0, 0, 1, 1], [], []>} : vector<8x32xbf16>, vector<32x256xbf16>, vector<8x256xf32> -> vector<8x256xf32>
    %c0_4 = arith.constant 0 : index
    %c0_5 = arith.constant 0 : index
    %4 = vector.load %arg4[%c0_4, %c0_5] : memref<8x1xf32, #tpu.memory_space<vmem>>, vector<8x1xf32>
    %5 = vector.broadcast %4 : vector<8x1xf32> to vector<8x256xf32>
    %6 = arith.addf %3, %5 : vector<8x256xf32>
    %cst_6 = arith.constant 0.000000e+00 : f32
    %7 = vector.broadcast %cst_6 : f32 to vector<8x256xf32>
    %8 = arith.cmpf oge, %6, %7 : vector<8x256xf32>
    %cst_7 = arith.constant 5.000000e-02 : f32
    %9 = vector.broadcast %cst_7 : f32 to vector<8x256xf32>
    %10 = arith.mulf %9, %6 : vector<8x256xf32>
    %11 = arith.select %8, %6, %10 : vector<8x256xi1>, vector<8x256xf32>
    %c0_8 = arith.constant 0 : index
    %c0_9 = arith.constant 0 : index
    %c0_10 = arith.constant 0 : index
    %12 = vector.load %arg5[%c0_8, %c0_9, %c0_10] : memref<1x8x256xf32, #tpu.memory_space<vmem>>, vector<1x8x256xf32>
    %13 = vector.shape_cast %12 : vector<1x8x256xf32> to vector<8x256xf32>
    %14 = vector.shape_cast %11 : vector<8x256xf32> to vector<1x8x256xf32>
    tpu.vector_store %arg5[%c0_8, %c0_9, %c0_10], %14 {strides = array<i32>} : memref<1x8x256xf32, #tpu.memory_space<vmem>>, vector<1x8x256xf32>,
    return
  }
  func.func @transform_0(%arg0: i32, %arg1: i32) -> (i32, i32, i32) {
    %c0_i32 = arith.constant 0 : i32
    %c0_i32_0 = arith.constant 0 : i32
    return %arg0, %c0_i32, %arg1 : i32, i32, i32
  }
  func.func @transform_1(%arg0: i32, %arg1: i32) -> (i32, i32) {
    %c0_i32 = arith.constant 0 : i32
    %c0_i32_0 = arith.constant 0 : i32
    %c0_i32_1 = arith.constant 0 : i32
    return %c0_i32, %c0_i32_0 : i32, i32
  }
  func.func @transform_2(%arg0: i32, %arg1: i32) -> (i32, i32) {
    %c0_i32 = arith.constant 0 : i32
    %c0_i32_0 = arith.constant 0 : i32
    %c0_i32_1 = arith.constant 0 : i32
    return %c0_i32, %c0_i32_0 : i32, i32
  }
  func.func @transform_3(%arg0: i32, %arg1: i32) -> (i32, i32, i32) {
    %c0_i32 = arith.constant 0 : i32
    %c0_i32_0 = arith.constant 0 : i32
    return %arg0, %c0_i32, %arg1 : i32, i32, i32
  }
}

module attributes {stable_mosaic.version = 11 : i64} {
  func.func @kernel(%arg0: i32, %arg1: i32, %arg2: memref<1x72x256xbf16, #tpu.memory_space<vmem>>, %arg3: memref<8x72xbf16, #tpu.memory_space<vmem>>, %arg4: memref<8x1xf32, #tpu.memory_space<vmem>>, %arg5: memref<1x8x256xf32, #tpu.memory_space<vmem>>, %arg6: memref<1x8x256xf32, #tpu.memory_space<vmem>>) attributes {dimension_semantics = [#tpu.dimension_semantics<parallel>, #tpu.dimension_semantics<parallel>], iteration_bounds = array<i64: 2, 1>, scalar_prefetch = 0 : i64, scratch_operands = 0 : i64, tpu.core_type = #tpu.core_type<tc>, window_params = [{transform_indices = @transform_0, window_bounds = array<i64: 1, 72, 256>}, {pipeline_mode = #tpu.pipeline_mode<synchronous>, transform_indices = @transform_1, window_bounds = array<i64: 8, 72>}, {pipeline_mode = #tpu.pipeline_mode<synchronous>, transform_indices = @transform_2, window_bounds = array<i64: 8, 1>}, {transform_indices = @transform_3, window_bounds = array<i64: 1, 8, 256>}, {transform_indices = @transform_4, window_bounds = array<i64: 1, 8, 256>}]} {
    %c0 = arith.constant 0 : index
    %c0_0 = arith.constant 0 : index
    %0 = vector.load %arg3[%c0, %c0_0] : memref<8x72xbf16, #tpu.memory_space<vmem>>, vector<8x72xbf16>
    %c0_1 = arith.constant 0 : index
    %c0_2 = arith.constant 0 : index
    %c0_3 = arith.constant 0 : index
    %1 = vector.load %arg2[%c0_1, %c0_2, %c0_3] : memref<1x72x256xbf16, #tpu.memory_space<vmem>>, vector<1x72x256xbf16>
    %2 = vector.shape_cast %1 : vector<1x72x256xbf16> to vector<72x256xbf16>
    %cst = arith.constant dense<0.000000e+00> : vector<8x256xf32>
    %3 = tpu.matmul %0, %2, %cst {dimension_numbers = #tpu.dot_dimension_numbers<[1], [0], [0], [1], [0, 0, 1, 1], [], []>} : vector<8x72xbf16>, vector<72x256xbf16>, vector<8x256xf32> -> vector<8x256xf32>
    %c0_4 = arith.constant 0 : index
    %c0_5 = arith.constant 0 : index
    %4 = vector.load %arg4[%c0_4, %c0_5] : memref<8x1xf32, #tpu.memory_space<vmem>>, vector<8x1xf32>
    %5 = vector.broadcast %4 : vector<8x1xf32> to vector<8x256xf32>
    %6 = arith.addf %3, %5 : vector<8x256xf32>
    %c0_6 = arith.constant 0 : index
    %c0_7 = arith.constant 0 : index
    %c0_8 = arith.constant 0 : index
    %7 = vector.load %arg5[%c0_6, %c0_7, %c0_8] : memref<1x8x256xf32, #tpu.memory_space<vmem>>, vector<1x8x256xf32>
    %8 = vector.shape_cast %7 : vector<1x8x256xf32> to vector<8x256xf32>
    %9 = arith.addf %6, %8 : vector<8x256xf32>
    %c0_9 = arith.constant 0 : index
    %c0_10 = arith.constant 0 : index
    %c0_11 = arith.constant 0 : index
    %10 = vector.load %arg6[%c0_9, %c0_10, %c0_11] : memref<1x8x256xf32, #tpu.memory_space<vmem>>, vector<1x8x256xf32>
    %11 = vector.shape_cast %10 : vector<1x8x256xf32> to vector<8x256xf32>
    %12 = vector.shape_cast %9 : vector<8x256xf32> to vector<1x8x256xf32>
    tpu.vector_store %arg6[%c0_9, %c0_10, %c0_11], %12 {strides = array<i32>} : memref<1x8x256xf32, #tpu.memory_space<vmem>>, vector<1x8x256xf32>,
    return
  }
  func.func @transform_0(%arg0: i32, %arg1: i32) -> (i32, i32, i32) {
    %c0_i32 = arith.constant 0 : i32
    %c0_i32_0 = arith.constant 0 : i32
    return %arg0, %c0_i32, %arg1 : i32, i32, i32
  }
  func.func @transform_1(%arg0: i32, %arg1: i32) -> (i32, i32) {
    %c0_i32 = arith.constant 0 : i32
    %c0_i32_0 = arith.constant 0 : i32
    %c0_i32_1 = arith.constant 0 : i32
    return %c0_i32, %c0_i32_0 : i32, i32
  }
  func.func @transform_2(%arg0: i32, %arg1: i32) -> (i32, i32) {
    %c0_i32 = arith.constant 0 : i32
    %c0_i32_0 = arith.constant 0 : i32
    %c0_i32_1 = arith.constant 0 : i32
    return %c0_i32, %c0_i32_0 : i32, i32
  }
  func.func @transform_3(%arg0: i32, %arg1: i32) -> (i32, i32, i32) {
    %c0_i32 = arith.constant 0 : i32
    %c0_i32_0 = arith.constant 0 : i32
    return %arg0, %c0_i32, %arg1 : i32, i32, i32
  }
  func.func @transform_4(%arg0: i32, %arg1: i32) -> (i32, i32, i32) {
    %c0_i32 = arith.constant 0 : i32
    %c0_i32_0 = arith.constant 0 : i32
    return %arg0, %c0_i32, %arg1 : i32, i32, i32
  }
}

</mosaic_0001>

<llo_original>
// kernel: rfdn_forward.51
$region0: #{rfdn_forward.51}
  #allocation0 [shape = 'u32[]', space=smem, size = 0x4, offset = 0x4, fixed_abs, tag = 'smem constant byte address 0x4 - core index']
  #allocation1 [shape = 'u32[72,128]{1,0:T(1,128)}', space=vmem, size = 0x9000, scoped, tag = 'internal scratch']
  %s0 = inlined_call_operand.vmem [shape: bf16[2,36,256], index: 0, kind: input, shape index: {}]
  %s1 = inlined_call_operand.vmem [shape: bf16[8,36], index: 1, kind: input, shape index: {}]
  %s2 = inlined_call_operand.vmem [shape: f32[8,1], index: 2, kind: input, shape index: {}]
  %s3 = inlined_call_operand.vmem [shape: f32[2,8,256], index: 3, kind: output, shape index: {}]
  %s4 = sld [smem:[#allocation0]]
  $region45: #{rfdn_forward.51} parent=0
    _
  %s6 = ssub.s32 1, %s4
  %s7 = scalar_select 0, %s6, %s4
  loop: start=0, step=1, limit=4
  $region2: #{rfdn_forward.51} parent=0 // loop_pre_header
    _
  $region3: #{rfdn_forward.51} parent=0 // loop_header
    %s9 = sphi 0, %s13
    %p10 = scmp.ge.s32.totalorder %s9, 4
    %s16 = sphi 0, %s28
    %s17 = sphi 0, %s24
    %s18 = sphi 0, %s16
    %s19 = sphi 0, %s17
    %s20 = sphi 0, %s18
    %s21 = sphi 0, %s19
    %s33 = sphi 0, %s35
    %s36 = sphi 0, %s33
    %s37 = sphi 0, %s36
    %s53 = sphi 0, %s37
    %s57 = sphi 0, %s57
    %s59 = sphi 0, %s57
    %s60 = sphi 0, %s59
    %s74 = sphi 0, %s60
    %s78 = sphi 0, %s78
    %s80 = sphi 0, %s78
    %s81 = sphi 0, %s80
    %s95 = sphi 0, %s81
    %s103 = sphi 0, %s105
    %s106 = sphi 0, %s103
    %s107 = sphi 0, %s106
    %s123 = sphi 0, %s107
  $region4: #{rfdn_forward.51} parent=0 // loop_header_branch
    %12 = sbr.rel (%p10) target = $region8
  $region5: #{rfdn_forward.51} parent=0 // loop_body
    %s14 = ssub.s32 %s9, 1
    %s15 = ssub.s32 %s9, 2
    %s22 = sadd.s32 1, %s17
    %p23 = scmp.ge.s32.totalorder %s22, 1
    %s24 = scalar_select %p23, 0, %s22
    %s25 = sadd.s32 1, %s16
    %s26 = scalar_select %p23, %s25, %s16
    %p27 = scmp.ge.s32.totalorder %s26, 2
    %s28 = scalar_select %p27, 0, %s26
    %s29 = ssub.s32 %s16, %s28
    %s30 = ssub.s32 %s17, %s24
    %s31 = sor.u32 %s29, %s30
    %p32 = scmp.eq.s32.totalorder %s31, 0
    %s34 = sadd.s32 %s33, 1
    %s35 = scalar_select %p32, %s33, %s34
    %p38 = pneg %p32
    %p39 = scmp.eq.s32.totalorder %s9, 1
    %p40 = por %p38, %p39
    %p41 = scmp.ne.s32.totalorder %s33, %s36
    %p42 = scmp.eq.s32.totalorder %s9, 0
    %p43 = por %p41, %p42
    %p44 = scmp.ne.s32.totalorder %s33, %s36
    %p45 = scmp.eq.s32.totalorder %s14, 1
    %p46 = por %p44, %p45
    %p47 = scmp.ne.s32.totalorder %s36, %s37
    %p48 = scmp.eq.s32.totalorder %s14, 0
    %p49 = por %p47, %p48
    %p50 = scmp.ne.s32.totalorder %s36, %s37
    %p51 = scmp.eq.s32.totalorder %s15, 1
    %p52 = por %p50, %p51
    %p54 = scmp.ne.s32.totalorder %s37, %s53
    %p55 = scmp.eq.s32.totalorder %s15, 0
    %p56 = por %p54, %p55
    %s58 = sadd.s32 %s57, 1
    %p61 = scmp.eq.s32.totalorder %s9, 1
    %p62 = scmp.ne.s32.totalorder %s57, %s59
    %p63 = scmp.eq.s32.totalorder %s9, 0
    %p64 = por %p62, %p63
    %p65 = scmp.ne.s32.totalorder %s57, %s59
    %p66 = scmp.eq.s32.totalorder %s14, 1
    %p67 = por %p65, %p66
    %p68 = scmp.ne.s32.totalorder %s59, %s60
    %p69 = scmp.eq.s32.totalorder %s14, 0
    %p70 = por %p68, %p69
    %p71 = scmp.ne.s32.totalorder %s59, %s60
    %p72 = scmp.eq.s32.totalorder %s15, 1
    %p73 = por %p71, %p72
    %p75 = scmp.ne.s32.totalorder %s60, %s74
    %p76 = scmp.eq.s32.totalorder %s15, 0
    %p77 = por %p75, %p76
    %s79 = sadd.s32 %s78, 1
    %p82 = scmp.eq.s32.totalorder %s9, 1
    %p83 = scmp.ne.s32.totalorder %s78, %s80
    %p84 = scmp.eq.s32.totalorder %s9, 0
    %p85 = por %p83, %p84
    %p86 = scmp.ne.s32.totalorder %s78, %s80
    %p87 = scmp.eq.s32.totalorder %s14, 1
    %p88 = por %p86, %p87
    %p89 = scmp.ne.s32.totalorder %s80, %s81
    %p90 = scmp.eq.s32.totalorder %s14, 0
    %p91 = por %p89, %p90
    %p92 = scmp.ne.s32.totalorder %s80, %s81
    %p93 = scmp.eq.s32.totalorder %s15, 1
    %p94 = por %p92, %p93
    %p96 = scmp.ne.s32.totalorder %s81, %s95
    %p97 = scmp.eq.s32.totalorder %s15, 0
    %p98 = por %p96, %p97
    %s99 = ssub.s32 %s16, %s28
    %s100 = ssub.s32 %s17, %s24
    %s101 = sor.u32 %s99, %s100
    %p102 = scmp.eq.s32.totalorder %s101, 0
    %s104 = sadd.s32 %s103, 1
    %s105 = scalar_select %p102, %s103, %s104
    %p108 = pneg %p102
    %p109 = scmp.eq.s32.totalorder %s9, 1
    %p110 = por %p108, %p109
    %p111 = scmp.ne.s32.totalorder %s103, %s106
    %p112 = scmp.eq.s32.totalorder %s9, 0
    %p113 = por %p111, %p112
    %p114 = scmp.ne.s32.totalorder %s103, %s106
    %p115 = scmp.eq.s32.totalorder %s14, 1
    %p116 = por %p114, %p115
    %p117 = scmp.ne.s32.totalorder %s106, %s107
    %p118 = scmp.eq.s32.totalorder %s14, 0
    %p119 = por %p117, %p118
    %p120 = scmp.ne.s32.totalorder %s106, %s107
    %p121 = scmp.eq.s32.totalorder %s15, 1
    %p122 = por %p120, %p121
    %p124 = scmp.ne.s32.totalorder %s107, %s123
    %p125 = scmp.eq.s32.totalorder %s15, 0
    %p126 = por %p124, %p125
    %p127 = scmp.le.s32.totalorder 1, %s9
    %p128 = scmp.lt.s32.totalorder %s9, 3
    %p129 = pnand %p127, %p128
    %p130 = pneg %p129
    // Predicated region
    $region9: #{rfdn_forward.51} parent=5 // pred_check
      _
    $region10: #{rfdn_forward.51} parent=5 // pred_check_branch
      %132 = sbr.rel (%p129) target = $region12
    $region11: #{rfdn_forward.51} parent=5 // pred_region
      %s133 = ssub.s32 %s9, 1
      // Predicated region
      $region13: #{rfdn_forward.51} parent=11 // pred_check
        %p134 = pneg %p70
      $region14: #{rfdn_forward.51} parent=11 // pred_check_branch
        %136 = sbr.rel (%p134) target = $region16
      $region15: #{rfdn_forward.51} parent=11 // pred_region
        _
      $region16: #{rfdn_forward.51} parent=11 // pred_fallthru
        _
      // Predicated region
      $region17: #{rfdn_forward.51} parent=11 // pred_check
        %p137 = pneg %p91
      $region18: #{rfdn_forward.51} parent=11 // pred_check_branch
        %139 = sbr.rel (%p137) target = $region20
      $region19: #{rfdn_forward.51} parent=11 // pred_region
        _
      $region20: #{rfdn_forward.51} parent=11 // pred_fallthru
        _
    $region12: #{rfdn_forward.51} parent=5 // pred_fallthru
      _
    %p140 = scmp.lt.s32.totalorder %s9, 2
    // Predicated region
    $region21: #{rfdn_forward.51} parent=5 // pred_check
      %p141 = pneg %p140
    $region22: #{rfdn_forward.51} parent=5 // pred_check_branch
      %143 = sbr.rel (%p141) target = $region24
    $region23: #{rfdn_forward.51} parent=5 // pred_region
      // Predicated region
      $region25: #{rfdn_forward.51} parent=23 // pred_check
        %p144 = pneg %p43
      $region26: #{rfdn_forward.51} parent=23 // pred_check_branch
        %146 = sbr.rel (%p144) target = $region28
      $region27: #{rfdn_forward.51} parent=23 // pred_region
        %s147 = smul.u32 2, %s17
        %p148 = scmp.lt.s32.totalorder %s16, 1
        %s149 = scalar_select %p148, %s16, 1
        %p150 = scmp.lt.s32.totalorder %s147, 1
        %s151 = scalar_select %p150, %s147, 1
        %s152 = smul.addr %s149, 10
        %s153 = sadd.s32 %s151, %s152
        %s154 = smul.addr %s153, 4
        %s155 = scalar_lea.vmem %s0, %s154
        %s156 = smul.u32 2, %s17
      $region28: #{rfdn_forward.51} parent=23 // pred_fallthru
        _
    $region24: #{rfdn_forward.51} parent=5 // pred_fallthru
      _
    %p157 = scmp.le.s32.totalorder 1, %s9
    %p158 = scmp.lt.s32.totalorder %s9, 3
    %p159 = pnand %p157, %p158
    %p160 = pneg %p159
    // Predicated region
    $region29: #{rfdn_forward.51} parent=5 // pred_check
      _
    $region30: #{rfdn_forward.51} parent=5 // pred_check_branch
      %162 = sbr.rel (%p159) target = $region32
    $region31: #{rfdn_forward.51} parent=5 // pred_region
      %s163 = ssub.s32 %s9, 1
      %s164 = smul.u32 2, %s19
      %p165 = scmp.lt.s32.totalorder %s18, 1
      %s166 = scalar_select %p165, %s18, 1
      %p167 = scmp.lt.s32.totalorder %s164, 1
      %s168 = scalar_select %p167, %s164, 1
      %s169 = smul.addr %s166, 10
      %s170 = sadd.s32 %s168, %s169
      %s171 = smul.addr %s170, 4
      %s172 = scalar_lea.vmem %s0, %s171
      %p173 = pneg %p49
      %p174 = pneg %p46
      %p175 = pneg %p70
      %p176 = pneg %p67
      %p177 = pneg %p91
      %p178 = pneg %p88
      %p179 = pneg %p119
      %p180 = pneg %p116
      %s181 = smul.u32 2, %s19
      %p182 = scmp.lt.s32.totalorder %s18, 1
      %s183 = scalar_select %p182, %s18, 1
      %p184 = scmp.lt.s32.totalorder %s181, 1
      %s185 = scalar_select %p184, %s181, 1
      %s186 = smul.addr %s183, 2
      %s187 = sadd.s32 %s185, %s186
      %s188 = smul.addr %s187, 8
      %s189 = scalar_lea.vmem %s3, %s188
      %s190 = smul.u32 2, %s19
      %p191 = scmp.lt.s32.totalorder %s18, 1
      %s192 = scalar_select %p191, %s18, 1
      %p193 = scmp.lt.s32.totalorder %s190, 1
      %s194 = scalar_select %p193, %s190, 1
      %s195 = smul.addr %s192, 10
      %s196 = sadd.s32 %s194, %s195
      %s197 = smul.addr %s196, 4
      %s198 = scalar_lea.vmem %s0, %s197
      %s199 = smul.u32 2, %s19
      %s200 = smul.u32 2, %s19
      %p201 = scmp.lt.s32.totalorder %s18, 1
      %s202 = scalar_select %p201, %s18, 1
      %p203 = scmp.lt.s32.totalorder %s200, 1
      %s204 = scalar_select %p203, %s200, 1
      %s205 = smul.addr %s202, 2
      %s206 = sadd.s32 %s204, %s205
      %s207 = smul.addr %s206, 8
      %s208 = scalar_lea.vmem %s3, %s207
      %s209 = smul.u32 2, %s19
      %v211 = vld [vmem:[%s1] sm:$0xf]
      %v212 = vld [vmem:[%s198] sm:$0xff]
      %v213 = vld [vmem:[%s198 + $0x8] sm:$0xff]
      %v214 = vld [vmem:[%s198 + $0x10] sm:$0xff]
      %v215 = vld [vmem:[%s198 + $0x18] sm:$0xff]
      %v216 = vld [vmem:[%s198 + $0x20] sm:$0x33]
      %v217 = vld [vmem:[%s2] sm:$0xff]
      %219 = vset.pattern.permute.xlu0 0
      %220 = vperm.xlu0 %219, %v217
      %v221 = vpop.permute.xlu0 %220
      %v228 = vunpack.c.l.b16 %v212
      %v229 = vunpack.c.h.b16 %v212
      %v230 = vunpack.c.l.b16 %v213
      %v231 = vunpack.c.h.b16 %v213
      %v232 = vunpack.c.l.b16 %v214
      %v233 = vunpack.c.h.b16 %v214
      %v234 = vunpack.c.l.b16 %v215
      %v235 = vunpack.c.h.b16 %v215
      %v236 = vunpack.c.l.b16 %v216
      %v237 = vunpack.c.h.b16 %v216
      %v238 = vpack.c.b16 %v230, %v228
      %v239 = vpack.c.b16 %v231, %v229
      %v240 = vpack.c.b16 %v234, %v232
      %v241 = vpack.c.b16 %v235, %v233
      %v242 = vpack.c.b16 %v236, %v236
      %v243 = vpack.c.b16 %v237, %v237
      %vm248 = vcmask 293888
      %v250 = vsel %vm248, %v211, 0
      %vm252 = vcmask 1041408
      %v254 = vsel %vm252, %v242, 0
      %v257 = vsel %vm252, %v243, 0
      %259 = vmatpush.bf16.msra.mxu0 0
      %260 = vmatpush.bf16.msra.mxu0 0
      %261 = vmatpush.bf16.msra.mxu0 0
      %262 = vmatpush.bf16.msra.mxu0 0
      %263 = vmatpush.bf16.msra.mxu0 0
      %264 = vmatpush.bf16.msra.mxu0 %v254
      %265 = vmatpush.bf16.msra.mxu0 %v240
      %266 = vmatpush.bf16.msra.mxu0 %v238
      %267 = vmatmul.bf16.gmra.mxu0 %v250
      %v268 = vpop.f32.mrf.mxu0
      %v269 = vadd.f32 %v221, %v268
      %v270 = vpop.f32.mrf.mxu0
      %271 = vdwg.mxu0
      %272 = vmatpush.bf16.msra.mxu0 0
      %273 = vmatpush.bf16.msra.mxu0 0
      %274 = vmatpush.bf16.msra.mxu0 0
      %275 = vmatpush.bf16.msra.mxu0 0
      %276 = vmatpush.bf16.msra.mxu0 0
      %277 = vmatpush.bf16.msra.mxu0 %v257
      %278 = vmatpush.bf16.msra.mxu0 %v241
      %279 = vmatpush.bf16.msra.mxu0 %v239
      %280 = vmatmul.bf16.gmra.mxu0 %v250
      %v281 = vpop.f32.mrf.mxu0
      %v282 = vadd.f32 %v221, %v281
      %v283 = vpop.f32.mrf.mxu0
      %284 = vdwg.mxu0
      %285 = vst [vmem:[%s208] sm:$0xff] %v269
      %286 = vst [vmem:[%s208 + $0x8] sm:$0xff] %v282
      %s287 = smul.u32 2, %s19
      %p288 = scmp.lt.s32.totalorder %s18, 1
      %s289 = scalar_select %p288, %s18, 1
      %p290 = scmp.lt.s32.totalorder %s287, 1
      %s291 = scalar_select %p290, %s287, 1
      %s292 = smul.addr %s289, 2
      %s293 = sadd.s32 %s291, %s292
      %s294 = smul.addr %s293, 8
      %s295 = scalar_lea.vmem %s3, %s294
      // Predicated region
      $region33: #{rfdn_forward.51} parent=31 // pred_check
        %p296 = pneg %p116
      $region34: #{rfdn_forward.51} parent=31 // pred_check_branch
        %298 = sbr.rel (%p296) target = $region36
      $region35: #{rfdn_forward.51} parent=31 // pred_region
        %s299 = smul.u32 2, %s19
      $region36: #{rfdn_forward.51} parent=31 // pred_fallthru
        _
    $region32: #{rfdn_forward.51} parent=5 // pred_fallthru
      _
    %p300 = scmp.le.s32.totalorder 2, %s9
    // Predicated region
    $region37: #{rfdn_forward.51} parent=5 // pred_check
      %p301 = pneg %p300
    $region38: #{rfdn_forward.51} parent=5 // pred_check_branch
      %303 = sbr.rel (%p301) target = $region40
    $region39: #{rfdn_forward.51} parent=5 // pred_region
      %s304 = ssub.s32 %s9, 2
      // Predicated region
      $region41: #{rfdn_forward.51} parent=39 // pred_check
        %p305 = pneg %p122
      $region42: #{rfdn_forward.51} parent=39 // pred_check_branch
        %307 = sbr.rel (%p305) target = $region44
      $region43: #{rfdn_forward.51} parent=39 // pred_region
        %s308 = smul.u32 2, %s21
        %p309 = scmp.lt.s32.totalorder %s20, 1
        %s310 = scalar_select %p309, %s20, 1
        %p311 = scmp.lt.s32.totalorder %s308, 1
        %s312 = scalar_select %p311, %s308, 1
        %s313 = smul.addr %s310, 2
        %s314 = sadd.s32 %s312, %s313
        %s315 = smul.addr %s314, 8
        %s316 = scalar_lea.vmem %s3, %s315
      $region44: #{rfdn_forward.51} parent=39 // pred_fallthru
        _
    $region40: #{rfdn_forward.51} parent=5 // pred_fallthru
      _
  $region6: #{rfdn_forward.51} parent=0 // loop_footer
    %s13 = sadd.s32 1, %s9
  $region7: #{rfdn_forward.51} parent=0 // loop_footer_branch
    %8 = sbr.rel target = $region3
  $region8: #{rfdn_forward.51} parent=0 // loop_exit
    _

// kernel: rfdn_forward.52
$region0: #{rfdn_forward.52}
  #allocation0 [shape = 'u32[]', space=smem, size = 0x4, offset = 0x4, fixed_abs, tag = 'smem constant byte address 0x4 - core index']
  #allocation1 [shape = 'u32[72,128]{1,0:T(1,128)}', space=vmem, size = 0x9000, scoped, tag = 'internal scratch']
  %s0 = inlined_call_operand.vmem [shape: bf16[2,72,256], index: 0, kind: input, shape index: {}]
  %s1 = inlined_call_operand.vmem [shape: bf16[12,72], index: 1, kind: input, shape index: {}]
  %s2 = inlined_call_operand.vmem [shape: f32[12,1], index: 2, kind: input, shape index: {}]
  %s3 = inlined_call_operand.vmem [shape: f32[2,12,256], index: 3, kind: input, shape index: {}]
  %s4 = inlined_call_operand.vmem [shape: f32[2,12,256], index: 4, kind: output, shape index: {}]
  %s5 = sld [smem:[#allocation0]]
  $region49: #{rfdn_forward.52} parent=0
    _
  %s7 = ssub.s32 1, %s5
  %s8 = scalar_select 0, %s7, %s5
  loop: start=0, step=1, limit=4
  $region2: #{rfdn_forward.52} parent=0 // loop_pre_header
    _
  $region3: #{rfdn_forward.52} parent=0 // loop_header
    %s10 = sphi 0, %s14
    %p11 = scmp.ge.s32.totalorder %s10, 4
    %s17 = sphi 0, %s29
    %s18 = sphi 0, %s25
    %s19 = sphi 0, %s17
    %s20 = sphi 0, %s18
    %s21 = sphi 0, %s19
    %s22 = sphi 0, %s20
    %s34 = sphi 0, %s36
    %s37 = sphi 0, %s34
    %s38 = sphi 0, %s37
    %s54 = sphi 0, %s38
    %s58 = sphi 0, %s58
    %s60 = sphi 0, %s58
    %s61 = sphi 0, %s60
    %s75 = sphi 0, %s61
    %s79 = sphi 0, %s79
    %s81 = sphi 0, %s79
    %s82 = sphi 0, %s81
    %s96 = sphi 0, %s82
    %s104 = sphi 0, %s106
    %s107 = sphi 0, %s104
    %s108 = sphi 0, %s107
    %s124 = sphi 0, %s108
    %s132 = sphi 0, %s134
    %s135 = sphi 0, %s132
    %s136 = sphi 0, %s135
    %s152 = sphi 0, %s136
  $region4: #{rfdn_forward.52} parent=0 // loop_header_branch
    %13 = sbr.rel (%p11) target = $region8
  $region5: #{rfdn_forward.52} parent=0 // loop_body
    %s15 = ssub.s32 %s10, 1
    %s16 = ssub.s32 %s10, 2
    %s23 = sadd.s32 1, %s18
    %p24 = scmp.ge.s32.totalorder %s23, 1
    %s25 = scalar_select %p24, 0, %s23
    %s26 = sadd.s32 1, %s17
    %s27 = scalar_select %p24, %s26, %s17
    %p28 = scmp.ge.s32.totalorder %s27, 2
    %s29 = scalar_select %p28, 0, %s27
    %s30 = ssub.s32 %s17, %s29
    %s31 = ssub.s32 %s18, %s25
    %s32 = sor.u32 %s30, %s31
    %p33 = scmp.eq.s32.totalorder %s32, 0
    %s35 = sadd.s32 %s34, 1
    %s36 = scalar_select %p33, %s34, %s35
    %p39 = pneg %p33
    %p40 = scmp.eq.s32.totalorder %s10, 1
    %p41 = por %p39, %p40
    %p42 = scmp.ne.s32.totalorder %s34, %s37
    %p43 = scmp.eq.s32.totalorder %s10, 0
    %p44 = por %p42, %p43
    %p45 = scmp.ne.s32.totalorder %s34, %s37
    %p46 = scmp.eq.s32.totalorder %s15, 1
    %p47 = por %p45, %p46
    %p48 = scmp.ne.s32.totalorder %s37, %s38
    %p49 = scmp.eq.s32.totalorder %s15, 0
    %p50 = por %p48, %p49
    %p51 = scmp.ne.s32.totalorder %s37, %s38
    %p52 = scmp.eq.s32.totalorder %s16, 1
    %p53 = por %p51, %p52
    %p55 = scmp.ne.s32.totalorder %s38, %s54
    %p56 = scmp.eq.s32.totalorder %s16, 0
    %p57 = por %p55, %p56
    %s59 = sadd.s32 %s58, 1
    %p62 = scmp.eq.s32.totalorder %s10, 1
    %p63 = scmp.ne.s32.totalorder %s58, %s60
    %p64 = scmp.eq.s32.totalorder %s10, 0
    %p65 = por %p63, %p64
    %p66 = scmp.ne.s32.totalorder %s58, %s60
    %p67 = scmp.eq.s32.totalorder %s15, 1
    %p68 = por %p66, %p67
    %p69 = scmp.ne.s32.totalorder %s60, %s61
    %p70 = scmp.eq.s32.totalorder %s15, 0
    %p71 = por %p69, %p70
    %p72 = scmp.ne.s32.totalorder %s60, %s61
    %p73 = scmp.eq.s32.totalorder %s16, 1
    %p74 = por %p72, %p73
    %p76 = scmp.ne.s32.totalorder %s61, %s75
    %p77 = scmp.eq.s32.totalorder %s16, 0
    %p78 = por %p76, %p77
    %s80 = sadd.s32 %s79, 1
    %p83 = scmp.eq.s32.totalorder %s10, 1
    %p84 = scmp.ne.s32.totalorder %s79, %s81
    %p85 = scmp.eq.s32.totalorder %s10, 0
    %p86 = por %p84, %p85
    %p87 = scmp.ne.s32.totalorder %s79, %s81
    %p88 = scmp.eq.s32.totalorder %s15, 1
    %p89 = por %p87, %p88
    %p90 = scmp.ne.s32.totalorder %s81, %s82
    %p91 = scmp.eq.s32.totalorder %s15, 0
    %p92 = por %p90, %p91
    %p93 = scmp.ne.s32.totalorder %s81, %s82
    %p94 = scmp.eq.s32.totalorder %s16, 1
    %p95 = por %p93, %p94
    %p97 = scmp.ne.s32.totalorder %s82, %s96
    %p98 = scmp.eq.s32.totalorder %s16, 0
    %p99 = por %p97, %p98
    %s100 = ssub.s32 %s17, %s29
    %s101 = ssub.s32 %s18, %s25
    %s102 = sor.u32 %s100, %s101
    %p103 = scmp.eq.s32.totalorder %s102, 0
    %s105 = sadd.s32 %s104, 1
    %s106 = scalar_select %p103, %s104, %s105
    %p109 = pneg %p103
    %p110 = scmp.eq.s32.totalorder %s10, 1
    %p111 = por %p109, %p110
    %p112 = scmp.ne.s32.totalorder %s104, %s107
    %p113 = scmp.eq.s32.totalorder %s10, 0
    %p114 = por %p112, %p113
    %p115 = scmp.ne.s32.totalorder %s104, %s107
    %p116 = scmp.eq.s32.totalorder %s15, 1
    %p117 = por %p115, %p116
    %p118 = scmp.ne.s32.totalorder %s107, %s108
    %p119 = scmp.eq.s32.totalorder %s15, 0
    %p120 = por %p118, %p119
    %p121 = scmp.ne.s32.totalorder %s107, %s108
    %p122 = scmp.eq.s32.totalorder %s16, 1
    %p123 = por %p121, %p122
    %p125 = scmp.ne.s32.totalorder %s108, %s124
    %p126 = scmp.eq.s32.totalorder %s16, 0
    %p127 = por %p125, %p126
    %s128 = ssub.s32 %s17, %s29
    %s129 = ssub.s32 %s18, %s25
    %s130 = sor.u32 %s128, %s129
    %p131 = scmp.eq.s32.totalorder %s130, 0
    %s133 = sadd.s32 %s132, 1
    %s134 = scalar_select %p131, %s132, %s133
    %p137 = pneg %p131
    %p138 = scmp.eq.s32.totalorder %s10, 1
    %p139 = por %p137, %p138
    %p140 = scmp.ne.s32.totalorder %s132, %s135
    %p141 = scmp.eq.s32.totalorder %s10, 0
    %p142 = por %p140, %p141
    %p143 = scmp.ne.s32.totalorder %s132, %s135
    %p144 = scmp.eq.s32.totalorder %s15, 1
    %p145 = por %p143, %p144
    %p146 = scmp.ne.s32.totalorder %s135, %s136
    %p147 = scmp.eq.s32.totalorder %s15, 0
    %p148 = por %p146, %p147
    %p149 = scmp.ne.s32.totalorder %s135, %s136
    %p150 = scmp.eq.s32.totalorder %s16, 1
    %p151 = por %p149, %p150
    %p153 = scmp.ne.s32.totalorder %s136, %s152
    %p154 = scmp.eq.s32.totalorder %s16, 0
    %p155 = por %p153, %p154
    %p156 = scmp.le.s32.totalorder 1, %s10
    %p157 = scmp.lt.s32.totalorder %s10, 3
    %p158 = pnand %p156, %p157
    %p159 = pneg %p158
    // Predicated region
    $region9: #{rfdn_forward.52} parent=5 // pred_check
      _
    $region10: #{rfdn_forward.52} parent=5 // pred_check_branch
      %161 = sbr.rel (%p158) target = $region12
    $region11: #{rfdn_forward.52} parent=5 // pred_region
      %s162 = ssub.s32 %s10, 1
      // Predicated region
      $region13: #{rfdn_forward.52} parent=11 // pred_check
        %p163 = pneg %p71
      $region14: #{rfdn_forward.52} parent=11 // pred_check_branch
        %165 = sbr.rel (%p163) target = $region16
      $region15: #{rfdn_forward.52} parent=11 // pred_region
        _
      $region16: #{rfdn_forward.52} parent=11 // pred_fallthru
        _
      // Predicated region
      $region17: #{rfdn_forward.52} parent=11 // pred_check
        %p166 = pneg %p92
      $region18: #{rfdn_forward.52} parent=11 // pred_check_branch
        %168 = sbr.rel (%p166) target = $region20
      $region19: #{rfdn_forward.52} parent=11 // pred_region
        _
      $region20: #{rfdn_forward.52} parent=11 // pred_fallthru
        _
    $region12: #{rfdn_forward.52} parent=5 // pred_fallthru
      _
    %p169 = scmp.lt.s32.totalorder %s10, 2
    // Predicated region
    $region21: #{rfdn_forward.52} parent=5 // pred_check
      %p170 = pneg %p169
    $region22: #{rfdn_forward.52} parent=5 // pred_check_branch
      %172 = sbr.rel (%p170) target = $region24
    $region23: #{rfdn_forward.52} parent=5 // pred_region
      // Predicated region
      $region25: #{rfdn_forward.52} parent=23 // pred_check
        %p173 = pneg %p44
      $region26: #{rfdn_forward.52} parent=23 // pred_check_branch
        %175 = sbr.rel (%p173) target = $region28
      $region27: #{rfdn_forward.52} parent=23 // pred_region
        %s176 = smul.u32 2, %s18
        %p177 = scmp.lt.s32.totalorder %s17, 1
        %s178 = scalar_select %p177, %s17, 1
        %p179 = scmp.lt.s32.totalorder %s176, 1
        %s180 = scalar_select %p179, %s176, 1
        %s181 = smul.addr %s178, 18
        %s182 = sadd.s32 %s180, %s181
        %s183 = smul.addr %s182, 4
        %s184 = scalar_lea.vmem %s0, %s183
        %s185 = smul.u32 2, %s18
      $region28: #{rfdn_forward.52} parent=23 // pred_fallthru
        _
      // Predicated region
      $region29: #{rfdn_forward.52} parent=23 // pred_check
        %p186 = pneg %p114
      $region30: #{rfdn_forward.52} parent=23 // pred_check_branch
        %188 = sbr.rel (%p186) target = $region32
      $region31: #{rfdn_forward.52} parent=23 // pred_region
        %s189 = smul.u32 2, %s18
        %p190 = scmp.lt.s32.totalorder %s17, 1
        %s191 = scalar_select %p190, %s17, 1
        %p192 = scmp.lt.s32.totalorder %s189, 1
        %s193 = scalar_select %p192, %s189, 1
        %s194 = smul.addr %s191, 4
        %s195 = sadd.s32 %s193, %s194
        %s196 = smul.addr %s195, 8
        %s197 = scalar_lea.vmem %s3, %s196
        %s198 = smul.u32 2, %s18
      $region32: #{rfdn_forward.52} parent=23 // pred_fallthru
        _
    $region24: #{rfdn_forward.52} parent=5 // pred_fallthru
      _
    %p199 = scmp.le.s32.totalorder 1, %s10
    %p200 = scmp.lt.s32.totalorder %s10, 3
    %p201 = pnand %p199, %p200
    %p202 = pneg %p201
    // Predicated region
    $region33: #{rfdn_forward.52} parent=5 // pred_check
      _
    $region34: #{rfdn_forward.52} parent=5 // pred_check_branch
      %204 = sbr.rel (%p201) target = $region36
    $region35: #{rfdn_forward.52} parent=5 // pred_region
      %s205 = ssub.s32 %s10, 1
      %s206 = smul.u32 2, %s20
      %p207 = scmp.lt.s32.totalorder %s19, 1
      %s208 = scalar_select %p207, %s19, 1
      %p209 = scmp.lt.s32.totalorder %s206, 1
      %s210 = scalar_select %p209, %s206, 1
      %s211 = smul.addr %s208, 18
      %s212 = sadd.s32 %s210, %s211
      %s213 = smul.addr %s212, 4
      %s214 = scalar_lea.vmem %s0, %s213
      %p215 = pneg %p50
      %p216 = pneg %p47
      %p217 = pneg %p71
      %p218 = pneg %p68
      %p219 = pneg %p92
      %p220 = pneg %p89
      %s221 = smul.u32 2, %s20
      %p222 = scmp.lt.s32.totalorder %s19, 1
      %s223 = scalar_select %p222, %s19, 1
      %p224 = scmp.lt.s32.totalorder %s221, 1
      %s225 = scalar_select %p224, %s221, 1
      %s226 = smul.addr %s223, 4
      %s227 = sadd.s32 %s225, %s226
      %s228 = smul.addr %s227, 8
      %s229 = scalar_lea.vmem %s3, %s228
      %p230 = pneg %p120
      %p231 = pneg %p117
      %p232 = pneg %p148
      %p233 = pneg %p145
      %s234 = smul.u32 2, %s20
      %p235 = scmp.lt.s32.totalorder %s19, 1
      %s236 = scalar_select %p235, %s19, 1
      %p237 = scmp.lt.s32.totalorder %s234, 1
      %s238 = scalar_select %p237, %s234, 1
      %s239 = smul.addr %s236, 4
      %s240 = sadd.s32 %s238, %s239
      %s241 = smul.addr %s240, 8
      %s242 = scalar_lea.vmem %s4, %s241
      %s243 = smul.u32 2, %s20
      %p244 = scmp.lt.s32.totalorder %s19, 1
      %s245 = scalar_select %p244, %s19, 1
      %p246 = scmp.lt.s32.totalorder %s243, 1
      %s247 = scalar_select %p246, %s243, 1
      %s248 = smul.addr %s245, 18
      %s249 = sadd.s32 %s247, %s248
      %s250 = smul.addr %s249, 4
      %s251 = scalar_lea.vmem %s0, %s250
      %s252 = smul.u32 2, %s20
      %s253 = smul.u32 2, %s20
      %p254 = scmp.lt.s32.totalorder %s19, 1
      %s255 = scalar_select %p254, %s19, 1
      %p256 = scmp.lt.s32.totalorder %s253, 1
      %s257 = scalar_select %p256, %s253, 1
      %s258 = smul.addr %s255, 4
      %s259 = sadd.s32 %s257, %s258
      %s260 = smul.addr %s259, 8
      %s261 = scalar_lea.vmem %s3, %s260
      %s262 = smul.u32 2, %s20
      %s263 = smul.u32 2, %s20
      %p264 = scmp.lt.s32.totalorder %s19, 1
      %s265 = scalar_select %p264, %s19, 1
      %p266 = scmp.lt.s32.totalorder %s263, 1
      %s267 = scalar_select %p266, %s263, 1
      %s268 = smul.addr %s265, 4
      %s269 = sadd.s32 %s267, %s268
      %s270 = smul.addr %s269, 8
      %s271 = scalar_lea.vmem %s4, %s270
      %s272 = smul.u32 2, %s20
      %v274 = vld [vmem:[%s1] sm:$0xf]
      %v275 = vld [vmem:[%s1 + $0x4] sm:$0x3]
      %v276 = vld [vmem:[%s251] sm:$0xff]
      %v277 = vld [vmem:[%s251 + $0x8] sm:$0xff]
      %v278 = vld [vmem:[%s251 + $0x10] sm:$0xff]
      %v279 = vld [vmem:[%s251 + $0x18] sm:$0xff]
      %v280 = vld [vmem:[%s251 + $0x20] sm:$0xff]
      %v281 = vld [vmem:[%s251 + $0x28] sm:$0xff]
      %v282 = vld [vmem:[%s251 + $0x30] sm:$0xff]
      %v283 = vld [vmem:[%s251 + $0x38] sm:$0xff]
      %v284 = vld [vmem:[%s251 + $0x40] sm:$0xff]
      %v285 = vld [vmem:[%s2] sm:$0xff]
      %v286 = vld [vmem:[%s2 + $0x8] sm:$0xf]
      %288 = vset.pattern.permute.xlu0 0
      %289 = vperm.xlu0 %288, %v285
      %v290 = vpop.permute.xlu0 %289
      %293 = vset.pattern.permute.xlu0 0
      %294 = vperm.xlu0 %293, %v286
      %v295 = vpop.permute.xlu0 %294
      %v299 = vunpack.c.l.b16 %v274
      %v300 = vunpack.c.l.b16 %v275
      %v301 = vpack.c.b16 %v300, %v299
      %v311 = vunpack.c.l.b16 %v276
      %v312 = vunpack.c.h.b16 %v276
      %v313 = vunpack.c.l.b16 %v277
      %v314 = vunpack.c.h.b16 %v277
      %v315 = vunpack.c.l.b16 %v278
      %v316 = vunpack.c.h.b16 %v278
      %v317 = vunpack.c.l.b16 %v279
      %v318 = vunpack.c.h.b16 %v279
      %v319 = vunpack.c.l.b16 %v280
      %v320 = vunpack.c.h.b16 %v280
      %v321 = vunpack.c.l.b16 %v281
      %v322 = vunpack.c.h.b16 %v281
      %v323 = vunpack.c.l.b16 %v282
      %v324 = vunpack.c.h.b16 %v282
      %v325 = vunpack.c.l.b16 %v283
      %v326 = vunpack.c.h.b16 %v283
      %v327 = vunpack.c.l.b16 %v284
      %v328 = vunpack.c.h.b16 %v284
      %v329 = vpack.c.b16 %v313, %v311
      %v330 = vpack.c.b16 %v314, %v312
      %v331 = vpack.c.b16 %v317, %v315
      %v332 = vpack.c.b16 %v318, %v316
      %v333 = vpack.c.b16 %v321, %v319
      %v334 = vpack.c.b16 %v322, %v320
      %v335 = vpack.c.b16 %v325, %v323
      %v336 = vpack.c.b16 %v326, %v324
      %v337 = vpack.c.b16 %v327, %v327
      %v338 = vpack.c.b16 %v328, %v328
      %vm347 = vcmask 588800
      %v349 = vsel %vm347, %v301, 0
      %vm351 = vcmask 1043456
      %v353 = vsel %vm351, %v337, 0
      %v356 = vsel %vm351, %v338, 0
      %358 = vmatpush.bf16.msra.mxu0 0
      %359 = vmatpush.bf16.msra.mxu0 0
      %360 = vmatpush.bf16.msra.mxu0 0
      %361 = vmatpush.bf16.msra.mxu0 %v353
      %362 = vmatpush.bf16.msra.mxu0 %v335
      %363 = vmatpush.bf16.msra.mxu0 %v333
      %364 = vmatpush.bf16.msra.mxu0 %v331
      %365 = vmatpush.bf16.msra.mxu0 %v329
      %366 = vmatmul.bf16.gmra.mxu0 %v349
      %v367 = vpop.f32.mrf.mxu0
      %v368 = vadd.f32 %v290, %v367
      %v369 = vpop.f32.mrf.mxu0
      %v370 = vadd.f32 %v295, %v369
      %371 = vdwg.mxu0
      %372 = vmatpush.bf16.msra.mxu0 0
      %373 = vmatpush.bf16.msra.mxu0 0
      %374 = vmatpush.bf16.msra.mxu0 0
      %375 = vmatpush.bf16.msra.mxu0 %v356
      %376 = vmatpush.bf16.msra.mxu0 %v336
      %377 = vmatpush.bf16.msra.mxu0 %v334
      %378 = vmatpush.bf16.msra.mxu0 %v332
      %379 = vmatpush.bf16.msra.mxu0 %v330
      %380 = vmatmul.bf16.gmra.mxu0 %v349
      %v381 = vpop.f32.mrf.mxu0
      %v382 = vadd.f32 %v290, %v381
      %v383 = vpop.f32.mrf.mxu0
      %v384 = vadd.f32 %v295, %v383
      %385 = vdwg.mxu0
      %v386 = vld [vmem:[%s261] sm:$0xff]
      %v387 = vld [vmem:[%s261 + $0x8] sm:$0xff]
      %v388 = vld [vmem:[%s261 + $0x10] sm:$0xf]
      %v389 = vld [vmem:[%s261 + $0x18] sm:$0xf]
      %v390 = vadd.f32 %v368, %v386
      %v391 = vadd.f32 %v382, %v387
      %v392 = vadd.f32 %v370, %v388
      %v393 = vadd.f32 %v384, %v389
      %vm394 = vcmp.ge.f32.partialorder %v390, 0.0
      %vm395 = vcmp.ge.f32.partialorder %v391, 0.0
      %vm396 = vcmp.ge.f32.partialorder %v392, 0.0
      %vm397 = vcmp.ge.f32.partialorder %v393, 0.0
      %v398 = vmul.f32 %v390, 0.05
      %v399 = vmul.f32 %v391, 0.05
      %v400 = vmul.f32 %v392, 0.05
      %v401 = vmul.f32 %v393, 0.05
      %v402 = vsel %vm394, %v390, %v398
      %v403 = vsel %vm395, %v391, %v399
      %v404 = vsel %vm396, %v392, %v400
      %v405 = vsel %vm397, %v393, %v401
      %406 = vst [vmem:[%s271] sm:$0xff] %v402
      %407 = vst [vmem:[%s271 + $0x8] sm:$0xff] %v403
      %408 = vst [vmem:[%s271 + $0x10] sm:$0xf] %v404
      %409 = vst [vmem:[%s271 + $0x18] sm:$0xf] %v405
      %s410 = smul.u32 2, %s20
      %p411 = scmp.lt.s32.totalorder %s19, 1
      %s412 = scalar_select %p411, %s19, 1
      %p413 = scmp.lt.s32.totalorder %s410, 1
      %s414 = scalar_select %p413, %s410, 1
      %s415 = smul.addr %s412, 4
      %s416 = sadd.s32 %s414, %s415
      %s417 = smul.addr %s416, 8
      %s418 = scalar_lea.vmem %s4, %s417
      // Predicated region
      $region37: #{rfdn_forward.52} parent=35 // pred_check
        %p419 = pneg %p145
      $region38: #{rfdn_forward.52} parent=35 // pred_check_branch
        %421 = sbr.rel (%p419) target = $region40
      $region39: #{rfdn_forward.52} parent=35 // pred_region
        %s422 = smul.u32 2, %s20
      $region40: #{rfdn_forward.52} parent=35 // pred_fallthru
        _
    $region36: #{rfdn_forward.52} parent=5 // pred_fallthru
      _
    %p423 = scmp.le.s32.totalorder 2, %s10
    // Predicated region
    $region41: #{rfdn_forward.52} parent=5 // pred_check
      %p424 = pneg %p423
    $region42: #{rfdn_forward.52} parent=5 // pred_check_branch
      %426 = sbr.rel (%p424) target = $region44
    $region43: #{rfdn_forward.52} parent=5 // pred_region
      %s427 = ssub.s32 %s10, 2
      // Predicated region
      $region45: #{rfdn_forward.52} parent=43 // pred_check
        %p428 = pneg %p151
      $region46: #{rfdn_forward.52} parent=43 // pred_check_branch
        %430 = sbr.rel (%p428) target = $region48
      $region47: #{rfdn_forward.52} parent=43 // pred_region
        %s431 = smul.u32 2, %s22
        %p432 = scmp.lt.s32.totalorder %s21, 1
        %s433 = scalar_select %p432, %s21, 1
        %p434 = scmp.lt.s32.totalorder %s431, 1
        %s435 = scalar_select %p434, %s431, 1
        %s436 = smul.addr %s433, 4
        %s437 = sadd.s32 %s435, %s436
        %s438 = smul.addr %s437, 8
        %s439 = scalar_lea.vmem %s4, %s438
      $region48: #{rfdn_forward.52} parent=43 // pred_fallthru
        _
    $region44: #{rfdn_forward.52} parent=5 // pred_fallthru
      _
  $region6: #{rfdn_forward.52} parent=0 // loop_footer
    %s14 = sadd.s32 1, %s10
  $region7: #{rfdn_forward.52} parent=0 // loop_footer_branch
    %9 = sbr.rel target = $region3
  $region8: #{rfdn_forward.52} parent=0 // loop_exit
    _

// kernel: rfdn_forward.56
$region0: #{rfdn_forward.56}
  #allocation0 [shape = 'u32[]', space=smem, size = 0x4, offset = 0x4, fixed_abs, tag = 'smem constant byte address 0x4 - core index']
  #allocation1 [shape = 'u32[72,128]{1,0:T(1,128)}', space=vmem, size = 0x9000, scoped, tag = 'internal scratch']
  %s0 = inlined_call_operand.vmem [shape: bf16[2,16,256], index: 0, kind: input, shape index: {}]
  %s1 = inlined_call_operand.vmem [shape: bf16[8,16], index: 1, kind: input, shape index: {}]
  %s2 = inlined_call_operand.vmem [shape: f32[8,1], index: 2, kind: input, shape index: {}]
  %s3 = inlined_call_operand.vmem [shape: f32[2,8,256], index: 3, kind: output, shape index: {}]
  %s4 = sld [smem:[#allocation0]]
  $region45: #{rfdn_forward.56} parent=0
    _
  %s6 = ssub.s32 1, %s4
  %s7 = scalar_select 0, %s6, %s4
  loop: start=0, step=1, limit=4
  $region2: #{rfdn_forward.56} parent=0 // loop_pre_header
    _
  $region3: #{rfdn_forward.56} parent=0 // loop_header
    %s9 = sphi 0, %s13
    %p10 = scmp.ge.s32.totalorder %s9, 4
    %s16 = sphi 0, %s28
    %s17 = sphi 0, %s24
    %s18 = sphi 0, %s16
    %s19 = sphi 0, %s17
    %s20 = sphi 0, %s18
    %s21 = sphi 0, %s19
    %s33 = sphi 0, %s35
    %s36 = sphi 0, %s33
    %s37 = sphi 0, %s36
    %s53 = sphi 0, %s37
    %s57 = sphi 0, %s57
    %s59 = sphi 0, %s57
    %s60 = sphi 0, %s59
    %s74 = sphi 0, %s60
    %s78 = sphi 0, %s78
    %s80 = sphi 0, %s78
    %s81 = sphi 0, %s80
    %s95 = sphi 0, %s81
    %s103 = sphi 0, %s105
    %s106 = sphi 0, %s103
    %s107 = sphi 0, %s106
    %s123 = sphi 0, %s107
  $region4: #{rfdn_forward.56} parent=0 // loop_header_branch
    %12 = sbr.rel (%p10) target = $region8
  $region5: #{rfdn_forward.56} parent=0 // loop_body
    %s14 = ssub.s32 %s9, 1
    %s15 = ssub.s32 %s9, 2
    %s22 = sadd.s32 1, %s17
    %p23 = scmp.ge.s32.totalorder %s22, 1
    %s24 = scalar_select %p23, 0, %s22
    %s25 = sadd.s32 1, %s16
    %s26 = scalar_select %p23, %s25, %s16
    %p27 = scmp.ge.s32.totalorder %s26, 2
    %s28 = scalar_select %p27, 0, %s26
    %s29 = ssub.s32 %s16, %s28
    %s30 = ssub.s32 %s17, %s24
    %s31 = sor.u32 %s29, %s30
    %p32 = scmp.eq.s32.totalorder %s31, 0
    %s34 = sadd.s32 %s33, 1
    %s35 = scalar_select %p32, %s33, %s34
    %p38 = pneg %p32
    %p39 = scmp.eq.s32.totalorder %s9, 1
    %p40 = por %p38, %p39
    %p41 = scmp.ne.s32.totalorder %s33, %s36
    %p42 = scmp.eq.s32.totalorder %s9, 0
    %p43 = por %p41, %p42
    %p44 = scmp.ne.s32.totalorder %s33, %s36
    %p45 = scmp.eq.s32.totalorder %s14, 1
    %p46 = por %p44, %p45
    %p47 = scmp.ne.s32.totalorder %s36, %s37
    %p48 = scmp.eq.s32.totalorder %s14, 0
    %p49 = por %p47, %p48
    %p50 = scmp.ne.s32.totalorder %s36, %s37
    %p51 = scmp.eq.s32.totalorder %s15, 1
    %p52 = por %p50, %p51
    %p54 = scmp.ne.s32.totalorder %s37, %s53
    %p55 = scmp.eq.s32.totalorder %s15, 0
    %p56 = por %p54, %p55
    %s58 = sadd.s32 %s57, 1
    %p61 = scmp.eq.s32.totalorder %s9, 1
    %p62 = scmp.ne.s32.totalorder %s57, %s59
    %p63 = scmp.eq.s32.totalorder %s9, 0
    %p64 = por %p62, %p63
    %p65 = scmp.ne.s32.totalorder %s57, %s59
    %p66 = scmp.eq.s32.totalorder %s14, 1
    %p67 = por %p65, %p66
    %p68 = scmp.ne.s32.totalorder %s59, %s60
    %p69 = scmp.eq.s32.totalorder %s14, 0
    %p70 = por %p68, %p69
    %p71 = scmp.ne.s32.totalorder %s59, %s60
    %p72 = scmp.eq.s32.totalorder %s15, 1
    %p73 = por %p71, %p72
    %p75 = scmp.ne.s32.totalorder %s60, %s74
    %p76 = scmp.eq.s32.totalorder %s15, 0
    %p77 = por %p75, %p76
    %s79 = sadd.s32 %s78, 1
    %p82 = scmp.eq.s32.totalorder %s9, 1
    %p83 = scmp.ne.s32.totalorder %s78, %s80
    %p84 = scmp.eq.s32.totalorder %s9, 0
    %p85 = por %p83, %p84
    %p86 = scmp.ne.s32.totalorder %s78, %s80
    %p87 = scmp.eq.s32.totalorder %s14, 1
    %p88 = por %p86, %p87
    %p89 = scmp.ne.s32.totalorder %s80, %s81
    %p90 = scmp.eq.s32.totalorder %s14, 0
    %p91 = por %p89, %p90
    %p92 = scmp.ne.s32.totalorder %s80, %s81
    %p93 = scmp.eq.s32.totalorder %s15, 1
    %p94 = por %p92, %p93
    %p96 = scmp.ne.s32.totalorder %s81, %s95
    %p97 = scmp.eq.s32.totalorder %s15, 0
    %p98 = por %p96, %p97
    %s99 = ssub.s32 %s16, %s28
    %s100 = ssub.s32 %s17, %s24
    %s101 = sor.u32 %s99, %s100
    %p102 = scmp.eq.s32.totalorder %s101, 0
    %s104 = sadd.s32 %s103, 1
    %s105 = scalar_select %p102, %s103, %s104
    %p108 = pneg %p102
    %p109 = scmp.eq.s32.totalorder %s9, 1
    %p110 = por %p108, %p109
    %p111 = scmp.ne.s32.totalorder %s103, %s106
    %p112 = scmp.eq.s32.totalorder %s9, 0
    %p113 = por %p111, %p112
    %p114 = scmp.ne.s32.totalorder %s103, %s106
    %p115 = scmp.eq.s32.totalorder %s14, 1
    %p116 = por %p114, %p115
    %p117 = scmp.ne.s32.totalorder %s106, %s107
    %p118 = scmp.eq.s32.totalorder %s14, 0
    %p119 = por %p117, %p118
    %p120 = scmp.ne.s32.totalorder %s106, %s107
    %p121 = scmp.eq.s32.totalorder %s15, 1
    %p122 = por %p120, %p121
    %p124 = scmp.ne.s32.totalorder %s107, %s123
    %p125 = scmp.eq.s32.totalorder %s15, 0
    %p126 = por %p124, %p125
    %p127 = scmp.le.s32.totalorder 1, %s9
    %p128 = scmp.lt.s32.totalorder %s9, 3
    %p129 = pnand %p127, %p128
    %p130 = pneg %p129
    // Predicated region
    $region9: #{rfdn_forward.56} parent=5 // pred_check
      _
    $region10: #{rfdn_forward.56} parent=5 // pred_check_branch
      %132 = sbr.rel (%p129) target = $region12
    $region11: #{rfdn_forward.56} parent=5 // pred_region
      %s133 = ssub.s32 %s9, 1
      // Predicated region
      $region13: #{rfdn_forward.56} parent=11 // pred_check
        %p134 = pneg %p70
      $region14: #{rfdn_forward.56} parent=11 // pred_check_branch
        %136 = sbr.rel (%p134) target = $region16
      $region15: #{rfdn_forward.56} parent=11 // pred_region
        _
      $region16: #{rfdn_forward.56} parent=11 // pred_fallthru
        _
      // Predicated region
      $region17: #{rfdn_forward.56} parent=11 // pred_check
        %p137 = pneg %p91
      $region18: #{rfdn_forward.56} parent=11 // pred_check_branch
        %139 = sbr.rel (%p137) target = $region20
      $region19: #{rfdn_forward.56} parent=11 // pred_region
        _
      $region20: #{rfdn_forward.56} parent=11 // pred_fallthru
        _
    $region12: #{rfdn_forward.56} parent=5 // pred_fallthru
      _
    %p140 = scmp.lt.s32.totalorder %s9, 2
    // Predicated region
    $region21: #{rfdn_forward.56} parent=5 // pred_check
      %p141 = pneg %p140
    $region22: #{rfdn_forward.56} parent=5 // pred_check_branch
      %143 = sbr.rel (%p141) target = $region24
    $region23: #{rfdn_forward.56} parent=5 // pred_region
      // Predicated region
      $region25: #{rfdn_forward.56} parent=23 // pred_check
        %p144 = pneg %p43
      $region26: #{rfdn_forward.56} parent=23 // pred_check_branch
        %146 = sbr.rel (%p144) target = $region28
      $region27: #{rfdn_forward.56} parent=23 // pred_region
        %s147 = smul.u32 2, %s17
        %p148 = scmp.lt.s32.totalorder %s16, 1
        %s149 = scalar_select %p148, %s16, 1
        %p150 = scmp.lt.s32.totalorder %s147, 1
        %s151 = scalar_select %p150, %s147, 1
        %s152 = smul.addr %s149, 4
        %s153 = sadd.s32 %s151, %s152
        %s154 = smul.addr %s153, 4
        %s155 = scalar_lea.vmem %s0, %s154
        %s156 = smul.u32 2, %s17
      $region28: #{rfdn_forward.56} parent=23 // pred_fallthru
        _
    $region24: #{rfdn_forward.56} parent=5 // pred_fallthru
      _
    %p157 = scmp.le.s32.totalorder 1, %s9
    %p158 = scmp.lt.s32.totalorder %s9, 3
    %p159 = pnand %p157, %p158
    %p160 = pneg %p159
    // Predicated region
    $region29: #{rfdn_forward.56} parent=5 // pred_check
      _
    $region30: #{rfdn_forward.56} parent=5 // pred_check_branch
      %162 = sbr.rel (%p159) target = $region32
    $region31: #{rfdn_forward.56} parent=5 // pred_region
      %s163 = ssub.s32 %s9, 1
      %s164 = smul.u32 2, %s19
      %p165 = scmp.lt.s32.totalorder %s18, 1
      %s166 = scalar_select %p165, %s18, 1
      %p167 = scmp.lt.s32.totalorder %s164, 1
      %s168 = scalar_select %p167, %s164, 1
      %s169 = smul.addr %s166, 4
      %s170 = sadd.s32 %s168, %s169
      %s171 = smul.addr %s170, 4
      %s172 = scalar_lea.vmem %s0, %s171
      %p173 = pneg %p49
      %p174 = pneg %p46
      %p175 = pneg %p70
      %p176 = pneg %p67
      %p177 = pneg %p91
      %p178 = pneg %p88
      %p179 = pneg %p119
      %p180 = pneg %p116
      %s181 = smul.u32 2, %s19
      %p182 = scmp.lt.s32.totalorder %s18, 1
      %s183 = scalar_select %p182, %s18, 1
      %p184 = scmp.lt.s32.totalorder %s181, 1
      %s185 = scalar_select %p184, %s181, 1
      %s186 = smul.addr %s183, 2
      %s187 = sadd.s32 %s185, %s186
      %s188 = smul.addr %s187, 8
      %s189 = scalar_lea.vmem %s3, %s188
      %s190 = smul.u32 2, %s19
      %p191 = scmp.lt.s32.totalorder %s18, 1
      %s192 = scalar_select %p191, %s18, 1
      %p193 = scmp.lt.s32.totalorder %s190, 1
      %s194 = scalar_select %p193, %s190, 1
      %s195 = smul.addr %s192, 4
      %s196 = sadd.s32 %s194, %s195
      %s197 = smul.addr %s196, 4
      %s198 = scalar_lea.vmem %s0, %s197
      %s199 = smul.u32 2, %s19
      %s200 = smul.u32 2, %s19
      %p201 = scmp.lt.s32.totalorder %s18, 1
      %s202 = scalar_select %p201, %s18, 1
      %p203 = scmp.lt.s32.totalorder %s200, 1
      %s204 = scalar_select %p203, %s200, 1
      %s205 = smul.addr %s202, 2
      %s206 = sadd.s32 %s204, %s205
      %s207 = smul.addr %s206, 8
      %s208 = scalar_lea.vmem %s3, %s207
      %s209 = smul.u32 2, %s19
      %v211 = vld [vmem:[%s1] sm:$0xf]
      %v212 = vld [vmem:[%s198] sm:$0xff]
      %v213 = vld [vmem:[%s198 + $0x8] sm:$0xff]
      %v214 = vld [vmem:[%s2] sm:$0xff]
      %216 = vset.pattern.permute.xlu0 0
      %217 = vperm.xlu0 %216, %v214
      %v218 = vpop.permute.xlu0 %217
      %v222 = vunpack.c.l.b16 %v212
      %v223 = vunpack.c.h.b16 %v212
      %v224 = vunpack.c.l.b16 %v213
      %v225 = vunpack.c.h.b16 %v213
      %v226 = vpack.c.b16 %v224, %v222
      %v227 = vpack.c.b16 %v225, %v223
      %vm230 = vcmask 130048
      %v232 = vsel %vm230, %v211, 0
      %234 = vmatpush.bf16.msra.mxu0 0
      %235 = vmatpush.bf16.msra.mxu0 0
      %236 = vmatpush.bf16.msra.mxu0 0
      %237 = vmatpush.bf16.msra.mxu0 0
      %238 = vmatpush.bf16.msra.mxu0 0
      %239 = vmatpush.bf16.msra.mxu0 0
      %240 = vmatpush.bf16.msra.mxu0 0
      %241 = vmatpush.bf16.msra.mxu0 %v226
      %242 = vmatmul.bf16.gmra.mxu0 %v232
      %v243 = vpop.f32.mrf.mxu0
      %v244 = vadd.f32 %v218, %v243
      %v245 = vpop.f32.mrf.mxu0
      %246 = vdwg.mxu0
      %247 = vmatpush.bf16.msra.mxu0 0
      %248 = vmatpush.bf16.msra.mxu0 0
      %249 = vmatpush.bf16.msra.mxu0 0
      %250 = vmatpush.bf16.msra.mxu0 0
      %251 = vmatpush.bf16.msra.mxu0 0
      %252 = vmatpush.bf16.msra.mxu0 0
      %253 = vmatpush.bf16.msra.mxu0 0
      %254 = vmatpush.bf16.msra.mxu0 %v227
      %255 = vmatmul.bf16.gmra.mxu0 %v232
      %v256 = vpop.f32.mrf.mxu0
      %v257 = vadd.f32 %v218, %v256
      %v258 = vpop.f32.mrf.mxu0
      %259 = vdwg.mxu0
      %260 = vst [vmem:[%s208] sm:$0xff] %v244
      %261 = vst [vmem:[%s208 + $0x8] sm:$0xff] %v257
      %s262 = smul.u32 2, %s19
      %p263 = scmp.lt.s32.totalorder %s18, 1
      %s264 = scalar_select %p263, %s18, 1
      %p265 = scmp.lt.s32.totalorder %s262, 1
      %s266 = scalar_select %p265, %s262, 1
      %s267 = smul.addr %s264, 2
      %s268 = sadd.s32 %s266, %s267
      %s269 = smul.addr %s268, 8
      %s270 = scalar_lea.vmem %s3, %s269
      // Predicated region
      $region33: #{rfdn_forward.56} parent=31 // pred_check
        %p271 = pneg %p116
      $region34: #{rfdn_forward.56} parent=31 // pred_check_branch
        %273 = sbr.rel (%p271) target = $region36
      $region35: #{rfdn_forward.56} parent=31 // pred_region
        %s274 = smul.u32 2, %s19
      $region36: #{rfdn_forward.56} parent=31 // pred_fallthru
        _
    $region32: #{rfdn_forward.56} parent=5 // pred_fallthru
      _
    %p275 = scmp.le.s32.totalorder 2, %s9
    // Predicated region
    $region37: #{rfdn_forward.56} parent=5 // pred_check
      %p276 = pneg %p275
    $region38: #{rfdn_forward.56} parent=5 // pred_check_branch
      %278 = sbr.rel (%p276) target = $region40
    $region39: #{rfdn_forward.56} parent=5 // pred_region
      %s279 = ssub.s32 %s9, 2
      // Predicated region
      $region41: #{rfdn_forward.56} parent=39 // pred_check
        %p280 = pneg %p122
      $region42: #{rfdn_forward.56} parent=39 // pred_check_branch
        %282 = sbr.rel (%p280) target = $region44
      $region43: #{rfdn_forward.56} parent=39 // pred_region
        %s283 = smul.u32 2, %s21
        %p284 = scmp.lt.s32.totalorder %s20, 1
        %s285 = scalar_select %p284, %s20, 1
        %p286 = scmp.lt.s32.totalorder %s283, 1
        %s287 = scalar_select %p286, %s283, 1
        %s288 = smul.addr %s285, 2
        %s289 = sadd.s32 %s287, %s288
        %s290 = smul.addr %s289, 8
        %s291 = scalar_lea.vmem %s3, %s290
      $region44: #{rfdn_forward.56} parent=39 // pred_fallthru
        _
    $region40: #{rfdn_forward.56} parent=5 // pred_fallthru
      _
  $region6: #{rfdn_forward.56} parent=0 // loop_footer
    %s13 = sadd.s32 1, %s9
  $region7: #{rfdn_forward.56} parent=0 // loop_footer_branch
    %8 = sbr.rel target = $region3
  $region8: #{rfdn_forward.56} parent=0 // loop_exit
    _

// kernel: rfdn_forward.57
$region0: #{rfdn_forward.57}
  #allocation0 [shape = 'u32[]', space=smem, size = 0x4, offset = 0x4, fixed_abs, tag = 'smem constant byte address 0x4 - core index']
  #allocation1 [shape = 'u32[72,128]{1,0:T(1,128)}', space=vmem, size = 0x9000, scoped, tag = 'internal scratch']
  %s0 = inlined_call_operand.vmem [shape: bf16[2,8,256], index: 0, kind: input, shape index: {}]
  %s1 = inlined_call_operand.vmem [shape: bf16[2,8], index: 1, kind: input, shape index: {}]
  %s2 = inlined_call_operand.vmem [shape: f32[2,1], index: 2, kind: input, shape index: {}]
  %s3 = inlined_call_operand.vmem [shape: f32[2,2,256], index: 3, kind: output, shape index: {}]
  %s4 = sld [smem:[#allocation0]]
  $region45: #{rfdn_forward.57} parent=0
    _
  %s6 = ssub.s32 1, %s4
  %s7 = scalar_select 0, %s6, %s4
  loop: start=0, step=1, limit=4
  $region2: #{rfdn_forward.57} parent=0 // loop_pre_header
    _
  $region3: #{rfdn_forward.57} parent=0 // loop_header
    %s9 = sphi 0, %s13
    %p10 = scmp.ge.s32.totalorder %s9, 4
    %s16 = sphi 0, %s28
    %s17 = sphi 0, %s24
    %s18 = sphi 0, %s16
    %s19 = sphi 0, %s17
    %s20 = sphi 0, %s18
    %s21 = sphi 0, %s19
    %s33 = sphi 0, %s35
    %s36 = sphi 0, %s33
    %s37 = sphi 0, %s36
    %s53 = sphi 0, %s37
    %s57 = sphi 0, %s57
    %s59 = sphi 0, %s57
    %s60 = sphi 0, %s59
    %s74 = sphi 0, %s60
    %s78 = sphi 0, %s78
    %s80 = sphi 0, %s78
    %s81 = sphi 0, %s80
    %s95 = sphi 0, %s81
    %s103 = sphi 0, %s105
    %s106 = sphi 0, %s103
    %s107 = sphi 0, %s106
    %s123 = sphi 0, %s107
  $region4: #{rfdn_forward.57} parent=0 // loop_header_branch
    %12 = sbr.rel (%p10) target = $region8
  $region5: #{rfdn_forward.57} parent=0 // loop_body
    %s14 = ssub.s32 %s9, 1
    %s15 = ssub.s32 %s9, 2
    %s22 = sadd.s32 1, %s17
    %p23 = scmp.ge.s32.totalorder %s22, 1
    %s24 = scalar_select %p23, 0, %s22
    %s25 = sadd.s32 1, %s16
    %s26 = scalar_select %p23, %s25, %s16
    %p27 = scmp.ge.s32.totalorder %s26, 2
    %s28 = scalar_select %p27, 0, %s26
    %s29 = ssub.s32 %s16, %s28
    %s30 = ssub.s32 %s17, %s24
    %s31 = sor.u32 %s29, %s30
    %p32 = scmp.eq.s32.totalorder %s31, 0
    %s34 = sadd.s32 %s33, 1
    %s35 = scalar_select %p32, %s33, %s34
    %p38 = pneg %p32
    %p39 = scmp.eq.s32.totalorder %s9, 1
    %p40 = por %p38, %p39
    %p41 = scmp.ne.s32.totalorder %s33, %s36
    %p42 = scmp.eq.s32.totalorder %s9, 0
    %p43 = por %p41, %p42
    %p44 = scmp.ne.s32.totalorder %s33, %s36
    %p45 = scmp.eq.s32.totalorder %s14, 1
    %p46 = por %p44, %p45
    %p47 = scmp.ne.s32.totalorder %s36, %s37
    %p48 = scmp.eq.s32.totalorder %s14, 0
    %p49 = por %p47, %p48
    %p50 = scmp.ne.s32.totalorder %s36, %s37
    %p51 = scmp.eq.s32.totalorder %s15, 1
    %p52 = por %p50, %p51
    %p54 = scmp.ne.s32.totalorder %s37, %s53
    %p55 = scmp.eq.s32.totalorder %s15, 0
    %p56 = por %p54, %p55
    %s58 = sadd.s32 %s57, 1
    %p61 = scmp.eq.s32.totalorder %s9, 1
    %p62 = scmp.ne.s32.totalorder %s57, %s59
    %p63 = scmp.eq.s32.totalorder %s9, 0
    %p64 = por %p62, %p63
    %p65 = scmp.ne.s32.totalorder %s57, %s59
    %p66 = scmp.eq.s32.totalorder %s14, 1
    %p67 = por %p65, %p66
    %p68 = scmp.ne.s32.totalorder %s59, %s60
    %p69 = scmp.eq.s32.totalorder %s14, 0
    %p70 = por %p68, %p69
    %p71 = scmp.ne.s32.totalorder %s59, %s60
    %p72 = scmp.eq.s32.totalorder %s15, 1
    %p73 = por %p71, %p72
    %p75 = scmp.ne.s32.totalorder %s60, %s74
    %p76 = scmp.eq.s32.totalorder %s15, 0
    %p77 = por %p75, %p76
    %s79 = sadd.s32 %s78, 1
    %p82 = scmp.eq.s32.totalorder %s9, 1
    %p83 = scmp.ne.s32.totalorder %s78, %s80
    %p84 = scmp.eq.s32.totalorder %s9, 0
    %p85 = por %p83, %p84
    %p86 = scmp.ne.s32.totalorder %s78, %s80
    %p87 = scmp.eq.s32.totalorder %s14, 1
    %p88 = por %p86, %p87
    %p89 = scmp.ne.s32.totalorder %s80, %s81
    %p90 = scmp.eq.s32.totalorder %s14, 0
    %p91 = por %p89, %p90
    %p92 = scmp.ne.s32.totalorder %s80, %s81
    %p93 = scmp.eq.s32.totalorder %s15, 1
    %p94 = por %p92, %p93
    %p96 = scmp.ne.s32.totalorder %s81, %s95
    %p97 = scmp.eq.s32.totalorder %s15, 0
    %p98 = por %p96, %p97
    %s99 = ssub.s32 %s16, %s28
    %s100 = ssub.s32 %s17, %s24
    %s101 = sor.u32 %s99, %s100
    %p102 = scmp.eq.s32.totalorder %s101, 0
    %s104 = sadd.s32 %s103, 1
    %s105 = scalar_select %p102, %s103, %s104
    %p108 = pneg %p102
    %p109 = scmp.eq.s32.totalorder %s9, 1
    %p110 = por %p108, %p109
    %p111 = scmp.ne.s32.totalorder %s103, %s106
    %p112 = scmp.eq.s32.totalorder %s9, 0
    %p113 = por %p111, %p112
    %p114 = scmp.ne.s32.totalorder %s103, %s106
    %p115 = scmp.eq.s32.totalorder %s14, 1
    %p116 = por %p114, %p115
    %p117 = scmp.ne.s32.totalorder %s106, %s107
    %p118 = scmp.eq.s32.totalorder %s14, 0
    %p119 = por %p117, %p118
    %p120 = scmp.ne.s32.totalorder %s106, %s107
    %p121 = scmp.eq.s32.totalorder %s15, 1
    %p122 = por %p120, %p121
    %p124 = scmp.ne.s32.totalorder %s107, %s123
    %p125 = scmp.eq.s32.totalorder %s15, 0
    %p126 = por %p124, %p125
    %p127 = scmp.le.s32.totalorder 1, %s9
    %p128 = scmp.lt.s32.totalorder %s9, 3
    %p129 = pnand %p127, %p128
    %p130 = pneg %p129
    // Predicated region
    $region9: #{rfdn_forward.57} parent=5 // pred_check
      _
    $region10: #{rfdn_forward.57} parent=5 // pred_check_branch
      %132 = sbr.rel (%p129) target = $region12
    $region11: #{rfdn_forward.57} parent=5 // pred_region
      %s133 = ssub.s32 %s9, 1
      // Predicated region
      $region13: #{rfdn_forward.57} parent=11 // pred_check
        %p134 = pneg %p70
      $region14: #{rfdn_forward.57} parent=11 // pred_check_branch
        %136 = sbr.rel (%p134) target = $region16
      $region15: #{rfdn_forward.57} parent=11 // pred_region
        _
      $region16: #{rfdn_forward.57} parent=11 // pred_fallthru
        _
      // Predicated region
      $region17: #{rfdn_forward.57} parent=11 // pred_check
        %p137 = pneg %p91
      $region18: #{rfdn_forward.57} parent=11 // pred_check_branch
        %139 = sbr.rel (%p137) target = $region20
      $region19: #{rfdn_forward.57} parent=11 // pred_region
        _
      $region20: #{rfdn_forward.57} parent=11 // pred_fallthru
        _
    $region12: #{rfdn_forward.57} parent=5 // pred_fallthru
      _
    %p140 = scmp.lt.s32.totalorder %s9, 2
    // Predicated region
    $region21: #{rfdn_forward.57} parent=5 // pred_check
      %p141 = pneg %p140
    $region22: #{rfdn_forward.57} parent=5 // pred_check_branch
      %143 = sbr.rel (%p141) target = $region24
    $region23: #{rfdn_forward.57} parent=5 // pred_region
      // Predicated region
      $region25: #{rfdn_forward.57} parent=23 // pred_check
        %p144 = pneg %p43
      $region26: #{rfdn_forward.57} parent=23 // pred_check_branch
        %146 = sbr.rel (%p144) target = $region28
      $region27: #{rfdn_forward.57} parent=23 // pred_region
        %s147 = smul.u32 2, %s17
        %p148 = scmp.lt.s32.totalorder %s16, 1
        %s149 = scalar_select %p148, %s16, 1
        %p150 = scmp.lt.s32.totalorder %s147, 1
        %s151 = scalar_select %p150, %s147, 1
        %s152 = smul.addr %s149, 2
        %s153 = sadd.s32 %s151, %s152
        %s154 = smul.addr %s153, 4
        %s155 = scalar_lea.vmem %s0, %s154
        %s156 = smul.u32 2, %s17
      $region28: #{rfdn_forward.57} parent=23 // pred_fallthru
        _
    $region24: #{rfdn_forward.57} parent=5 // pred_fallthru
      _
    %p157 = scmp.le.s32.totalorder 1, %s9
    %p158 = scmp.lt.s32.totalorder %s9, 3
    %p159 = pnand %p157, %p158
    %p160 = pneg %p159
    // Predicated region
    $region29: #{rfdn_forward.57} parent=5 // pred_check
      _
    $region30: #{rfdn_forward.57} parent=5 // pred_check_branch
      %162 = sbr.rel (%p159) target = $region32
    $region31: #{rfdn_forward.57} parent=5 // pred_region
      %s163 = ssub.s32 %s9, 1
      %s164 = smul.u32 2, %s19
      %p165 = scmp.lt.s32.totalorder %s18, 1
      %s166 = scalar_select %p165, %s18, 1
      %p167 = scmp.lt.s32.totalorder %s164, 1
      %s168 = scalar_select %p167, %s164, 1
      %s169 = smul.addr %s166, 2
      %s170 = sadd.s32 %s168, %s169
      %s171 = smul.addr %s170, 4
      %s172 = scalar_lea.vmem %s0, %s171
      %p173 = pneg %p49
      %p174 = pneg %p46
      %p175 = pneg %p70
      %p176 = pneg %p67
      %p177 = pneg %p91
      %p178 = pneg %p88
      %p179 = pneg %p119
      %p180 = pneg %p116
      %s181 = smul.u32 2, %s19
      %p182 = scmp.lt.s32.totalorder %s18, 1
      %s183 = scalar_select %p182, %s18, 1
      %p184 = scmp.lt.s32.totalorder %s181, 1
      %s185 = scalar_select %p184, %s181, 1
      %s186 = smul.addr %s183, 2
      %s187 = sadd.s32 %s185, %s186
      %s188 = smul.addr %s187, 2
      %s189 = scalar_lea.vmem %s3, %s188
      %s190 = smul.u32 2, %s19
      %p191 = scmp.lt.s32.totalorder %s18, 1
      %s192 = scalar_select %p191, %s18, 1
      %p193 = scmp.lt.s32.totalorder %s190, 1
      %s194 = scalar_select %p193, %s190, 1
      %s195 = smul.addr %s192, 2
      %s196 = sadd.s32 %s194, %s195
      %s197 = smul.addr %s196, 4
      %s198 = scalar_lea.vmem %s0, %s197
      %s199 = smul.u32 2, %s19
      %s200 = smul.u32 2, %s19
      %p201 = scmp.lt.s32.totalorder %s18, 1
      %s202 = scalar_select %p201, %s18, 1
      %p203 = scmp.lt.s32.totalorder %s200, 1
      %s204 = scalar_select %p203, %s200, 1
      %s205 = smul.addr %s202, 2
      %s206 = sadd.s32 %s204, %s205
      %s207 = smul.addr %s206, 2
      %s208 = scalar_lea.vmem %s3, %s207
      %s209 = smul.u32 2, %s19
      %v211 = vld [vmem:[%s1] sm:$0x1]
      %v212 = vld [vmem:[%s198] sm:$0xff]
      %v213 = vld [vmem:[%s2] sm:$0x3]
      %215 = vset.pattern.permute.xlu0 0
      %216 = vperm.xlu0 %215, %v213
      %v217 = vpop.permute.xlu0 %216
      %v220 = vunpack.c.l.b16 %v212
      %v221 = vunpack.c.h.b16 %v212
      %v222 = vpack.c.b16 %v220, %v220
      %v223 = vpack.c.b16 %v221, %v221
      %vm224 = vcmask 64512
      %v226 = vsel %vm224, %v211, 0
      %vm228 = vcmask 1043456
      %v230 = vsel %vm228, %v222, 0
      %v233 = vsel %vm228, %v223, 0
      %235 = vmatpush.bf16.msra.mxu0 0
      %236 = vmatpush.bf16.msra.mxu0 0
      %237 = vmatpush.bf16.msra.mxu0 0
      %238 = vmatpush.bf16.msra.mxu0 0
      %239 = vmatpush.bf16.msra.mxu0 0
      %240 = vmatpush.bf16.msra.mxu0 0
      %241 = vmatpush.bf16.msra.mxu0 0
      %242 = vmatpush.bf16.msra.mxu0 %v230
      %243 = vmatmul.bf16.gmra.mxu0 %v226
      %v244 = vpop.f32.mrf.mxu0
      %v245 = vadd.f32 %v217, %v244
      %v246 = vpop.f32.mrf.mxu0
      %247 = vdwg.mxu0
      %248 = vmatpush.bf16.msra.mxu0 0
      %249 = vmatpush.bf16.msra.mxu0 0
      %250 = vmatpush.bf16.msra.mxu0 0
      %251 = vmatpush.bf16.msra.mxu0 0
      %252 = vmatpush.bf16.msra.mxu0 0
      %253 = vmatpush.bf16.msra.mxu0 0
      %254 = vmatpush.bf16.msra.mxu0 0
      %255 = vmatpush.bf16.msra.mxu0 %v233
      %256 = vmatmul.bf16.gmra.mxu0 %v226
      %v257 = vpop.f32.mrf.mxu0
      %v258 = vadd.f32 %v217, %v257
      %v259 = vpop.f32.mrf.mxu0
      %260 = vdwg.mxu0
      %v263 = vrot.slane %v258, 6
      %vm264 = vcmask 1041408
      %v265 = vsel %vm264, %v245, %v263
      %267 = vst [vmem:[%s208] sm:$0xf] %v265
      %s268 = smul.u32 2, %s19
      %p269 = scmp.lt.s32.totalorder %s18, 1
      %s270 = scalar_select %p269, %s18, 1
      %p271 = scmp.lt.s32.totalorder %s268, 1
      %s272 = scalar_select %p271, %s268, 1
      %s273 = smul.addr %s270, 2
      %s274 = sadd.s32 %s272, %s273
      %s275 = smul.addr %s274, 2
      %s276 = scalar_lea.vmem %s3, %s275
      // Predicated region
      $region33: #{rfdn_forward.57} parent=31 // pred_check
        %p277 = pneg %p116
      $region34: #{rfdn_forward.57} parent=31 // pred_check_branch
        %279 = sbr.rel (%p277) target = $region36
      $region35: #{rfdn_forward.57} parent=31 // pred_region
        %s280 = smul.u32 2, %s19
      $region36: #{rfdn_forward.57} parent=31 // pred_fallthru
        _
    $region32: #{rfdn_forward.57} parent=5 // pred_fallthru
      _
    %p281 = scmp.le.s32.totalorder 2, %s9
    // Predicated region
    $region37: #{rfdn_forward.57} parent=5 // pred_check
      %p282 = pneg %p281
    $region38: #{rfdn_forward.57} parent=5 // pred_check_branch
      %284 = sbr.rel (%p282) target = $region40
    $region39: #{rfdn_forward.57} parent=5 // pred_region
      %s285 = ssub.s32 %s9, 2
      // Predicated region
      $region41: #{rfdn_forward.57} parent=39 // pred_check
        %p286 = pneg %p122
      $region42: #{rfdn_forward.57} parent=39 // pred_check_branch
        %288 = sbr.rel (%p286) target = $region44
      $region43: #{rfdn_forward.57} parent=39 // pred_region
        %s289 = smul.u32 2, %s21
        %p290 = scmp.lt.s32.totalorder %s20, 1
        %s291 = scalar_select %p290, %s20, 1
        %p292 = scmp.lt.s32.totalorder %s289, 1
        %s293 = scalar_select %p292, %s289, 1
        %s294 = smul.addr %s291, 2
        %s295 = sadd.s32 %s293, %s294
        %s296 = smul.addr %s295, 2
        %s297 = scalar_lea.vmem %s3, %s296
      $region44: #{rfdn_forward.57} parent=39 // pred_fallthru
        _
    $region40: #{rfdn_forward.57} parent=5 // pred_fallthru
      _
  $region6: #{rfdn_forward.57} parent=0 // loop_footer
    %s13 = sadd.s32 1, %s9
  $region7: #{rfdn_forward.57} parent=0 // loop_footer_branch
    %8 = sbr.rel target = $region3
  $region8: #{rfdn_forward.57} parent=0 // loop_exit
    _

// kernel: rfdn_forward.55
$region0: #{rfdn_forward.55}
  #allocation0 [shape = 'u32[]', space=smem, size = 0x4, offset = 0x4, fixed_abs, tag = 'smem constant byte address 0x4 - core index']
  #allocation1 [shape = 'u32[72,128]{1,0:T(1,128)}', space=vmem, size = 0x9000, scoped, tag = 'internal scratch']
  %s0 = inlined_call_operand.vmem [shape: bf16[2,72,256], index: 0, kind: input, shape index: {}]
  %s1 = inlined_call_operand.vmem [shape: bf16[4,72], index: 1, kind: input, shape index: {}]
  %s2 = inlined_call_operand.vmem [shape: f32[4,1], index: 2, kind: input, shape index: {}]
  %s3 = inlined_call_operand.vmem [shape: f32[2,4,256], index: 3, kind: output, shape index: {}]
  %s4 = sld [smem:[#allocation0]]
  $region45: #{rfdn_forward.55} parent=0
    _
  %s6 = ssub.s32 1, %s4
  %s7 = scalar_select 0, %s6, %s4
  loop: start=0, step=1, limit=4
  $region2: #{rfdn_forward.55} parent=0 // loop_pre_header
    _
  $region3: #{rfdn_forward.55} parent=0 // loop_header
    %s9 = sphi 0, %s13
    %p10 = scmp.ge.s32.totalorder %s9, 4
    %s16 = sphi 0, %s28
    %s17 = sphi 0, %s24
    %s18 = sphi 0, %s16
    %s19 = sphi 0, %s17
    %s20 = sphi 0, %s18
    %s21 = sphi 0, %s19
    %s33 = sphi 0, %s35
    %s36 = sphi 0, %s33
    %s37 = sphi 0, %s36
    %s53 = sphi 0, %s37
    %s57 = sphi 0, %s57
    %s59 = sphi 0, %s57
    %s60 = sphi 0, %s59
    %s74 = sphi 0, %s60
    %s78 = sphi 0, %s78
    %s80 = sphi 0, %s78
    %s81 = sphi 0, %s80
    %s95 = sphi 0, %s81
    %s103 = sphi 0, %s105
    %s106 = sphi 0, %s103
    %s107 = sphi 0, %s106
    %s123 = sphi 0, %s107
  $region4: #{rfdn_forward.55} parent=0 // loop_header_branch
    %12 = sbr.rel (%p10) target = $region8
  $region5: #{rfdn_forward.55} parent=0 // loop_body
    %s14 = ssub.s32 %s9, 1
    %s15 = ssub.s32 %s9, 2
    %s22 = sadd.s32 1, %s17
    %p23 = scmp.ge.s32.totalorder %s22, 1
    %s24 = scalar_select %p23, 0, %s22
    %s25 = sadd.s32 1, %s16
    %s26 = scalar_select %p23, %s25, %s16
    %p27 = scmp.ge.s32.totalorder %s26, 2
    %s28 = scalar_select %p27, 0, %s26
    %s29 = ssub.s32 %s16, %s28
    %s30 = ssub.s32 %s17, %s24
    %s31 = sor.u32 %s29, %s30
    %p32 = scmp.eq.s32.totalorder %s31, 0
    %s34 = sadd.s32 %s33, 1
    %s35 = scalar_select %p32, %s33, %s34
    %p38 = pneg %p32
    %p39 = scmp.eq.s32.totalorder %s9, 1
    %p40 = por %p38, %p39
    %p41 = scmp.ne.s32.totalorder %s33, %s36
    %p42 = scmp.eq.s32.totalorder %s9, 0
    %p43 = por %p41, %p42
    %p44 = scmp.ne.s32.totalorder %s33, %s36
    %p45 = scmp.eq.s32.totalorder %s14, 1
    %p46 = por %p44, %p45
    %p47 = scmp.ne.s32.totalorder %s36, %s37
    %p48 = scmp.eq.s32.totalorder %s14, 0
    %p49 = por %p47, %p48
    %p50 = scmp.ne.s32.totalorder %s36, %s37
    %p51 = scmp.eq.s32.totalorder %s15, 1
    %p52 = por %p50, %p51
    %p54 = scmp.ne.s32.totalorder %s37, %s53
    %p55 = scmp.eq.s32.totalorder %s15, 0
    %p56 = por %p54, %p55
    %s58 = sadd.s32 %s57, 1
    %p61 = scmp.eq.s32.totalorder %s9, 1
    %p62 = scmp.ne.s32.totalorder %s57, %s59
    %p63 = scmp.eq.s32.totalorder %s9, 0
    %p64 = por %p62, %p63
    %p65 = scmp.ne.s32.totalorder %s57, %s59
    %p66 = scmp.eq.s32.totalorder %s14, 1
    %p67 = por %p65, %p66
    %p68 = scmp.ne.s32.totalorder %s59, %s60
    %p69 = scmp.eq.s32.totalorder %s14, 0
    %p70 = por %p68, %p69
    %p71 = scmp.ne.s32.totalorder %s59, %s60
    %p72 = scmp.eq.s32.totalorder %s15, 1
    %p73 = por %p71, %p72
    %p75 = scmp.ne.s32.totalorder %s60, %s74
    %p76 = scmp.eq.s32.totalorder %s15, 0
    %p77 = por %p75, %p76
    %s79 = sadd.s32 %s78, 1
    %p82 = scmp.eq.s32.totalorder %s9, 1
    %p83 = scmp.ne.s32.totalorder %s78, %s80
    %p84 = scmp.eq.s32.totalorder %s9, 0
    %p85 = por %p83, %p84
    %p86 = scmp.ne.s32.totalorder %s78, %s80
    %p87 = scmp.eq.s32.totalorder %s14, 1
    %p88 = por %p86, %p87
    %p89 = scmp.ne.s32.totalorder %s80, %s81
    %p90 = scmp.eq.s32.totalorder %s14, 0
    %p91 = por %p89, %p90
    %p92 = scmp.ne.s32.totalorder %s80, %s81
    %p93 = scmp.eq.s32.totalorder %s15, 1
    %p94 = por %p92, %p93
    %p96 = scmp.ne.s32.totalorder %s81, %s95
    %p97 = scmp.eq.s32.totalorder %s15, 0
    %p98 = por %p96, %p97
    %s99 = ssub.s32 %s16, %s28
    %s100 = ssub.s32 %s17, %s24
    %s101 = sor.u32 %s99, %s100
    %p102 = scmp.eq.s32.totalorder %s101, 0
    %s104 = sadd.s32 %s103, 1
    %s105 = scalar_select %p102, %s103, %s104
    %p108 = pneg %p102
    %p109 = scmp.eq.s32.totalorder %s9, 1
    %p110 = por %p108, %p109
    %p111 = scmp.ne.s32.totalorder %s103, %s106
    %p112 = scmp.eq.s32.totalorder %s9, 0
    %p113 = por %p111, %p112
    %p114 = scmp.ne.s32.totalorder %s103, %s106
    %p115 = scmp.eq.s32.totalorder %s14, 1
    %p116 = por %p114, %p115
    %p117 = scmp.ne.s32.totalorder %s106, %s107
    %p118 = scmp.eq.s32.totalorder %s14, 0
    %p119 = por %p117, %p118
    %p120 = scmp.ne.s32.totalorder %s106, %s107
    %p121 = scmp.eq.s32.totalorder %s15, 1
    %p122 = por %p120, %p121
    %p124 = scmp.ne.s32.totalorder %s107, %s123
    %p125 = scmp.eq.s32.totalorder %s15, 0
    %p126 = por %p124, %p125
    %p127 = scmp.le.s32.totalorder 1, %s9
    %p128 = scmp.lt.s32.totalorder %s9, 3
    %p129 = pnand %p127, %p128
    %p130 = pneg %p129
    // Predicated region
    $region9: #{rfdn_forward.55} parent=5 // pred_check
      _
    $region10: #{rfdn_forward.55} parent=5 // pred_check_branch
      %132 = sbr.rel (%p129) target = $region12
    $region11: #{rfdn_forward.55} parent=5 // pred_region
      %s133 = ssub.s32 %s9, 1
      // Predicated region
      $region13: #{rfdn_forward.55} parent=11 // pred_check
        %p134 = pneg %p70
      $region14: #{rfdn_forward.55} parent=11 // pred_check_branch
        %136 = sbr.rel (%p134) target = $region16
      $region15: #{rfdn_forward.55} parent=11 // pred_region
        _
      $region16: #{rfdn_forward.55} parent=11 // pred_fallthru
        _
      // Predicated region
      $region17: #{rfdn_forward.55} parent=11 // pred_check
        %p137 = pneg %p91
      $region18: #{rfdn_forward.55} parent=11 // pred_check_branch
        %139 = sbr.rel (%p137) target = $region20
      $region19: #{rfdn_forward.55} parent=11 // pred_region
        _
      $region20: #{rfdn_forward.55} parent=11 // pred_fallthru
        _
    $region12: #{rfdn_forward.55} parent=5 // pred_fallthru
      _
    %p140 = scmp.lt.s32.totalorder %s9, 2
    // Predicated region
    $region21: #{rfdn_forward.55} parent=5 // pred_check
      %p141 = pneg %p140
    $region22: #{rfdn_forward.55} parent=5 // pred_check_branch
      %143 = sbr.rel (%p141) target = $region24
    $region23: #{rfdn_forward.55} parent=5 // pred_region
      // Predicated region
      $region25: #{rfdn_forward.55} parent=23 // pred_check
        %p144 = pneg %p43
      $region26: #{rfdn_forward.55} parent=23 // pred_check_branch
        %146 = sbr.rel (%p144) target = $region28
      $region27: #{rfdn_forward.55} parent=23 // pred_region
        %s147 = smul.u32 2, %s17
        %p148 = scmp.lt.s32.totalorder %s16, 1
        %s149 = scalar_select %p148, %s16, 1
        %p150 = scmp.lt.s32.totalorder %s147, 1
        %s151 = scalar_select %p150, %s147, 1
        %s152 = smul.addr %s149, 18
        %s153 = sadd.s32 %s151, %s152
        %s154 = smul.addr %s153, 4
        %s155 = scalar_lea.vmem %s0, %s154
        %s156 = smul.u32 2, %s17
      $region28: #{rfdn_forward.55} parent=23 // pred_fallthru
        _
    $region24: #{rfdn_forward.55} parent=5 // pred_fallthru
      _
    %p157 = scmp.le.s32.totalorder 1, %s9
    %p158 = scmp.lt.s32.totalorder %s9, 3
    %p159 = pnand %p157, %p158
    %p160 = pneg %p159
    // Predicated region
    $region29: #{rfdn_forward.55} parent=5 // pred_check
      _
    $region30: #{rfdn_forward.55} parent=5 // pred_check_branch
      %162 = sbr.rel (%p159) target = $region32
    $region31: #{rfdn_forward.55} parent=5 // pred_region
      %s163 = ssub.s32 %s9, 1
      %s164 = smul.u32 2, %s19
      %p165 = scmp.lt.s32.totalorder %s18, 1
      %s166 = scalar_select %p165, %s18, 1
      %p167 = scmp.lt.s32.totalorder %s164, 1
      %s168 = scalar_select %p167, %s164, 1
      %s169 = smul.addr %s166, 18
      %s170 = sadd.s32 %s168, %s169
      %s171 = smul.addr %s170, 4
      %s172 = scalar_lea.vmem %s0, %s171
      %p173 = pneg %p49
      %p174 = pneg %p46
      %p175 = pneg %p70
      %p176 = pneg %p67
      %p177 = pneg %p91
      %p178 = pneg %p88
      %p179 = pneg %p119
      %p180 = pneg %p116
      %s181 = smul.u32 2, %s19
      %p182 = scmp.lt.s32.totalorder %s18, 1
      %s183 = scalar_select %p182, %s18, 1
      %p184 = scmp.lt.s32.totalorder %s181, 1
      %s185 = scalar_select %p184, %s181, 1
      %s186 = smul.addr %s183, 2
      %s187 = sadd.s32 %s185, %s186
      %s188 = smul.addr %s187, 4
      %s189 = scalar_lea.vmem %s3, %s188
      %s190 = smul.u32 2, %s19
      %p191 = scmp.lt.s32.totalorder %s18, 1
      %s192 = scalar_select %p191, %s18, 1
      %p193 = scmp.lt.s32.totalorder %s190, 1
      %s194 = scalar_select %p193, %s190, 1
      %s195 = smul.addr %s192, 18
      %s196 = sadd.s32 %s194, %s195
      %s197 = smul.addr %s196, 4
      %s198 = scalar_lea.vmem %s0, %s197
      %s199 = smul.u32 2, %s19
      %s200 = smul.u32 2, %s19
      %p201 = scmp.lt.s32.totalorder %s18, 1
      %s202 = scalar_select %p201, %s18, 1
      %p203 = scmp.lt.s32.totalorder %s200, 1
      %s204 = scalar_select %p203, %s200, 1
      %s205 = smul.addr %s202, 2
      %s206 = sadd.s32 %s204, %s205
      %s207 = smul.addr %s206, 4
      %s208 = scalar_lea.vmem %s3, %s207
      %s209 = smul.u32 2, %s19
      %v211 = vld [vmem:[%s1] sm:$0x3]
      %v212 = vld [vmem:[%s198] sm:$0xff]
      %v213 = vld [vmem:[%s198 + $0x8] sm:$0xff]
      %v214 = vld [vmem:[%s198 + $0x10] sm:$0xff]
      %v215 = vld [vmem:[%s198 + $0x18] sm:$0xff]
      %v216 = vld [vmem:[%s198 + $0x20] sm:$0xff]
      %v217 = vld [vmem:[%s198 + $0x28] sm:$0xff]
      %v218 = vld [vmem:[%s198 + $0x30] sm:$0xff]
      %v219 = vld [vmem:[%s198 + $0x38] sm:$0xff]
      %v220 = vld [vmem:[%s198 + $0x40] sm:$0xff]
      %v221 = vld [vmem:[%s2] sm:$0xf]
      %223 = vset.pattern.permute.xlu0 0
      %224 = vperm.xlu0 %223, %v221
      %v225 = vpop.permute.xlu0 %224
      %v236 = vunpack.c.l.b16 %v212
      %v237 = vunpack.c.h.b16 %v212
      %v238 = vunpack.c.l.b16 %v213
      %v239 = vunpack.c.h.b16 %v213
      %v240 = vunpack.c.l.b16 %v214
      %v241 = vunpack.c.h.b16 %v214
      %v242 = vunpack.c.l.b16 %v215
      %v243 = vunpack.c.h.b16 %v215
      %v244 = vunpack.c.l.b16 %v216
      %v245 = vunpack.c.h.b16 %v216
      %v246 = vunpack.c.l.b16 %v217
      %v247 = vunpack.c.h.b16 %v217
      %v248 = vunpack.c.l.b16 %v218
      %v249 = vunpack.c.h.b16 %v218
      %v250 = vunpack.c.l.b16 %v219
      %v251 = vunpack.c.h.b16 %v219
      %v252 = vunpack.c.l.b16 %v220
      %v253 = vunpack.c.h.b16 %v220
      %v254 = vpack.c.b16 %v238, %v236
      %v255 = vpack.c.b16 %v239, %v237
      %v256 = vpack.c.b16 %v242, %v240
      %v257 = vpack.c.b16 %v243, %v241
      %v258 = vpack.c.b16 %v246, %v244
      %v259 = vpack.c.b16 %v247, %v245
      %v260 = vpack.c.b16 %v250, %v248
      %v261 = vpack.c.b16 %v251, %v249
      %v262 = vpack.c.b16 %v252, %v252
      %v263 = vpack.c.b16 %v253, %v253
      %vm272 = vcmask 588800
      %v274 = vsel %vm272, %v211, 0
      %vm276 = vcmask 1043456
      %v278 = vsel %vm276, %v262, 0
      %v281 = vsel %vm276, %v263, 0
      %283 = vmatpush.bf16.msra.mxu0 0
      %284 = vmatpush.bf16.msra.mxu0 0
      %285 = vmatpush.bf16.msra.mxu0 0
      %286 = vmatpush.bf16.msra.mxu0 %v278
      %287 = vmatpush.bf16.msra.mxu0 %v260
      %288 = vmatpush.bf16.msra.mxu0 %v258
      %289 = vmatpush.bf16.msra.mxu0 %v256
      %290 = vmatpush.bf16.msra.mxu0 %v254
      %291 = vmatmul.bf16.gmra.mxu0 %v274
      %v292 = vpop.f32.mrf.mxu0
      %v293 = vadd.f32 %v225, %v292
      %v294 = vpop.f32.mrf.mxu0
      %295 = vdwg.mxu0
      %296 = vmatpush.bf16.msra.mxu0 0
      %297 = vmatpush.bf16.msra.mxu0 0
      %298 = vmatpush.bf16.msra.mxu0 0
      %299 = vmatpush.bf16.msra.mxu0 %v281
      %300 = vmatpush.bf16.msra.mxu0 %v261
      %301 = vmatpush.bf16.msra.mxu0 %v259
      %302 = vmatpush.bf16.msra.mxu0 %v257
      %303 = vmatpush.bf16.msra.mxu0 %v255
      %304 = vmatmul.bf16.gmra.mxu0 %v274
      %v305 = vpop.f32.mrf.mxu0
      %v306 = vadd.f32 %v225, %v305
      %v307 = vpop.f32.mrf.mxu0
      %308 = vdwg.mxu0
      %vm309 = vcmp.ge.f32.partialorder %v293, 0.0
      %vm310 = vcmp.ge.f32.partialorder %v306, 0.0
      %v311 = vmul.f32 %v293, 0.05
      %v312 = vmul.f32 %v306, 0.05
      %v313 = vsel %vm309, %v293, %v311
      %v314 = vsel %vm310, %v306, %v312
      %v317 = vrot.slane %v314, 4
      %v318 = vsel %vm276, %v313, %v317
      %320 = vst [vmem:[%s208] sm:$0xff] %v318
      %s321 = smul.u32 2, %s19
      %p322 = scmp.lt.s32.totalorder %s18, 1
      %s323 = scalar_select %p322, %s18, 1
      %p324 = scmp.lt.s32.totalorder %s321, 1
      %s325 = scalar_select %p324, %s321, 1
      %s326 = smul.addr %s323, 2
      %s327 = sadd.s32 %s325, %s326
      %s328 = smul.addr %s327, 4
      %s329 = scalar_lea.vmem %s3, %s328
      // Predicated region
      $region33: #{rfdn_forward.55} parent=31 // pred_check
        %p330 = pneg %p116
      $region34: #{rfdn_forward.55} parent=31 // pred_check_branch
        %332 = sbr.rel (%p330) target = $region36
      $region35: #{rfdn_forward.55} parent=31 // pred_region
        %s333 = smul.u32 2, %s19
      $region36: #{rfdn_forward.55} parent=31 // pred_fallthru
        _
    $region32: #{rfdn_forward.55} parent=5 // pred_fallthru
      _
    %p334 = scmp.le.s32.totalorder 2, %s9
    // Predicated region
    $region37: #{rfdn_forward.55} parent=5 // pred_check
      %p335 = pneg %p334
    $region38: #{rfdn_forward.55} parent=5 // pred_check_branch
      %337 = sbr.rel (%p335) target = $region40
    $region39: #{rfdn_forward.55} parent=5 // pred_region
      %s338 = ssub.s32 %s9, 2
      // Predicated region
      $region41: #{rfdn_forward.55} parent=39 // pred_check
        %p339 = pneg %p122
      $region42: #{rfdn_forward.55} parent=39 // pred_check_branch
        %341 = sbr.rel (%p339) target = $region44
      $region43: #{rfdn_forward.55} parent=39 // pred_region
        %s342 = smul.u32 2, %s21
        %p343 = scmp.lt.s32.totalorder %s20, 1
        %s344 = scalar_select %p343, %s20, 1
        %p345 = scmp.lt.s32.totalorder %s342, 1
        %s346 = scalar_select %p345, %s342, 1
        %s347 = smul.addr %s344, 2
        %s348 = sadd.s32 %s346, %s347
        %s349 = smul.addr %s348, 4
        %s350 = scalar_lea.vmem %s3, %s349
      $region44: #{rfdn_forward.55} parent=39 // pred_fallthru
        _
    $region40: #{rfdn_forward.55} parent=5 // pred_fallthru
      _
  $region6: #{rfdn_forward.55} parent=0 // loop_footer
    %s13 = sadd.s32 1, %s9
  $region7: #{rfdn_forward.55} parent=0 // loop_footer_branch
    %8 = sbr.rel target = $region3
  $region8: #{rfdn_forward.55} parent=0 // loop_exit
    _

// kernel: rfdn_forward.58
$region0: #{rfdn_forward.58}
  #allocation0 [shape = 'u32[]', space=smem, size = 0x4, offset = 0x4, fixed_abs, tag = 'smem constant byte address 0x4 - core index']
  #allocation1 [shape = 'u32[72,128]{1,0:T(1,128)}', space=vmem, size = 0x9000, scoped, tag = 'internal scratch']
  %s0 = inlined_call_operand.vmem [shape: bf16[2,18,128], index: 0, kind: input, shape index: {}]
  %s1 = inlined_call_operand.vmem [shape: bf16[2,18], index: 1, kind: input, shape index: {}]
  %s2 = inlined_call_operand.vmem [shape: f32[2,1], index: 2, kind: input, shape index: {}]
  %s3 = inlined_call_operand.vmem [shape: f32[2,2,128], index: 3, kind: output, shape index: {}]
  %s4 = sld [smem:[#allocation0]]
  $region45: #{rfdn_forward.58} parent=0
    _
  %s6 = ssub.s32 1, %s4
  %s7 = scalar_select 0, %s6, %s4
  loop: start=0, step=1, limit=4
  $region2: #{rfdn_forward.58} parent=0 // loop_pre_header
    _
  $region3: #{rfdn_forward.58} parent=0 // loop_header
    %s9 = sphi 0, %s13
    %p10 = scmp.ge.s32.totalorder %s9, 4
    %s16 = sphi 0, %s28
    %s17 = sphi 0, %s24
    %s18 = sphi 0, %s16
    %s19 = sphi 0, %s17
    %s20 = sphi 0, %s18
    %s21 = sphi 0, %s19
    %s33 = sphi 0, %s35
    %s36 = sphi 0, %s33
    %s37 = sphi 0, %s36
    %s53 = sphi 0, %s37
    %s57 = sphi 0, %s57
    %s59 = sphi 0, %s57
    %s60 = sphi 0, %s59
    %s74 = sphi 0, %s60
    %s78 = sphi 0, %s78
    %s80 = sphi 0, %s78
    %s81 = sphi 0, %s80
    %s95 = sphi 0, %s81
    %s103 = sphi 0, %s105
    %s106 = sphi 0, %s103
    %s107 = sphi 0, %s106
    %s123 = sphi 0, %s107
  $region4: #{rfdn_forward.58} parent=0 // loop_header_branch
    %12 = sbr.rel (%p10) target = $region8
  $region5: #{rfdn_forward.58} parent=0 // loop_body
    %s14 = ssub.s32 %s9, 1
    %s15 = ssub.s32 %s9, 2
    %s22 = sadd.s32 1, %s17
    %p23 = scmp.ge.s32.totalorder %s22, 1
    %s24 = scalar_select %p23, 0, %s22
    %s25 = sadd.s32 1, %s16
    %s26 = scalar_select %p23, %s25, %s16
    %p27 = scmp.ge.s32.totalorder %s26, 2
    %s28 = scalar_select %p27, 0, %s26
    %s29 = ssub.s32 %s16, %s28
    %s30 = ssub.s32 %s17, %s24
    %s31 = sor.u32 %s29, %s30
    %p32 = scmp.eq.s32.totalorder %s31, 0
    %s34 = sadd.s32 %s33, 1
    %s35 = scalar_select %p32, %s33, %s34
    %p38 = pneg %p32
    %p39 = scmp.eq.s32.totalorder %s9, 1
    %p40 = por %p38, %p39
    %p41 = scmp.ne.s32.totalorder %s33, %s36
    %p42 = scmp.eq.s32.totalorder %s9, 0
    %p43 = por %p41, %p42
    %p44 = scmp.ne.s32.totalorder %s33, %s36
    %p45 = scmp.eq.s32.totalorder %s14, 1
    %p46 = por %p44, %p45
    %p47 = scmp.ne.s32.totalorder %s36, %s37
    %p48 = scmp.eq.s32.totalorder %s14, 0
    %p49 = por %p47, %p48
    %p50 = scmp.ne.s32.totalorder %s36, %s37
    %p51 = scmp.eq.s32.totalorder %s15, 1
    %p52 = por %p50, %p51
    %p54 = scmp.ne.s32.totalorder %s37, %s53
    %p55 = scmp.eq.s32.totalorder %s15, 0
    %p56 = por %p54, %p55
    %s58 = sadd.s32 %s57, 1
    %p61 = scmp.eq.s32.totalorder %s9, 1
    %p62 = scmp.ne.s32.totalorder %s57, %s59
    %p63 = scmp.eq.s32.totalorder %s9, 0
    %p64 = por %p62, %p63
    %p65 = scmp.ne.s32.totalorder %s57, %s59
    %p66 = scmp.eq.s32.totalorder %s14, 1
    %p67 = por %p65, %p66
    %p68 = scmp.ne.s32.totalorder %s59, %s60
    %p69 = scmp.eq.s32.totalorder %s14, 0
    %p70 = por %p68, %p69
    %p71 = scmp.ne.s32.totalorder %s59, %s60
    %p72 = scmp.eq.s32.totalorder %s15, 1
    %p73 = por %p71, %p72
    %p75 = scmp.ne.s32.totalorder %s60, %s74
    %p76 = scmp.eq.s32.totalorder %s15, 0
    %p77 = por %p75, %p76
    %s79 = sadd.s32 %s78, 1
    %p82 = scmp.eq.s32.totalorder %s9, 1
    %p83 = scmp.ne.s32.totalorder %s78, %s80
    %p84 = scmp.eq.s32.totalorder %s9, 0
    %p85 = por %p83, %p84
    %p86 = scmp.ne.s32.totalorder %s78, %s80
    %p87 = scmp.eq.s32.totalorder %s14, 1
    %p88 = por %p86, %p87
    %p89 = scmp.ne.s32.totalorder %s80, %s81
    %p90 = scmp.eq.s32.totalorder %s14, 0
    %p91 = por %p89, %p90
    %p92 = scmp.ne.s32.totalorder %s80, %s81
    %p93 = scmp.eq.s32.totalorder %s15, 1
    %p94 = por %p92, %p93
    %p96 = scmp.ne.s32.totalorder %s81, %s95
    %p97 = scmp.eq.s32.totalorder %s15, 0
    %p98 = por %p96, %p97
    %s99 = ssub.s32 %s16, %s28
    %s100 = ssub.s32 %s17, %s24
    %s101 = sor.u32 %s99, %s100
    %p102 = scmp.eq.s32.totalorder %s101, 0
    %s104 = sadd.s32 %s103, 1
    %s105 = scalar_select %p102, %s103, %s104
    %p108 = pneg %p102
    %p109 = scmp.eq.s32.totalorder %s9, 1
    %p110 = por %p108, %p109
    %p111 = scmp.ne.s32.totalorder %s103, %s106
    %p112 = scmp.eq.s32.totalorder %s9, 0
    %p113 = por %p111, %p112
    %p114 = scmp.ne.s32.totalorder %s103, %s106
    %p115 = scmp.eq.s32.totalorder %s14, 1
    %p116 = por %p114, %p115
    %p117 = scmp.ne.s32.totalorder %s106, %s107
    %p118 = scmp.eq.s32.totalorder %s14, 0
    %p119 = por %p117, %p118
    %p120 = scmp.ne.s32.totalorder %s106, %s107
    %p121 = scmp.eq.s32.totalorder %s15, 1
    %p122 = por %p120, %p121
    %p124 = scmp.ne.s32.totalorder %s107, %s123
    %p125 = scmp.eq.s32.totalorder %s15, 0
    %p126 = por %p124, %p125
    %p127 = scmp.le.s32.totalorder 1, %s9
    %p128 = scmp.lt.s32.totalorder %s9, 3
    %p129 = pnand %p127, %p128
    %p130 = pneg %p129
    // Predicated region
    $region9: #{rfdn_forward.58} parent=5 // pred_check
      _
    $region10: #{rfdn_forward.58} parent=5 // pred_check_branch
      %132 = sbr.rel (%p129) target = $region12
    $region11: #{rfdn_forward.58} parent=5 // pred_region
      %s133 = ssub.s32 %s9, 1
      // Predicated region
      $region13: #{rfdn_forward.58} parent=11 // pred_check
        %p134 = pneg %p70
      $region14: #{rfdn_forward.58} parent=11 // pred_check_branch
        %136 = sbr.rel (%p134) target = $region16
      $region15: #{rfdn_forward.58} parent=11 // pred_region
        _
      $region16: #{rfdn_forward.58} parent=11 // pred_fallthru
        _
      // Predicated region
      $region17: #{rfdn_forward.58} parent=11 // pred_check
        %p137 = pneg %p91
      $region18: #{rfdn_forward.58} parent=11 // pred_check_branch
        %139 = sbr.rel (%p137) target = $region20
      $region19: #{rfdn_forward.58} parent=11 // pred_region
        _
      $region20: #{rfdn_forward.58} parent=11 // pred_fallthru
        _
    $region12: #{rfdn_forward.58} parent=5 // pred_fallthru
      _
    %p140 = scmp.lt.s32.totalorder %s9, 2
    // Predicated region
    $region21: #{rfdn_forward.58} parent=5 // pred_check
      %p141 = pneg %p140
    $region22: #{rfdn_forward.58} parent=5 // pred_check_branch
      %143 = sbr.rel (%p141) target = $region24
    $region23: #{rfdn_forward.58} parent=5 // pred_region
      // Predicated region
      $region25: #{rfdn_forward.58} parent=23 // pred_check
        %p144 = pneg %p43
      $region26: #{rfdn_forward.58} parent=23 // pred_check_branch
        %146 = sbr.rel (%p144) target = $region28
      $region27: #{rfdn_forward.58} parent=23 // pred_region
        %p147 = scmp.lt.s32.totalorder %s16, 1
        %s148 = scalar_select %p147, %s16, 1
        %p149 = scmp.lt.s32.totalorder %s17, 0
        %s150 = scalar_select %p149, %s17, 0
        %s151 = smul.addr %s148, 3
        %s152 = sadd.s32 %s150, %s151
        %s153 = smul.addr %s152, 4
        %s154 = scalar_lea.vmem %s0, %s153
      $region28: #{rfdn_forward.58} parent=23 // pred_fallthru
        _
    $region24: #{rfdn_forward.58} parent=5 // pred_fallthru
      _
    %p155 = scmp.le.s32.totalorder 1, %s9
    %p156 = scmp.lt.s32.totalorder %s9, 3
    %p157 = pnand %p155, %p156
    %p158 = pneg %p157
    // Predicated region
    $region29: #{rfdn_forward.58} parent=5 // pred_check
      _
    $region30: #{rfdn_forward.58} parent=5 // pred_check_branch
      %160 = sbr.rel (%p157) target = $region32
    $region31: #{rfdn_forward.58} parent=5 // pred_region
      %s161 = ssub.s32 %s9, 1
      %p162 = scmp.lt.s32.totalorder %s18, 1
      %s163 = scalar_select %p162, %s18, 1
      %p164 = scmp.lt.s32.totalorder %s19, 0
      %s165 = scalar_select %p164, %s19, 0
      %s166 = smul.addr %s163, 3
      %s167 = sadd.s32 %s165, %s166
      %s168 = smul.addr %s167, 4
      %s169 = scalar_lea.vmem %s0, %s168
      %p170 = pneg %p49
      %p171 = pneg %p46
      %p172 = pneg %p70
      %p173 = pneg %p67
      %p174 = pneg %p91
      %p175 = pneg %p88
      %p176 = pneg %p119
      %p177 = pneg %p116
      %p178 = scmp.lt.s32.totalorder %s18, 1
      %s179 = scalar_select %p178, %s18, 1
      %p180 = scmp.lt.s32.totalorder %s19, 0
      %s181 = scalar_select %p180, %s19, 0
      %s182 = sadd.s32 %s181, %s179
      %s183 = smul.addr %s182, 2
      %s184 = scalar_lea.vmem %s3, %s183
      %p185 = scmp.lt.s32.totalorder %s18, 1
      %s186 = scalar_select %p185, %s18, 1
      %p187 = scmp.lt.s32.totalorder %s19, 0
      %s188 = scalar_select %p187, %s19, 0
      %s189 = smul.addr %s186, 3
      %s190 = sadd.s32 %s188, %s189
      %s191 = smul.addr %s190, 4
      %s192 = scalar_lea.vmem %s0, %s191
      %p193 = scmp.lt.s32.totalorder %s18, 1
      %s194 = scalar_select %p193, %s18, 1
      %p195 = scmp.lt.s32.totalorder %s19, 0
      %s196 = scalar_select %p195, %s19, 0
      %s197 = sadd.s32 %s196, %s194
      %s198 = smul.addr %s197, 2
      %s199 = scalar_lea.vmem %s3, %s198
      %v201 = vld [vmem:[%s1] sm:$0x1]
      %v202 = vld [vmem:[%s192] sm:$0xf]
      %v203 = vld [vmem:[%s192 + $0x4] sm:$0xf]
      %v204 = vld [vmem:[%s192 + $0x8] sm:$0x1]
      %v205 = vld [vmem:[%s2] sm:$0x3]
      %207 = vset.pattern.permute.xlu0 0
      %208 = vperm.xlu0 %207, %v205
      %v209 = vpop.permute.xlu0 %208
      %v214 = vunpack.c.l.b16 %v202
      %v215 = vunpack.c.l.b16 %v203
      %v216 = vunpack.c.l.b16 %v204
      %v217 = vpack.c.b16 %v215, %v214
      %v218 = vpack.c.b16 %v216, %v216
      %vm220 = vcmask 146432
      %v222 = vsel %vm220, %v201, 0
      %vm224 = vcmask 1040384
      %v226 = vsel %vm224, %v218, 0
      %228 = vmatpush.bf16.msra.mxu0 0
      %229 = vmatpush.bf16.msra.mxu0 0
      %230 = vmatpush.bf16.msra.mxu0 0
      %231 = vmatpush.bf16.msra.mxu0 0
      %232 = vmatpush.bf16.msra.mxu0 0
      %233 = vmatpush.bf16.msra.mxu0 0
      %234 = vmatpush.bf16.msra.mxu0 %v226
      %235 = vmatpush.bf16.msra.mxu0 %v217
      %236 = vmatmul.bf16.gmra.mxu0 %v222
      %v237 = vpop.f32.mrf.mxu0
      %v238 = vadd.f32 %v209, %v237
      %v239 = vpop.f32.mrf.mxu0
      %240 = vdwg.mxu0
      %241 = vst [vmem:[%s199] sm:$0x3] %v238
      %p242 = scmp.lt.s32.totalorder %s18, 1
      %s243 = scalar_select %p242, %s18, 1
      %p244 = scmp.lt.s32.totalorder %s19, 0
      %s245 = scalar_select %p244, %s19, 0
      %s246 = sadd.s32 %s245, %s243
      %s247 = smul.addr %s246, 2
      %s248 = scalar_lea.vmem %s3, %s247
      // Predicated region
      $region33: #{rfdn_forward.58} parent=31 // pred_check
        %p249 = pneg %p116
      $region34: #{rfdn_forward.58} parent=31 // pred_check_branch
        %251 = sbr.rel (%p249) target = $region36
      $region35: #{rfdn_forward.58} parent=31 // pred_region
        _
      $region36: #{rfdn_forward.58} parent=31 // pred_fallthru
        _
    $region32: #{rfdn_forward.58} parent=5 // pred_fallthru
      _
    %p252 = scmp.le.s32.totalorder 2, %s9
    // Predicated region
    $region37: #{rfdn_forward.58} parent=5 // pred_check
      %p253 = pneg %p252
    $region38: #{rfdn_forward.58} parent=5 // pred_check_branch
      %255 = sbr.rel (%p253) target = $region40
    $region39: #{rfdn_forward.58} parent=5 // pred_region
      %s256 = ssub.s32 %s9, 2
      // Predicated region
      $region41: #{rfdn_forward.58} parent=39 // pred_check
        %p257 = pneg %p122
      $region42: #{rfdn_forward.58} parent=39 // pred_check_branch
        %259 = sbr.rel (%p257) target = $region44
      $region43: #{rfdn_forward.58} parent=39 // pred_region
        %p260 = scmp.lt.s32.totalorder %s20, 1
        %s261 = scalar_select %p260, %s20, 1
        %p262 = scmp.lt.s32.totalorder %s21, 0
        %s263 = scalar_select %p262, %s21, 0
        %s264 = sadd.s32 %s263, %s261
        %s265 = smul.addr %s264, 2
        %s266 = scalar_lea.vmem %s3, %s265
      $region44: #{rfdn_forward.58} parent=39 // pred_fallthru
        _
    $region40: #{rfdn_forward.58} parent=5 // pred_fallthru
      _
  $region6: #{rfdn_forward.58} parent=0 // loop_footer
    %s13 = sadd.s32 1, %s9
  $region7: #{rfdn_forward.58} parent=0 // loop_footer_branch
    %8 = sbr.rel target = $region3
  $region8: #{rfdn_forward.58} parent=0 // loop_exit
    _

// kernel: rfdn_forward.59
$region0: #{rfdn_forward.59}
  #allocation0 [shape = 'u32[]', space=smem, size = 0x4, offset = 0x4, fixed_abs, tag = 'smem constant byte address 0x4 - core index']
  #allocation1 [shape = 'u32[72,128]{1,0:T(1,128)}', space=vmem, size = 0x9000, scoped, tag = 'internal scratch']
  %s0 = inlined_call_operand.vmem [shape: bf16[2,18,128], index: 0, kind: input, shape index: {}]
  %s1 = inlined_call_operand.vmem [shape: bf16[2,18], index: 1, kind: input, shape index: {}]
  %s2 = inlined_call_operand.vmem [shape: f32[2,1], index: 2, kind: input, shape index: {}]
  %s3 = inlined_call_operand.vmem [shape: f32[2,2,128], index: 3, kind: output, shape index: {}]
  %s4 = sld [smem:[#allocation0]]
  $region45: #{rfdn_forward.59} parent=0
    _
  %s6 = ssub.s32 1, %s4
  %s7 = scalar_select 0, %s6, %s4
  loop: start=0, step=1, limit=4
  $region2: #{rfdn_forward.59} parent=0 // loop_pre_header
    _
  $region3: #{rfdn_forward.59} parent=0 // loop_header
    %s9 = sphi 0, %s13
    %p10 = scmp.ge.s32.totalorder %s9, 4
    %s16 = sphi 0, %s28
    %s17 = sphi 0, %s24
    %s18 = sphi 0, %s16
    %s19 = sphi 0, %s17
    %s20 = sphi 0, %s18
    %s21 = sphi 0, %s19
    %s33 = sphi 0, %s35
    %s36 = sphi 0, %s33
    %s37 = sphi 0, %s36
    %s53 = sphi 0, %s37
    %s57 = sphi 0, %s57
    %s59 = sphi 0, %s57
    %s60 = sphi 0, %s59
    %s74 = sphi 0, %s60
    %s78 = sphi 0, %s78
    %s80 = sphi 0, %s78
    %s81 = sphi 0, %s80
    %s95 = sphi 0, %s81
    %s103 = sphi 0, %s105
    %s106 = sphi 0, %s103
    %s107 = sphi 0, %s106
    %s123 = sphi 0, %s107
  $region4: #{rfdn_forward.59} parent=0 // loop_header_branch
    %12 = sbr.rel (%p10) target = $region8
  $region5: #{rfdn_forward.59} parent=0 // loop_body
    %s14 = ssub.s32 %s9, 1
    %s15 = ssub.s32 %s9, 2
    %s22 = sadd.s32 1, %s17
    %p23 = scmp.ge.s32.totalorder %s22, 1
    %s24 = scalar_select %p23, 0, %s22
    %s25 = sadd.s32 1, %s16
    %s26 = scalar_select %p23, %s25, %s16
    %p27 = scmp.ge.s32.totalorder %s26, 2
    %s28 = scalar_select %p27, 0, %s26
    %s29 = ssub.s32 %s16, %s28
    %s30 = ssub.s32 %s17, %s24
    %s31 = sor.u32 %s29, %s30
    %p32 = scmp.eq.s32.totalorder %s31, 0
    %s34 = sadd.s32 %s33, 1
    %s35 = scalar_select %p32, %s33, %s34
    %p38 = pneg %p32
    %p39 = scmp.eq.s32.totalorder %s9, 1
    %p40 = por %p38, %p39
    %p41 = scmp.ne.s32.totalorder %s33, %s36
    %p42 = scmp.eq.s32.totalorder %s9, 0
    %p43 = por %p41, %p42
    %p44 = scmp.ne.s32.totalorder %s33, %s36
    %p45 = scmp.eq.s32.totalorder %s14, 1
    %p46 = por %p44, %p45
    %p47 = scmp.ne.s32.totalorder %s36, %s37
    %p48 = scmp.eq.s32.totalorder %s14, 0
    %p49 = por %p47, %p48
    %p50 = scmp.ne.s32.totalorder %s36, %s37
    %p51 = scmp.eq.s32.totalorder %s15, 1
    %p52 = por %p50, %p51
    %p54 = scmp.ne.s32.totalorder %s37, %s53
    %p55 = scmp.eq.s32.totalorder %s15, 0
    %p56 = por %p54, %p55
    %s58 = sadd.s32 %s57, 1
    %p61 = scmp.eq.s32.totalorder %s9, 1
    %p62 = scmp.ne.s32.totalorder %s57, %s59
    %p63 = scmp.eq.s32.totalorder %s9, 0
    %p64 = por %p62, %p63
    %p65 = scmp.ne.s32.totalorder %s57, %s59
    %p66 = scmp.eq.s32.totalorder %s14, 1
    %p67 = por %p65, %p66
    %p68 = scmp.ne.s32.totalorder %s59, %s60
    %p69 = scmp.eq.s32.totalorder %s14, 0
    %p70 = por %p68, %p69
    %p71 = scmp.ne.s32.totalorder %s59, %s60
    %p72 = scmp.eq.s32.totalorder %s15, 1
    %p73 = por %p71, %p72
    %p75 = scmp.ne.s32.totalorder %s60, %s74
    %p76 = scmp.eq.s32.totalorder %s15, 0
    %p77 = por %p75, %p76
    %s79 = sadd.s32 %s78, 1
    %p82 = scmp.eq.s32.totalorder %s9, 1
    %p83 = scmp.ne.s32.totalorder %s78, %s80
    %p84 = scmp.eq.s32.totalorder %s9, 0
    %p85 = por %p83, %p84
    %p86 = scmp.ne.s32.totalorder %s78, %s80
    %p87 = scmp.eq.s32.totalorder %s14, 1
    %p88 = por %p86, %p87
    %p89 = scmp.ne.s32.totalorder %s80, %s81
    %p90 = scmp.eq.s32.totalorder %s14, 0
    %p91 = por %p89, %p90
    %p92 = scmp.ne.s32.totalorder %s80, %s81
    %p93 = scmp.eq.s32.totalorder %s15, 1
    %p94 = por %p92, %p93
    %p96 = scmp.ne.s32.totalorder %s81, %s95
    %p97 = scmp.eq.s32.totalorder %s15, 0
    %p98 = por %p96, %p97
    %s99 = ssub.s32 %s16, %s28
    %s100 = ssub.s32 %s17, %s24
    %s101 = sor.u32 %s99, %s100
    %p102 = scmp.eq.s32.totalorder %s101, 0
    %s104 = sadd.s32 %s103, 1
    %s105 = scalar_select %p102, %s103, %s104
    %p108 = pneg %p102
    %p109 = scmp.eq.s32.totalorder %s9, 1
    %p110 = por %p108, %p109
    %p111 = scmp.ne.s32.totalorder %s103, %s106
    %p112 = scmp.eq.s32.totalorder %s9, 0
    %p113 = por %p111, %p112
    %p114 = scmp.ne.s32.totalorder %s103, %s106
    %p115 = scmp.eq.s32.totalorder %s14, 1
    %p116 = por %p114, %p115
    %p117 = scmp.ne.s32.totalorder %s106, %s107
    %p118 = scmp.eq.s32.totalorder %s14, 0
    %p119 = por %p117, %p118
    %p120 = scmp.ne.s32.totalorder %s106, %s107
    %p121 = scmp.eq.s32.totalorder %s15, 1
    %p122 = por %p120, %p121
    %p124 = scmp.ne.s32.totalorder %s107, %s123
    %p125 = scmp.eq.s32.totalorder %s15, 0
    %p126 = por %p124, %p125
    %p127 = scmp.le.s32.totalorder 1, %s9
    %p128 = scmp.lt.s32.totalorder %s9, 3
    %p129 = pnand %p127, %p128
    %p130 = pneg %p129
    // Predicated region
    $region9: #{rfdn_forward.59} parent=5 // pred_check
      _
    $region10: #{rfdn_forward.59} parent=5 // pred_check_branch
      %132 = sbr.rel (%p129) target = $region12
    $region11: #{rfdn_forward.59} parent=5 // pred_region
      %s133 = ssub.s32 %s9, 1
      // Predicated region
      $region13: #{rfdn_forward.59} parent=11 // pred_check
        %p134 = pneg %p70
      $region14: #{rfdn_forward.59} parent=11 // pred_check_branch
        %136 = sbr.rel (%p134) target = $region16
      $region15: #{rfdn_forward.59} parent=11 // pred_region
        _
      $region16: #{rfdn_forward.59} parent=11 // pred_fallthru
        _
      // Predicated region
      $region17: #{rfdn_forward.59} parent=11 // pred_check
        %p137 = pneg %p91
      $region18: #{rfdn_forward.59} parent=11 // pred_check_branch
        %139 = sbr.rel (%p137) target = $region20
      $region19: #{rfdn_forward.59} parent=11 // pred_region
        _
      $region20: #{rfdn_forward.59} parent=11 // pred_fallthru
        _
    $region12: #{rfdn_forward.59} parent=5 // pred_fallthru
      _
    %p140 = scmp.lt.s32.totalorder %s9, 2
    // Predicated region
    $region21: #{rfdn_forward.59} parent=5 // pred_check
      %p141 = pneg %p140
    $region22: #{rfdn_forward.59} parent=5 // pred_check_branch
      %143 = sbr.rel (%p141) target = $region24
    $region23: #{rfdn_forward.59} parent=5 // pred_region
      // Predicated region
      $region25: #{rfdn_forward.59} parent=23 // pred_check
        %p144 = pneg %p43
      $region26: #{rfdn_forward.59} parent=23 // pred_check_branch
        %146 = sbr.rel (%p144) target = $region28
      $region27: #{rfdn_forward.59} parent=23 // pred_region
        %p147 = scmp.lt.s32.totalorder %s16, 1
        %s148 = scalar_select %p147, %s16, 1
        %p149 = scmp.lt.s32.totalorder %s17, 0
        %s150 = scalar_select %p149, %s17, 0
        %s151 = smul.addr %s148, 3
        %s152 = sadd.s32 %s150, %s151
        %s153 = smul.addr %s152, 4
        %s154 = scalar_lea.vmem %s0, %s153
      $region28: #{rfdn_forward.59} parent=23 // pred_fallthru
        _
    $region24: #{rfdn_forward.59} parent=5 // pred_fallthru
      _
    %p155 = scmp.le.s32.totalorder 1, %s9
    %p156 = scmp.lt.s32.totalorder %s9, 3
    %p157 = pnand %p155, %p156
    %p158 = pneg %p157
    // Predicated region
    $region29: #{rfdn_forward.59} parent=5 // pred_check
      _
    $region30: #{rfdn_forward.59} parent=5 // pred_check_branch
      %160 = sbr.rel (%p157) target = $region32
    $region31: #{rfdn_forward.59} parent=5 // pred_region
      %s161 = ssub.s32 %s9, 1
      %p162 = scmp.lt.s32.totalorder %s18, 1
      %s163 = scalar_select %p162, %s18, 1
      %p164 = scmp.lt.s32.totalorder %s19, 0
      %s165 = scalar_select %p164, %s19, 0
      %s166 = smul.addr %s163, 3
      %s167 = sadd.s32 %s165, %s166
      %s168 = smul.addr %s167, 4
      %s169 = scalar_lea.vmem %s0, %s168
      %p170 = pneg %p49
      %p171 = pneg %p46
      %p172 = pneg %p70
      %p173 = pneg %p67
      %p174 = pneg %p91
      %p175 = pneg %p88
      %p176 = pneg %p119
      %p177 = pneg %p116
      %p178 = scmp.lt.s32.totalorder %s18, 1
      %s179 = scalar_select %p178, %s18, 1
      %p180 = scmp.lt.s32.totalorder %s19, 0
      %s181 = scalar_select %p180, %s19, 0
      %s182 = sadd.s32 %s181, %s179
      %s183 = smul.addr %s182, 2
      %s184 = scalar_lea.vmem %s3, %s183
      %p185 = scmp.lt.s32.totalorder %s18, 1
      %s186 = scalar_select %p185, %s18, 1
      %p187 = scmp.lt.s32.totalorder %s19, 0
      %s188 = scalar_select %p187, %s19, 0
      %s189 = smul.addr %s186, 3
      %s190 = sadd.s32 %s188, %s189
      %s191 = smul.addr %s190, 4
      %s192 = scalar_lea.vmem %s0, %s191
      %p193 = scmp.lt.s32.totalorder %s18, 1
      %s194 = scalar_select %p193, %s18, 1
      %p195 = scmp.lt.s32.totalorder %s19, 0
      %s196 = scalar_select %p195, %s19, 0
      %s197 = sadd.s32 %s196, %s194
      %s198 = smul.addr %s197, 2
      %s199 = scalar_lea.vmem %s3, %s198
      %v201 = vld [vmem:[%s1] sm:$0x1]
      %v202 = vld [vmem:[%s192] sm:$0xf]
      %v203 = vld [vmem:[%s192 + $0x4] sm:$0xf]
      %v204 = vld [vmem:[%s192 + $0x8] sm:$0x1]
      %v205 = vld [vmem:[%s2] sm:$0x3]
      %207 = vset.pattern.permute.xlu0 0
      %208 = vperm.xlu0 %207, %v205
      %v209 = vpop.permute.xlu0 %208
      %v214 = vunpack.c.l.b16 %v202
      %v215 = vunpack.c.l.b16 %v203
      %v216 = vunpack.c.l.b16 %v204
      %v217 = vpack.c.b16 %v215, %v214
      %v218 = vpack.c.b16 %v216, %v216
      %vm220 = vcmask 146432
      %v222 = vsel %vm220, %v201, 0
      %vm224 = vcmask 1040384
      %v226 = vsel %vm224, %v218, 0
      %228 = vmatpush.bf16.msra.mxu0 0
      %229 = vmatpush.bf16.msra.mxu0 0
      %230 = vmatpush.bf16.msra.mxu0 0
      %231 = vmatpush.bf16.msra.mxu0 0
      %232 = vmatpush.bf16.msra.mxu0 0
      %233 = vmatpush.bf16.msra.mxu0 0
      %234 = vmatpush.bf16.msra.mxu0 %v226
      %235 = vmatpush.bf16.msra.mxu0 %v217
      %236 = vmatmul.bf16.gmra.mxu0 %v222
      %v237 = vpop.f32.mrf.mxu0
      %v238 = vadd.f32 %v209, %v237
      %v239 = vpop.f32.mrf.mxu0
      %240 = vdwg.mxu0
      %v241 = vmax.f32 %v238, 0.0
      %242 = vst [vmem:[%s199] sm:$0x3] %v241
      %p243 = scmp.lt.s32.totalorder %s18, 1
      %s244 = scalar_select %p243, %s18, 1
      %p245 = scmp.lt.s32.totalorder %s19, 0
      %s246 = scalar_select %p245, %s19, 0
      %s247 = sadd.s32 %s246, %s244
      %s248 = smul.addr %s247, 2
      %s249 = scalar_lea.vmem %s3, %s248
      // Predicated region
      $region33: #{rfdn_forward.59} parent=31 // pred_check
        %p250 = pneg %p116
      $region34: #{rfdn_forward.59} parent=31 // pred_check_branch
        %252 = sbr.rel (%p250) target = $region36
      $region35: #{rfdn_forward.59} parent=31 // pred_region
        _
      $region36: #{rfdn_forward.59} parent=31 // pred_fallthru
        _
    $region32: #{rfdn_forward.59} parent=5 // pred_fallthru
      _
    %p253 = scmp.le.s32.totalorder 2, %s9
    // Predicated region
    $region37: #{rfdn_forward.59} parent=5 // pred_check
      %p254 = pneg %p253
    $region38: #{rfdn_forward.59} parent=5 // pred_check_branch
      %256 = sbr.rel (%p254) target = $region40
    $region39: #{rfdn_forward.59} parent=5 // pred_region
      %s257 = ssub.s32 %s9, 2
      // Predicated region
      $region41: #{rfdn_forward.59} parent=39 // pred_check
        %p258 = pneg %p122
      $region42: #{rfdn_forward.59} parent=39 // pred_check_branch
        %260 = sbr.rel (%p258) target = $region44
      $region43: #{rfdn_forward.59} parent=39 // pred_region
        %p261 = scmp.lt.s32.totalorder %s20, 1
        %s262 = scalar_select %p261, %s20, 1
        %p263 = scmp.lt.s32.totalorder %s21, 0
        %s264 = scalar_select %p263, %s21, 0
        %s265 = sadd.s32 %s264, %s262
        %s266 = smul.addr %s265, 2
        %s267 = scalar_lea.vmem %s3, %s266
      $region44: #{rfdn_forward.59} parent=39 // pred_fallthru
        _
    $region40: #{rfdn_forward.59} parent=5 // pred_fallthru
      _
  $region6: #{rfdn_forward.59} parent=0 // loop_footer
    %s13 = sadd.s32 1, %s9
  $region7: #{rfdn_forward.59} parent=0 // loop_footer_branch
    %8 = sbr.rel target = $region3
  $region8: #{rfdn_forward.59} parent=0 // loop_exit
    _

// kernel: rfdn_forward.62
$region0: #{rfdn_forward.62}
  #allocation0 [shape = 'u32[]', space=smem, size = 0x4, offset = 0x4, fixed_abs, tag = 'smem constant byte address 0x4 - core index']
  #allocation1 [shape = 'u32[72,128]{1,0:T(1,128)}', space=vmem, size = 0x9000, scoped, tag = 'internal scratch']
  %s0 = inlined_call_operand.vmem [shape: bf16[2,2,256], index: 0, kind: input, shape index: {}]
  %s1 = inlined_call_operand.vmem [shape: bf16[2,2], index: 1, kind: input, shape index: {}]
  %s2 = inlined_call_operand.vmem [shape: f32[2,1], index: 2, kind: input, shape index: {}]
  %s3 = inlined_call_operand.vmem [shape: f32[2,2,256], index: 3, kind: input, shape index: {}]
  %s4 = inlined_call_operand.vmem [shape: f32[2,2,256], index: 4, kind: output, shape index: {}]
  %s5 = sld [smem:[#allocation0]]
  $region49: #{rfdn_forward.62} parent=0
    _
  %s7 = ssub.s32 1, %s5
  %s8 = scalar_select 0, %s7, %s5
  loop: start=0, step=1, limit=4
  $region2: #{rfdn_forward.62} parent=0 // loop_pre_header
    _
  $region3: #{rfdn_forward.62} parent=0 // loop_header
    %s10 = sphi 0, %s14
    %p11 = scmp.ge.s32.totalorder %s10, 4
    %s17 = sphi 0, %s29
    %s18 = sphi 0, %s25
    %s19 = sphi 0, %s17
    %s20 = sphi 0, %s18
    %s21 = sphi 0, %s19
    %s22 = sphi 0, %s20
    %s34 = sphi 0, %s36
    %s37 = sphi 0, %s34
    %s38 = sphi 0, %s37
    %s54 = sphi 0, %s38
    %s58 = sphi 0, %s58
    %s60 = sphi 0, %s58
    %s61 = sphi 0, %s60
    %s75 = sphi 0, %s61
    %s79 = sphi 0, %s79
    %s81 = sphi 0, %s79
    %s82 = sphi 0, %s81
    %s96 = sphi 0, %s82
    %s104 = sphi 0, %s106
    %s107 = sphi 0, %s104
    %s108 = sphi 0, %s107
    %s124 = sphi 0, %s108
    %s132 = sphi 0, %s134
    %s135 = sphi 0, %s132
    %s136 = sphi 0, %s135
    %s152 = sphi 0, %s136
  $region4: #{rfdn_forward.62} parent=0 // loop_header_branch
    %13 = sbr.rel (%p11) target = $region8
  $region5: #{rfdn_forward.62} parent=0 // loop_body
    %s15 = ssub.s32 %s10, 1
    %s16 = ssub.s32 %s10, 2
    %s23 = sadd.s32 1, %s18
    %p24 = scmp.ge.s32.totalorder %s23, 1
    %s25 = scalar_select %p24, 0, %s23
    %s26 = sadd.s32 1, %s17
    %s27 = scalar_select %p24, %s26, %s17
    %p28 = scmp.ge.s32.totalorder %s27, 2
    %s29 = scalar_select %p28, 0, %s27
    %s30 = ssub.s32 %s17, %s29
    %s31 = ssub.s32 %s18, %s25
    %s32 = sor.u32 %s30, %s31
    %p33 = scmp.eq.s32.totalorder %s32, 0
    %s35 = sadd.s32 %s34, 1
    %s36 = scalar_select %p33, %s34, %s35
    %p39 = pneg %p33
    %p40 = scmp.eq.s32.totalorder %s10, 1
    %p41 = por %p39, %p40
    %p42 = scmp.ne.s32.totalorder %s34, %s37
    %p43 = scmp.eq.s32.totalorder %s10, 0
    %p44 = por %p42, %p43
    %p45 = scmp.ne.s32.totalorder %s34, %s37
    %p46 = scmp.eq.s32.totalorder %s15, 1
    %p47 = por %p45, %p46
    %p48 = scmp.ne.s32.totalorder %s37, %s38
    %p49 = scmp.eq.s32.totalorder %s15, 0
    %p50 = por %p48, %p49
    %p51 = scmp.ne.s32.totalorder %s37, %s38
    %p52 = scmp.eq.s32.totalorder %s16, 1
    %p53 = por %p51, %p52
    %p55 = scmp.ne.s32.totalorder %s38, %s54
    %p56 = scmp.eq.s32.totalorder %s16, 0
    %p57 = por %p55, %p56
    %s59 = sadd.s32 %s58, 1
    %p62 = scmp.eq.s32.totalorder %s10, 1
    %p63 = scmp.ne.s32.totalorder %s58, %s60
    %p64 = scmp.eq.s32.totalorder %s10, 0
    %p65 = por %p63, %p64
    %p66 = scmp.ne.s32.totalorder %s58, %s60
    %p67 = scmp.eq.s32.totalorder %s15, 1
    %p68 = por %p66, %p67
    %p69 = scmp.ne.s32.totalorder %s60, %s61
    %p70 = scmp.eq.s32.totalorder %s15, 0
    %p71 = por %p69, %p70
    %p72 = scmp.ne.s32.totalorder %s60, %s61
    %p73 = scmp.eq.s32.totalorder %s16, 1
    %p74 = por %p72, %p73
    %p76 = scmp.ne.s32.totalorder %s61, %s75
    %p77 = scmp.eq.s32.totalorder %s16, 0
    %p78 = por %p76, %p77
    %s80 = sadd.s32 %s79, 1
    %p83 = scmp.eq.s32.totalorder %s10, 1
    %p84 = scmp.ne.s32.totalorder %s79, %s81
    %p85 = scmp.eq.s32.totalorder %s10, 0
    %p86 = por %p84, %p85
    %p87 = scmp.ne.s32.totalorder %s79, %s81
    %p88 = scmp.eq.s32.totalorder %s15, 1
    %p89 = por %p87, %p88
    %p90 = scmp.ne.s32.totalorder %s81, %s82
    %p91 = scmp.eq.s32.totalorder %s15, 0
    %p92 = por %p90, %p91
    %p93 = scmp.ne.s32.totalorder %s81, %s82
    %p94 = scmp.eq.s32.totalorder %s16, 1
    %p95 = por %p93, %p94
    %p97 = scmp.ne.s32.totalorder %s82, %s96
    %p98 = scmp.eq.s32.totalorder %s16, 0
    %p99 = por %p97, %p98
    %s100 = ssub.s32 %s17, %s29
    %s101 = ssub.s32 %s18, %s25
    %s102 = sor.u32 %s100, %s101
    %p103 = scmp.eq.s32.totalorder %s102, 0
    %s105 = sadd.s32 %s104, 1
    %s106 = scalar_select %p103, %s104, %s105
    %p109 = pneg %p103
    %p110 = scmp.eq.s32.totalorder %s10, 1
    %p111 = por %p109, %p110
    %p112 = scmp.ne.s32.totalorder %s104, %s107
    %p113 = scmp.eq.s32.totalorder %s10, 0
    %p114 = por %p112, %p113
    %p115 = scmp.ne.s32.totalorder %s104, %s107
    %p116 = scmp.eq.s32.totalorder %s15, 1
    %p117 = por %p115, %p116
    %p118 = scmp.ne.s32.totalorder %s107, %s108
    %p119 = scmp.eq.s32.totalorder %s15, 0
    %p120 = por %p118, %p119
    %p121 = scmp.ne.s32.totalorder %s107, %s108
    %p122 = scmp.eq.s32.totalorder %s16, 1
    %p123 = por %p121, %p122
    %p125 = scmp.ne.s32.totalorder %s108, %s124
    %p126 = scmp.eq.s32.totalorder %s16, 0
    %p127 = por %p125, %p126
    %s128 = ssub.s32 %s17, %s29
    %s129 = ssub.s32 %s18, %s25
    %s130 = sor.u32 %s128, %s129
    %p131 = scmp.eq.s32.totalorder %s130, 0
    %s133 = sadd.s32 %s132, 1
    %s134 = scalar_select %p131, %s132, %s133
    %p137 = pneg %p131
    %p138 = scmp.eq.s32.totalorder %s10, 1
    %p139 = por %p137, %p138
    %p140 = scmp.ne.s32.totalorder %s132, %s135
    %p141 = scmp.eq.s32.totalorder %s10, 0
    %p142 = por %p140, %p141
    %p143 = scmp.ne.s32.totalorder %s132, %s135
    %p144 = scmp.eq.s32.totalorder %s15, 1
    %p145 = por %p143, %p144
    %p146 = scmp.ne.s32.totalorder %s135, %s136
    %p147 = scmp.eq.s32.totalorder %s15, 0
    %p148 = por %p146, %p147
    %p149 = scmp.ne.s32.totalorder %s135, %s136
    %p150 = scmp.eq.s32.totalorder %s16, 1
    %p151 = por %p149, %p150
    %p153 = scmp.ne.s32.totalorder %s136, %s152
    %p154 = scmp.eq.s32.totalorder %s16, 0
    %p155 = por %p153, %p154
    %p156 = scmp.le.s32.totalorder 1, %s10
    %p157 = scmp.lt.s32.totalorder %s10, 3
    %p158 = pnand %p156, %p157
    %p159 = pneg %p158
    // Predicated region
    $region9: #{rfdn_forward.62} parent=5 // pred_check
      _
    $region10: #{rfdn_forward.62} parent=5 // pred_check_branch
      %161 = sbr.rel (%p158) target = $region12
    $region11: #{rfdn_forward.62} parent=5 // pred_region
      %s162 = ssub.s32 %s10, 1
      // Predicated region
      $region13: #{rfdn_forward.62} parent=11 // pred_check
        %p163 = pneg %p71
      $region14: #{rfdn_forward.62} parent=11 // pred_check_branch
        %165 = sbr.rel (%p163) target = $region16
      $region15: #{rfdn_forward.62} parent=11 // pred_region
        _
      $region16: #{rfdn_forward.62} parent=11 // pred_fallthru
        _
      // Predicated region
      $region17: #{rfdn_forward.62} parent=11 // pred_check
        %p166 = pneg %p92
      $region18: #{rfdn_forward.62} parent=11 // pred_check_branch
        %168 = sbr.rel (%p166) target = $region20
      $region19: #{rfdn_forward.62} parent=11 // pred_region
        _
      $region20: #{rfdn_forward.62} parent=11 // pred_fallthru
        _
    $region12: #{rfdn_forward.62} parent=5 // pred_fallthru
      _
    %p169 = scmp.lt.s32.totalorder %s10, 2
    // Predicated region
    $region21: #{rfdn_forward.62} parent=5 // pred_check
      %p170 = pneg %p169
    $region22: #{rfdn_forward.62} parent=5 // pred_check_branch
      %172 = sbr.rel (%p170) target = $region24
    $region23: #{rfdn_forward.62} parent=5 // pred_region
      // Predicated region
      $region25: #{rfdn_forward.62} parent=23 // pred_check
        %p173 = pneg %p44
      $region26: #{rfdn_forward.62} parent=23 // pred_check_branch
        %175 = sbr.rel (%p173) target = $region28
      $region27: #{rfdn_forward.62} parent=23 // pred_region
        %s176 = smul.u32 2, %s18
        %p177 = scmp.lt.s32.totalorder %s17, 1
        %s178 = scalar_select %p177, %s17, 1
        %p179 = scmp.lt.s32.totalorder %s176, 1
        %s180 = scalar_select %p179, %s176, 1
        %s181 = smul.addr %s178, 2
        %s182 = sadd.s32 %s180, %s181
        %s183 = scalar_lea.vmem %s0, %s182
        %s184 = smul.u32 2, %s18
      $region28: #{rfdn_forward.62} parent=23 // pred_fallthru
        _
      // Predicated region
      $region29: #{rfdn_forward.62} parent=23 // pred_check
        %p185 = pneg %p114
      $region30: #{rfdn_forward.62} parent=23 // pred_check_branch
        %187 = sbr.rel (%p185) target = $region32
      $region31: #{rfdn_forward.62} parent=23 // pred_region
        %s188 = smul.u32 2, %s18
        %p189 = scmp.lt.s32.totalorder %s17, 1
        %s190 = scalar_select %p189, %s17, 1
        %p191 = scmp.lt.s32.totalorder %s188, 1
        %s192 = scalar_select %p191, %s188, 1
        %s193 = smul.addr %s190, 2
        %s194 = sadd.s32 %s192, %s193
        %s195 = smul.addr %s194, 2
        %s196 = scalar_lea.vmem %s3, %s195
        %s197 = smul.u32 2, %s18
      $region32: #{rfdn_forward.62} parent=23 // pred_fallthru
        _
    $region24: #{rfdn_forward.62} parent=5 // pred_fallthru
      _
    %p198 = scmp.le.s32.totalorder 1, %s10
    %p199 = scmp.lt.s32.totalorder %s10, 3
    %p200 = pnand %p198, %p199
    %p201 = pneg %p200
    // Predicated region
    $region33: #{rfdn_forward.62} parent=5 // pred_check
      _
    $region34: #{rfdn_forward.62} parent=5 // pred_check_branch
      %203 = sbr.rel (%p200) target = $region36
    $region35: #{rfdn_forward.62} parent=5 // pred_region
      %s204 = ssub.s32 %s10, 1
      %s205 = smul.u32 2, %s20
      %p206 = scmp.lt.s32.totalorder %s19, 1
      %s207 = scalar_select %p206, %s19, 1
      %p208 = scmp.lt.s32.totalorder %s205, 1
      %s209 = scalar_select %p208, %s205, 1
      %s210 = smul.addr %s207, 2
      %s211 = sadd.s32 %s209, %s210
      %s212 = scalar_lea.vmem %s0, %s211
      %p213 = pneg %p50
      %p214 = pneg %p47
      %p215 = pneg %p71
      %p216 = pneg %p68
      %p217 = pneg %p92
      %p218 = pneg %p89
      %s219 = smul.u32 2, %s20
      %p220 = scmp.lt.s32.totalorder %s19, 1
      %s221 = scalar_select %p220, %s19, 1
      %p222 = scmp.lt.s32.totalorder %s219, 1
      %s223 = scalar_select %p222, %s219, 1
      %s224 = smul.addr %s221, 2
      %s225 = sadd.s32 %s223, %s224
      %s226 = smul.addr %s225, 2
      %s227 = scalar_lea.vmem %s3, %s226
      %p228 = pneg %p120
      %p229 = pneg %p117
      %p230 = pneg %p148
      %p231 = pneg %p145
      %s232 = smul.u32 2, %s20
      %p233 = scmp.lt.s32.totalorder %s19, 1
      %s234 = scalar_select %p233, %s19, 1
      %p235 = scmp.lt.s32.totalorder %s232, 1
      %s236 = scalar_select %p235, %s232, 1
      %s237 = smul.addr %s234, 2
      %s238 = sadd.s32 %s236, %s237
      %s239 = smul.addr %s238, 2
      %s240 = scalar_lea.vmem %s4, %s239
      %s241 = smul.u32 2, %s20
      %p242 = scmp.lt.s32.totalorder %s19, 1
      %s243 = scalar_select %p242, %s19, 1
      %p244 = scmp.lt.s32.totalorder %s241, 1
      %s245 = scalar_select %p244, %s241, 1
      %s246 = smul.addr %s243, 2
      %s247 = sadd.s32 %s245, %s246
      %s248 = scalar_lea.vmem %s0, %s247
      %s249 = smul.u32 2, %s20
      %s250 = smul.u32 2, %s20
      %p251 = scmp.lt.s32.totalorder %s19, 1
      %s252 = scalar_select %p251, %s19, 1
      %p253 = scmp.lt.s32.totalorder %s250, 1
      %s254 = scalar_select %p253, %s250, 1
      %s255 = smul.addr %s252, 2
      %s256 = sadd.s32 %s254, %s255
      %s257 = smul.addr %s256, 2
      %s258 = scalar_lea.vmem %s3, %s257
      %s259 = smul.u32 2, %s20
      %s260 = smul.u32 2, %s20
      %p261 = scmp.lt.s32.totalorder %s19, 1
      %s262 = scalar_select %p261, %s19, 1
      %p263 = scmp.lt.s32.totalorder %s260, 1
      %s264 = scalar_select %p263, %s260, 1
      %s265 = smul.addr %s262, 2
      %s266 = sadd.s32 %s264, %s265
      %s267 = smul.addr %s266, 2
      %s268 = scalar_lea.vmem %s4, %s267
      %s269 = smul.u32 2, %s20
      %v271 = vld [vmem:[%s1] sm:$0x1]
      %v272 = vld [vmem:[%s248] sm:$0x3]
      %v273 = vld [vmem:[%s2] sm:$0x3]
      %275 = vset.pattern.permute.xlu0 0
      %276 = vperm.xlu0 %275, %v273
      %v277 = vpop.permute.xlu0 %276
      %280 = vst [vmem:[#allocation1] ss:$9 sm:$0xff] %v272
      %v281 = vld [vmem:[#allocation1] sm:$0xff]
      %v282 = vld [vmem:[#allocation1 + $0x9] sm:$0xff]
      %vm283 = vcmask 15360
      %v285 = vsel %vm283, %v271, 0
      %vm287 = vcmask 1040384
      %v288 = vsel %vm287, %v281, 0
      %v290 = vsel %vm287, %v282, 0
      %292 = vmatpush.bf16.msra.mxu0 0
      %293 = vmatpush.bf16.msra.mxu0 0
      %294 = vmatpush.bf16.msra.mxu0 0
      %295 = vmatpush.bf16.msra.mxu0 0
      %296 = vmatpush.bf16.msra.mxu0 0
      %297 = vmatpush.bf16.msra.mxu0 0
      %298 = vmatpush.bf16.msra.mxu0 0
      %299 = vmatpush.bf16.msra.mxu0 %v288
      %300 = vmatmul.bf16.gmra.mxu0 %v285
      %v301 = vpop.f32.mrf.mxu0
      %v302 = vadd.f32 %v277, %v301
      %v303 = vpop.f32.mrf.mxu0
      %304 = vdwg.mxu0
      %305 = vmatpush.bf16.msra.mxu0 0
      %306 = vmatpush.bf16.msra.mxu0 0
      %307 = vmatpush.bf16.msra.mxu0 0
      %308 = vmatpush.bf16.msra.mxu0 0
      %309 = vmatpush.bf16.msra.mxu0 0
      %310 = vmatpush.bf16.msra.mxu0 0
      %311 = vmatpush.bf16.msra.mxu0 0
      %312 = vmatpush.bf16.msra.mxu0 %v290
      %313 = vmatmul.bf16.gmra.mxu0 %v285
      %v314 = vpop.f32.mrf.mxu0
      %v315 = vadd.f32 %v277, %v314
      %v316 = vpop.f32.mrf.mxu0
      %317 = vdwg.mxu0
      %v318 = vld [vmem:[%s258] sm:$0xf]
      %320 = vst [vmem:[#allocation1] ss:$4 sm:$0xff] %v318
      %v321 = vld.sshfl [vmem:[#allocation1] sm:$0xff pattern:$0x73625140]
      %v322 = vld.sshfl [vmem:[#allocation1 + $0x8] sm:$0xff pattern:$0x73625140]
      %v325 = vadd.f32 %v302, %v321
      %v326 = vadd.f32 %v315, %v322
      %v329 = vrot.slane %v326, 6
      %vm330 = vcmask 1041408
      %v331 = vsel %vm330, %v325, %v329
      %333 = vst [vmem:[%s268] sm:$0xf] %v331
      %s334 = smul.u32 2, %s20
      %p335 = scmp.lt.s32.totalorder %s19, 1
      %s336 = scalar_select %p335, %s19, 1
      %p337 = scmp.lt.s32.totalorder %s334, 1
      %s338 = scalar_select %p337, %s334, 1
      %s339 = smul.addr %s336, 2
      %s340 = sadd.s32 %s338, %s339
      %s341 = smul.addr %s340, 2
      %s342 = scalar_lea.vmem %s4, %s341
      // Predicated region
      $region37: #{rfdn_forward.62} parent=35 // pred_check
        %p343 = pneg %p145
      $region38: #{rfdn_forward.62} parent=35 // pred_check_branch
        %345 = sbr.rel (%p343) target = $region40
      $region39: #{rfdn_forward.62} parent=35 // pred_region
        %s346 = smul.u32 2, %s20
      $region40: #{rfdn_forward.62} parent=35 // pred_fallthru
        _
    $region36: #{rfdn_forward.62} parent=5 // pred_fallthru
      _
    %p347 = scmp.le.s32.totalorder 2, %s10
    // Predicated region
    $region41: #{rfdn_forward.62} parent=5 // pred_check
      %p348 = pneg %p347
    $region42: #{rfdn_forward.62} parent=5 // pred_check_branch
      %350 = sbr.rel (%p348) target = $region44
    $region43: #{rfdn_forward.62} parent=5 // pred_region
      %s351 = ssub.s32 %s10, 2
      // Predicated region
      $region45: #{rfdn_forward.62} parent=43 // pred_check
        %p352 = pneg %p151
      $region46: #{rfdn_forward.62} parent=43 // pred_check_branch
        %354 = sbr.rel (%p352) target = $region48
      $region47: #{rfdn_forward.62} parent=43 // pred_region
        %s355 = smul.u32 2, %s22
        %p356 = scmp.lt.s32.totalorder %s21, 1
        %s357 = scalar_select %p356, %s21, 1
        %p358 = scmp.lt.s32.totalorder %s355, 1
        %s359 = scalar_select %p358, %s355, 1
        %s360 = smul.addr %s357, 2
        %s361 = sadd.s32 %s359, %s360
        %s362 = smul.addr %s361, 2
        %s363 = scalar_lea.vmem %s4, %s362
      $region48: #{rfdn_forward.62} parent=43 // pred_fallthru
        _
    $region44: #{rfdn_forward.62} parent=5 // pred_fallthru
      _
  $region6: #{rfdn_forward.62} parent=0 // loop_footer
    %s14 = sadd.s32 1, %s10
  $region7: #{rfdn_forward.62} parent=0 // loop_footer_branch
    %9 = sbr.rel target = $region3
  $region8: #{rfdn_forward.62} parent=0 // loop_exit
    _

// kernel: rfdn_forward.63
$region0: #{rfdn_forward.63}
  #allocation0 [shape = 'u32[]', space=smem, size = 0x4, offset = 0x4, fixed_abs, tag = 'smem constant byte address 0x4 - core index']
  #allocation1 [shape = 'u32[72,128]{1,0:T(1,128)}', space=vmem, size = 0x9000, scoped, tag = 'internal scratch']
  %s0 = inlined_call_operand.vmem [shape: bf16[2,2,256], index: 0, kind: input, shape index: {}]
  %s1 = inlined_call_operand.vmem [shape: bf16[8,2], index: 1, kind: input, shape index: {}]
  %s2 = inlined_call_operand.vmem [shape: f32[8,1], index: 2, kind: input, shape index: {}]
  %s3 = inlined_call_operand.vmem [shape: f32[2,8,256], index: 3, kind: input, shape index: {}]
  %s4 = inlined_call_operand.vmem [shape: f32[2,8,256], index: 4, kind: output, shape index: {}]
  %s5 = sld [smem:[#allocation0]]
  $region49: #{rfdn_forward.63} parent=0
    _
  %s7 = ssub.s32 1, %s5
  %s8 = scalar_select 0, %s7, %s5
  loop: start=0, step=1, limit=4
  $region2: #{rfdn_forward.63} parent=0 // loop_pre_header
    _
  $region3: #{rfdn_forward.63} parent=0 // loop_header
    %s10 = sphi 0, %s14
    %p11 = scmp.ge.s32.totalorder %s10, 4
    %s17 = sphi 0, %s29
    %s18 = sphi 0, %s25
    %s19 = sphi 0, %s17
    %s20 = sphi 0, %s18
    %s21 = sphi 0, %s19
    %s22 = sphi 0, %s20
    %s34 = sphi 0, %s36
    %s37 = sphi 0, %s34
    %s38 = sphi 0, %s37
    %s54 = sphi 0, %s38
    %s58 = sphi 0, %s58
    %s60 = sphi 0, %s58
    %s61 = sphi 0, %s60
    %s75 = sphi 0, %s61
    %s79 = sphi 0, %s79
    %s81 = sphi 0, %s79
    %s82 = sphi 0, %s81
    %s96 = sphi 0, %s82
    %s104 = sphi 0, %s106
    %s107 = sphi 0, %s104
    %s108 = sphi 0, %s107
    %s124 = sphi 0, %s108
    %s132 = sphi 0, %s134
    %s135 = sphi 0, %s132
    %s136 = sphi 0, %s135
    %s152 = sphi 0, %s136
  $region4: #{rfdn_forward.63} parent=0 // loop_header_branch
    %13 = sbr.rel (%p11) target = $region8
  $region5: #{rfdn_forward.63} parent=0 // loop_body
    %s15 = ssub.s32 %s10, 1
    %s16 = ssub.s32 %s10, 2
    %s23 = sadd.s32 1, %s18
    %p24 = scmp.ge.s32.totalorder %s23, 1
    %s25 = scalar_select %p24, 0, %s23
    %s26 = sadd.s32 1, %s17
    %s27 = scalar_select %p24, %s26, %s17
    %p28 = scmp.ge.s32.totalorder %s27, 2
    %s29 = scalar_select %p28, 0, %s27
    %s30 = ssub.s32 %s17, %s29
    %s31 = ssub.s32 %s18, %s25
    %s32 = sor.u32 %s30, %s31
    %p33 = scmp.eq.s32.totalorder %s32, 0
    %s35 = sadd.s32 %s34, 1
    %s36 = scalar_select %p33, %s34, %s35
    %p39 = pneg %p33
    %p40 = scmp.eq.s32.totalorder %s10, 1
    %p41 = por %p39, %p40
    %p42 = scmp.ne.s32.totalorder %s34, %s37
    %p43 = scmp.eq.s32.totalorder %s10, 0
    %p44 = por %p42, %p43
    %p45 = scmp.ne.s32.totalorder %s34, %s37
    %p46 = scmp.eq.s32.totalorder %s15, 1
    %p47 = por %p45, %p46
    %p48 = scmp.ne.s32.totalorder %s37, %s38
    %p49 = scmp.eq.s32.totalorder %s15, 0
    %p50 = por %p48, %p49
    %p51 = scmp.ne.s32.totalorder %s37, %s38
    %p52 = scmp.eq.s32.totalorder %s16, 1
    %p53 = por %p51, %p52
    %p55 = scmp.ne.s32.totalorder %s38, %s54
    %p56 = scmp.eq.s32.totalorder %s16, 0
    %p57 = por %p55, %p56
    %s59 = sadd.s32 %s58, 1
    %p62 = scmp.eq.s32.totalorder %s10, 1
    %p63 = scmp.ne.s32.totalorder %s58, %s60
    %p64 = scmp.eq.s32.totalorder %s10, 0
    %p65 = por %p63, %p64
    %p66 = scmp.ne.s32.totalorder %s58, %s60
    %p67 = scmp.eq.s32.totalorder %s15, 1
    %p68 = por %p66, %p67
    %p69 = scmp.ne.s32.totalorder %s60, %s61
    %p70 = scmp.eq.s32.totalorder %s15, 0
    %p71 = por %p69, %p70
    %p72 = scmp.ne.s32.totalorder %s60, %s61
    %p73 = scmp.eq.s32.totalorder %s16, 1
    %p74 = por %p72, %p73
    %p76 = scmp.ne.s32.totalorder %s61, %s75
    %p77 = scmp.eq.s32.totalorder %s16, 0
    %p78 = por %p76, %p77
    %s80 = sadd.s32 %s79, 1
    %p83 = scmp.eq.s32.totalorder %s10, 1
    %p84 = scmp.ne.s32.totalorder %s79, %s81
    %p85 = scmp.eq.s32.totalorder %s10, 0
    %p86 = por %p84, %p85
    %p87 = scmp.ne.s32.totalorder %s79, %s81
    %p88 = scmp.eq.s32.totalorder %s15, 1
    %p89 = por %p87, %p88
    %p90 = scmp.ne.s32.totalorder %s81, %s82
    %p91 = scmp.eq.s32.totalorder %s15, 0
    %p92 = por %p90, %p91
    %p93 = scmp.ne.s32.totalorder %s81, %s82
    %p94 = scmp.eq.s32.totalorder %s16, 1
    %p95 = por %p93, %p94
    %p97 = scmp.ne.s32.totalorder %s82, %s96
    %p98 = scmp.eq.s32.totalorder %s16, 0
    %p99 = por %p97, %p98
    %s100 = ssub.s32 %s17, %s29
    %s101 = ssub.s32 %s18, %s25
    %s102 = sor.u32 %s100, %s101
    %p103 = scmp.eq.s32.totalorder %s102, 0
    %s105 = sadd.s32 %s104, 1
    %s106 = scalar_select %p103, %s104, %s105
    %p109 = pneg %p103
    %p110 = scmp.eq.s32.totalorder %s10, 1
    %p111 = por %p109, %p110
    %p112 = scmp.ne.s32.totalorder %s104, %s107
    %p113 = scmp.eq.s32.totalorder %s10, 0
    %p114 = por %p112, %p113
    %p115 = scmp.ne.s32.totalorder %s104, %s107
    %p116 = scmp.eq.s32.totalorder %s15, 1
    %p117 = por %p115, %p116
    %p118 = scmp.ne.s32.totalorder %s107, %s108
    %p119 = scmp.eq.s32.totalorder %s15, 0
    %p120 = por %p118, %p119
    %p121 = scmp.ne.s32.totalorder %s107, %s108
    %p122 = scmp.eq.s32.totalorder %s16, 1
    %p123 = por %p121, %p122
    %p125 = scmp.ne.s32.totalorder %s108, %s124
    %p126 = scmp.eq.s32.totalorder %s16, 0
    %p127 = por %p125, %p126
    %s128 = ssub.s32 %s17, %s29
    %s129 = ssub.s32 %s18, %s25
    %s130 = sor.u32 %s128, %s129
    %p131 = scmp.eq.s32.totalorder %s130, 0
    %s133 = sadd.s32 %s132, 1
    %s134 = scalar_select %p131, %s132, %s133
    %p137 = pneg %p131
    %p138 = scmp.eq.s32.totalorder %s10, 1
    %p139 = por %p137, %p138
    %p140 = scmp.ne.s32.totalorder %s132, %s135
    %p141 = scmp.eq.s32.totalorder %s10, 0
    %p142 = por %p140, %p141
    %p143 = scmp.ne.s32.totalorder %s132, %s135
    %p144 = scmp.eq.s32.totalorder %s15, 1
    %p145 = por %p143, %p144
    %p146 = scmp.ne.s32.totalorder %s135, %s136
    %p147 = scmp.eq.s32.totalorder %s15, 0
    %p148 = por %p146, %p147
    %p149 = scmp.ne.s32.totalorder %s135, %s136
    %p150 = scmp.eq.s32.totalorder %s16, 1
    %p151 = por %p149, %p150
    %p153 = scmp.ne.s32.totalorder %s136, %s152
    %p154 = scmp.eq.s32.totalorder %s16, 0
    %p155 = por %p153, %p154
    %p156 = scmp.le.s32.totalorder 1, %s10
    %p157 = scmp.lt.s32.totalorder %s10, 3
    %p158 = pnand %p156, %p157
    %p159 = pneg %p158
    // Predicated region
    $region9: #{rfdn_forward.63} parent=5 // pred_check
      _
    $region10: #{rfdn_forward.63} parent=5 // pred_check_branch
      %161 = sbr.rel (%p158) target = $region12
    $region11: #{rfdn_forward.63} parent=5 // pred_region
      %s162 = ssub.s32 %s10, 1
      // Predicated region
      $region13: #{rfdn_forward.63} parent=11 // pred_check
        %p163 = pneg %p71
      $region14: #{rfdn_forward.63} parent=11 // pred_check_branch
        %165 = sbr.rel (%p163) target = $region16
      $region15: #{rfdn_forward.63} parent=11 // pred_region
        _
      $region16: #{rfdn_forward.63} parent=11 // pred_fallthru
        _
      // Predicated region
      $region17: #{rfdn_forward.63} parent=11 // pred_check
        %p166 = pneg %p92
      $region18: #{rfdn_forward.63} parent=11 // pred_check_branch
        %168 = sbr.rel (%p166) target = $region20
      $region19: #{rfdn_forward.63} parent=11 // pred_region
        _
      $region20: #{rfdn_forward.63} parent=11 // pred_fallthru
        _
    $region12: #{rfdn_forward.63} parent=5 // pred_fallthru
      _
    %p169 = scmp.lt.s32.totalorder %s10, 2
    // Predicated region
    $region21: #{rfdn_forward.63} parent=5 // pred_check
      %p170 = pneg %p169
    $region22: #{rfdn_forward.63} parent=5 // pred_check_branch
      %172 = sbr.rel (%p170) target = $region24
    $region23: #{rfdn_forward.63} parent=5 // pred_region
      // Predicated region
      $region25: #{rfdn_forward.63} parent=23 // pred_check
        %p173 = pneg %p44
      $region26: #{rfdn_forward.63} parent=23 // pred_check_branch
        %175 = sbr.rel (%p173) target = $region28
      $region27: #{rfdn_forward.63} parent=23 // pred_region
        %s176 = smul.u32 2, %s18
        %p177 = scmp.lt.s32.totalorder %s17, 1
        %s178 = scalar_select %p177, %s17, 1
        %p179 = scmp.lt.s32.totalorder %s176, 1
        %s180 = scalar_select %p179, %s176, 1
        %s181 = smul.addr %s178, 2
        %s182 = sadd.s32 %s180, %s181
        %s183 = scalar_lea.vmem %s0, %s182
        %s184 = smul.u32 2, %s18
      $region28: #{rfdn_forward.63} parent=23 // pred_fallthru
        _
      // Predicated region
      $region29: #{rfdn_forward.63} parent=23 // pred_check
        %p185 = pneg %p114
      $region30: #{rfdn_forward.63} parent=23 // pred_check_branch
        %187 = sbr.rel (%p185) target = $region32
      $region31: #{rfdn_forward.63} parent=23 // pred_region
        %s188 = smul.u32 2, %s18
        %p189 = scmp.lt.s32.totalorder %s17, 1
        %s190 = scalar_select %p189, %s17, 1
        %p191 = scmp.lt.s32.totalorder %s188, 1
        %s192 = scalar_select %p191, %s188, 1
        %s193 = smul.addr %s190, 2
        %s194 = sadd.s32 %s192, %s193
        %s195 = smul.addr %s194, 8
        %s196 = scalar_lea.vmem %s3, %s195
        %s197 = smul.u32 2, %s18
      $region32: #{rfdn_forward.63} parent=23 // pred_fallthru
        _
    $region24: #{rfdn_forward.63} parent=5 // pred_fallthru
      _
    %p198 = scmp.le.s32.totalorder 1, %s10
    %p199 = scmp.lt.s32.totalorder %s10, 3
    %p200 = pnand %p198, %p199
    %p201 = pneg %p200
    // Predicated region
    $region33: #{rfdn_forward.63} parent=5 // pred_check
      _
    $region34: #{rfdn_forward.63} parent=5 // pred_check_branch
      %203 = sbr.rel (%p200) target = $region36
    $region35: #{rfdn_forward.63} parent=5 // pred_region
      %s204 = ssub.s32 %s10, 1
      %s205 = smul.u32 2, %s20
      %p206 = scmp.lt.s32.totalorder %s19, 1
      %s207 = scalar_select %p206, %s19, 1
      %p208 = scmp.lt.s32.totalorder %s205, 1
      %s209 = scalar_select %p208, %s205, 1
      %s210 = smul.addr %s207, 2
      %s211 = sadd.s32 %s209, %s210
      %s212 = scalar_lea.vmem %s0, %s211
      %p213 = pneg %p50
      %p214 = pneg %p47
      %p215 = pneg %p71
      %p216 = pneg %p68
      %p217 = pneg %p92
      %p218 = pneg %p89
      %s219 = smul.u32 2, %s20
      %p220 = scmp.lt.s32.totalorder %s19, 1
      %s221 = scalar_select %p220, %s19, 1
      %p222 = scmp.lt.s32.totalorder %s219, 1
      %s223 = scalar_select %p222, %s219, 1
      %s224 = smul.addr %s221, 2
      %s225 = sadd.s32 %s223, %s224
      %s226 = smul.addr %s225, 8
      %s227 = scalar_lea.vmem %s3, %s226
      %p228 = pneg %p120
      %p229 = pneg %p117
      %p230 = pneg %p148
      %p231 = pneg %p145
      %s232 = smul.u32 2, %s20
      %p233 = scmp.lt.s32.totalorder %s19, 1
      %s234 = scalar_select %p233, %s19, 1
      %p235 = scmp.lt.s32.totalorder %s232, 1
      %s236 = scalar_select %p235, %s232, 1
      %s237 = smul.addr %s234, 2
      %s238 = sadd.s32 %s236, %s237
      %s239 = smul.addr %s238, 8
      %s240 = scalar_lea.vmem %s4, %s239
      %s241 = smul.u32 2, %s20
      %p242 = scmp.lt.s32.totalorder %s19, 1
      %s243 = scalar_select %p242, %s19, 1
      %p244 = scmp.lt.s32.totalorder %s241, 1
      %s245 = scalar_select %p244, %s241, 1
      %s246 = smul.addr %s243, 2
      %s247 = sadd.s32 %s245, %s246
      %s248 = scalar_lea.vmem %s0, %s247
      %s249 = smul.u32 2, %s20
      %s250 = smul.u32 2, %s20
      %p251 = scmp.lt.s32.totalorder %s19, 1
      %s252 = scalar_select %p251, %s19, 1
      %p253 = scmp.lt.s32.totalorder %s250, 1
      %s254 = scalar_select %p253, %s250, 1
      %s255 = smul.addr %s252, 2
      %s256 = sadd.s32 %s254, %s255
      %s257 = smul.addr %s256, 8
      %s258 = scalar_lea.vmem %s3, %s257
      %s259 = smul.u32 2, %s20
      %s260 = smul.u32 2, %s20
      %p261 = scmp.lt.s32.totalorder %s19, 1
      %s262 = scalar_select %p261, %s19, 1
      %p263 = scmp.lt.s32.totalorder %s260, 1
      %s264 = scalar_select %p263, %s260, 1
      %s265 = smul.addr %s262, 2
      %s266 = sadd.s32 %s264, %s265
      %s267 = smul.addr %s266, 8
      %s268 = scalar_lea.vmem %s4, %s267
      %s269 = smul.u32 2, %s20
      %v271 = vld [vmem:[%s1] sm:$0xf]
      %v272 = vld [vmem:[%s248] sm:$0x3]
      %v273 = vld [vmem:[%s258] sm:$0xff]
      %v274 = vld [vmem:[%s258 + $0x8] sm:$0xff]
      %v275 = vld [vmem:[%s2] sm:$0xff]
      %277 = vset.pattern.permute.xlu0 0
      %278 = vperm.xlu0 %277, %v275
      %v279 = vpop.permute.xlu0 %278
      %282 = vst [vmem:[#allocation1] ss:$9 sm:$0xff] %v272
      %v283 = vld [vmem:[#allocation1] sm:$0xff]
      %v284 = vld [vmem:[#allocation1 + $0x9] sm:$0xff]
      %vm285 = vcmask 15360
      %v287 = vsel %vm285, %v271, 0
      %vm289 = vcmask 1040384
      %v290 = vsel %vm289, %v283, 0
      %v292 = vsel %vm289, %v284, 0
      %294 = vmatpush.bf16.msra.mxu0 0
      %295 = vmatpush.bf16.msra.mxu0 0
      %296 = vmatpush.bf16.msra.mxu0 0
      %297 = vmatpush.bf16.msra.mxu0 0
      %298 = vmatpush.bf16.msra.mxu0 0
      %299 = vmatpush.bf16.msra.mxu0 0
      %300 = vmatpush.bf16.msra.mxu0 0
      %301 = vmatpush.bf16.msra.mxu0 %v290
      %302 = vmatmul.bf16.gmra.mxu0 %v287
      %v303 = vpop.f32.mrf.mxu0
      %v304 = vadd.f32 %v279, %v303
      %v305 = vpop.f32.mrf.mxu0
      %306 = vdwg.mxu0
      %307 = vmatpush.bf16.msra.mxu0 0
      %308 = vmatpush.bf16.msra.mxu0 0
      %309 = vmatpush.bf16.msra.mxu0 0
      %310 = vmatpush.bf16.msra.mxu0 0
      %311 = vmatpush.bf16.msra.mxu0 0
      %312 = vmatpush.bf16.msra.mxu0 0
      %313 = vmatpush.bf16.msra.mxu0 0
      %314 = vmatpush.bf16.msra.mxu0 %v292
      %315 = vmatmul.bf16.gmra.mxu0 %v287
      %v316 = vpop.f32.mrf.mxu0
      %v317 = vadd.f32 %v279, %v316
      %v318 = vpop.f32.mrf.mxu0
      %319 = vdwg.mxu0
      %v320 = vxor.u32 %v304, 2147483648
      %v321 = vxor.u32 %v317, 2147483648
      %v322 = vmul.f32 %v320, 1.442695
      %v323 = vpow.pop %v322
      %v324 = vmul.f32 %v321, 1.442695
      %v325 = vpow.pop %v324
      %v326 = vadd.f32 %v323, 1.0
      %v327 = vadd.f32 %v325, 1.0
      %v328 = vrcp.pop %v326
      %v329 = vmul.f32 %v326, %v328
      %v330 = vsub.f32 1.0, %v329
      %v331 = vmul.f32 %v328, %v330
      %v332 = vadd.f32 %v328, %v331
      %vm333 = vweird.f32 %v326
      %vm334 = vweird.f32 %v328
      %vm335 = vmor %vm333, %vm334
      %v336 = vsel %vm335, %v328, %v332
      %v337 = vand.u32 2147483647, %v326
      %vm338 = vcmp.eq.f32.partialorder %v337, 8.507059e+37
      %v339 = vand.u32 %v326, 2147483648
      %v340 = vor.u32 1.1754944e-38, %v339
      %v341 = vsel %vm338, %v340, %v336
      %v342 = vmul.f32 1.0, %v341
      %v343 = vrcp.pop %v327
      %v344 = vmul.f32 %v327, %v343
      %v345 = vsub.f32 1.0, %v344
      %v346 = vmul.f32 %v343, %v345
      %v347 = vadd.f32 %v343, %v346
      %vm348 = vweird.f32 %v327
      %vm349 = vweird.f32 %v343
      %vm350 = vmor %vm348, %vm349
      %v351 = vsel %vm350, %v343, %v347
      %v352 = vand.u32 2147483647, %v327
      %vm353 = vcmp.eq.f32.partialorder %v352, 8.507059e+37
      %v354 = vand.u32 %v327, 2147483648
      %v355 = vor.u32 1.1754944e-38, %v354
      %v356 = vsel %vm353, %v355, %v351
      %v357 = vmul.f32 1.0, %v356
      %v358 = vmul.f32 %v273, %v342
      %v359 = vmul.f32 %v274, %v357
      %360 = vst [vmem:[%s268] sm:$0xff] %v358
      %361 = vst [vmem:[%s268 + $0x8] sm:$0xff] %v359
      %s362 = smul.u32 2, %s20
      %p363 = scmp.lt.s32.totalorder %s19, 1
      %s364 = scalar_select %p363, %s19, 1
      %p365 = scmp.lt.s32.totalorder %s362, 1
      %s366 = scalar_select %p365, %s362, 1
      %s367 = smul.addr %s364, 2
      %s368 = sadd.s32 %s366, %s367
      %s369 = smul.addr %s368, 8
      %s370 = scalar_lea.vmem %s4, %s369
      // Predicated region
      $region37: #{rfdn_forward.63} parent=35 // pred_check
        %p371 = pneg %p145
      $region38: #{rfdn_forward.63} parent=35 // pred_check_branch
        %373 = sbr.rel (%p371) target = $region40
      $region39: #{rfdn_forward.63} parent=35 // pred_region
        %s374 = smul.u32 2, %s20
      $region40: #{rfdn_forward.63} parent=35 // pred_fallthru
        _
    $region36: #{rfdn_forward.63} parent=5 // pred_fallthru
      _
    %p375 = scmp.le.s32.totalorder 2, %s10
    // Predicated region
    $region41: #{rfdn_forward.63} parent=5 // pred_check
      %p376 = pneg %p375
    $region42: #{rfdn_forward.63} parent=5 // pred_check_branch
      %378 = sbr.rel (%p376) target = $region44
    $region43: #{rfdn_forward.63} parent=5 // pred_region
      %s379 = ssub.s32 %s10, 2
      // Predicated region
      $region45: #{rfdn_forward.63} parent=43 // pred_check
        %p380 = pneg %p151
      $region46: #{rfdn_forward.63} parent=43 // pred_check_branch
        %382 = sbr.rel (%p380) target = $region48
      $region47: #{rfdn_forward.63} parent=43 // pred_region
        %s383 = smul.u32 2, %s22
        %p384 = scmp.lt.s32.totalorder %s21, 1
        %s385 = scalar_select %p384, %s21, 1
        %p386 = scmp.lt.s32.totalorder %s383, 1
        %s387 = scalar_select %p386, %s383, 1
        %s388 = smul.addr %s385, 2
        %s389 = sadd.s32 %s387, %s388
        %s390 = smul.addr %s389, 8
        %s391 = scalar_lea.vmem %s4, %s390
      $region48: #{rfdn_forward.63} parent=43 // pred_fallthru
        _
    $region44: #{rfdn_forward.63} parent=5 // pred_fallthru
      _
  $region6: #{rfdn_forward.63} parent=0 // loop_footer
    %s14 = sadd.s32 1, %s10
  $region7: #{rfdn_forward.63} parent=0 // loop_footer_branch
    %9 = sbr.rel target = $region3
  $region8: #{rfdn_forward.63} parent=0 // loop_exit
    _

// kernel: rfdn_forward.100
$region0: #{rfdn_forward.100}
  #allocation0 [shape = 'u32[]', space=smem, size = 0x4, offset = 0x4, fixed_abs, tag = 'smem constant byte address 0x4 - core index']
  #allocation1 [shape = 'u32[72,128]{1,0:T(1,128)}', space=vmem, size = 0x9000, scoped, tag = 'internal scratch']
  %s0 = inlined_call_operand.vmem [shape: bf16[2,32,256], index: 0, kind: input, shape index: {}]
  %s1 = inlined_call_operand.vmem [shape: bf16[8,32], index: 1, kind: input, shape index: {}]
  %s2 = inlined_call_operand.vmem [shape: f32[8,1], index: 2, kind: input, shape index: {}]
  %s3 = inlined_call_operand.vmem [shape: f32[2,8,256], index: 3, kind: output, shape index: {}]
  %s4 = sld [smem:[#allocation0]]
  $region45: #{rfdn_forward.100} parent=0
    _
  %s6 = ssub.s32 1, %s4
  %s7 = scalar_select 0, %s6, %s4
  loop: start=0, step=1, limit=4
  $region2: #{rfdn_forward.100} parent=0 // loop_pre_header
    _
  $region3: #{rfdn_forward.100} parent=0 // loop_header
    %s9 = sphi 0, %s13
    %p10 = scmp.ge.s32.totalorder %s9, 4
    %s16 = sphi 0, %s28
    %s17 = sphi 0, %s24
    %s18 = sphi 0, %s16
    %s19 = sphi 0, %s17
    %s20 = sphi 0, %s18
    %s21 = sphi 0, %s19
    %s33 = sphi 0, %s35
    %s36 = sphi 0, %s33
    %s37 = sphi 0, %s36
    %s53 = sphi 0, %s37
    %s57 = sphi 0, %s57
    %s59 = sphi 0, %s57
    %s60 = sphi 0, %s59
    %s74 = sphi 0, %s60
    %s78 = sphi 0, %s78
    %s80 = sphi 0, %s78
    %s81 = sphi 0, %s80
    %s95 = sphi 0, %s81
    %s103 = sphi 0, %s105
    %s106 = sphi 0, %s103
    %s107 = sphi 0, %s106
    %s123 = sphi 0, %s107
  $region4: #{rfdn_forward.100} parent=0 // loop_header_branch
    %12 = sbr.rel (%p10) target = $region8
  $region5: #{rfdn_forward.100} parent=0 // loop_body
    %s14 = ssub.s32 %s9, 1
    %s15 = ssub.s32 %s9, 2
    %s22 = sadd.s32 1, %s17
    %p23 = scmp.ge.s32.totalorder %s22, 1
    %s24 = scalar_select %p23, 0, %s22
    %s25 = sadd.s32 1, %s16
    %s26 = scalar_select %p23, %s25, %s16
    %p27 = scmp.ge.s32.totalorder %s26, 2
    %s28 = scalar_select %p27, 0, %s26
    %s29 = ssub.s32 %s16, %s28
    %s30 = ssub.s32 %s17, %s24
    %s31 = sor.u32 %s29, %s30
    %p32 = scmp.eq.s32.totalorder %s31, 0
    %s34 = sadd.s32 %s33, 1
    %s35 = scalar_select %p32, %s33, %s34
    %p38 = pneg %p32
    %p39 = scmp.eq.s32.totalorder %s9, 1
    %p40 = por %p38, %p39
    %p41 = scmp.ne.s32.totalorder %s33, %s36
    %p42 = scmp.eq.s32.totalorder %s9, 0
    %p43 = por %p41, %p42
    %p44 = scmp.ne.s32.totalorder %s33, %s36
    %p45 = scmp.eq.s32.totalorder %s14, 1
    %p46 = por %p44, %p45
    %p47 = scmp.ne.s32.totalorder %s36, %s37
    %p48 = scmp.eq.s32.totalorder %s14, 0
    %p49 = por %p47, %p48
    %p50 = scmp.ne.s32.totalorder %s36, %s37
    %p51 = scmp.eq.s32.totalorder %s15, 1
    %p52 = por %p50, %p51
    %p54 = scmp.ne.s32.totalorder %s37, %s53
    %p55 = scmp.eq.s32.totalorder %s15, 0
    %p56 = por %p54, %p55
    %s58 = sadd.s32 %s57, 1
    %p61 = scmp.eq.s32.totalorder %s9, 1
    %p62 = scmp.ne.s32.totalorder %s57, %s59
    %p63 = scmp.eq.s32.totalorder %s9, 0
    %p64 = por %p62, %p63
    %p65 = scmp.ne.s32.totalorder %s57, %s59
    %p66 = scmp.eq.s32.totalorder %s14, 1
    %p67 = por %p65, %p66
    %p68 = scmp.ne.s32.totalorder %s59, %s60
    %p69 = scmp.eq.s32.totalorder %s14, 0
    %p70 = por %p68, %p69
    %p71 = scmp.ne.s32.totalorder %s59, %s60
    %p72 = scmp.eq.s32.totalorder %s15, 1
    %p73 = por %p71, %p72
    %p75 = scmp.ne.s32.totalorder %s60, %s74
    %p76 = scmp.eq.s32.totalorder %s15, 0
    %p77 = por %p75, %p76
    %s79 = sadd.s32 %s78, 1
    %p82 = scmp.eq.s32.totalorder %s9, 1
    %p83 = scmp.ne.s32.totalorder %s78, %s80
    %p84 = scmp.eq.s32.totalorder %s9, 0
    %p85 = por %p83, %p84
    %p86 = scmp.ne.s32.totalorder %s78, %s80
    %p87 = scmp.eq.s32.totalorder %s14, 1
    %p88 = por %p86, %p87
    %p89 = scmp.ne.s32.totalorder %s80, %s81
    %p90 = scmp.eq.s32.totalorder %s14, 0
    %p91 = por %p89, %p90
    %p92 = scmp.ne.s32.totalorder %s80, %s81
    %p93 = scmp.eq.s32.totalorder %s15, 1
    %p94 = por %p92, %p93
    %p96 = scmp.ne.s32.totalorder %s81, %s95
    %p97 = scmp.eq.s32.totalorder %s15, 0
    %p98 = por %p96, %p97
    %s99 = ssub.s32 %s16, %s28
    %s100 = ssub.s32 %s17, %s24
    %s101 = sor.u32 %s99, %s100
    %p102 = scmp.eq.s32.totalorder %s101, 0
    %s104 = sadd.s32 %s103, 1
    %s105 = scalar_select %p102, %s103, %s104
    %p108 = pneg %p102
    %p109 = scmp.eq.s32.totalorder %s9, 1
    %p110 = por %p108, %p109
    %p111 = scmp.ne.s32.totalorder %s103, %s106
    %p112 = scmp.eq.s32.totalorder %s9, 0
    %p113 = por %p111, %p112
    %p114 = scmp.ne.s32.totalorder %s103, %s106
    %p115 = scmp.eq.s32.totalorder %s14, 1
    %p116 = por %p114, %p115
    %p117 = scmp.ne.s32.totalorder %s106, %s107
    %p118 = scmp.eq.s32.totalorder %s14, 0
    %p119 = por %p117, %p118
    %p120 = scmp.ne.s32.totalorder %s106, %s107
    %p121 = scmp.eq.s32.totalorder %s15, 1
    %p122 = por %p120, %p121
    %p124 = scmp.ne.s32.totalorder %s107, %s123
    %p125 = scmp.eq.s32.totalorder %s15, 0
    %p126 = por %p124, %p125
    %p127 = scmp.le.s32.totalorder 1, %s9
    %p128 = scmp.lt.s32.totalorder %s9, 3
    %p129 = pnand %p127, %p128
    %p130 = pneg %p129
    // Predicated region
    $region9: #{rfdn_forward.100} parent=5 // pred_check
      _
    $region10: #{rfdn_forward.100} parent=5 // pred_check_branch
      %132 = sbr.rel (%p129) target = $region12
    $region11: #{rfdn_forward.100} parent=5 // pred_region
      %s133 = ssub.s32 %s9, 1
      // Predicated region
      $region13: #{rfdn_forward.100} parent=11 // pred_check
        %p134 = pneg %p70
      $region14: #{rfdn_forward.100} parent=11 // pred_check_branch
        %136 = sbr.rel (%p134) target = $region16
      $region15: #{rfdn_forward.100} parent=11 // pred_region
        _
      $region16: #{rfdn_forward.100} parent=11 // pred_fallthru
        _
      // Predicated region
      $region17: #{rfdn_forward.100} parent=11 // pred_check
        %p137 = pneg %p91
      $region18: #{rfdn_forward.100} parent=11 // pred_check_branch
        %139 = sbr.rel (%p137) target = $region20
      $region19: #{rfdn_forward.100} parent=11 // pred_region
        _
      $region20: #{rfdn_forward.100} parent=11 // pred_fallthru
        _
    $region12: #{rfdn_forward.100} parent=5 // pred_fallthru
      _
    %p140 = scmp.lt.s32.totalorder %s9, 2
    // Predicated region
    $region21: #{rfdn_forward.100} parent=5 // pred_check
      %p141 = pneg %p140
    $region22: #{rfdn_forward.100} parent=5 // pred_check_branch
      %143 = sbr.rel (%p141) target = $region24
    $region23: #{rfdn_forward.100} parent=5 // pred_region
      // Predicated region
      $region25: #{rfdn_forward.100} parent=23 // pred_check
        %p144 = pneg %p43
      $region26: #{rfdn_forward.100} parent=23 // pred_check_branch
        %146 = sbr.rel (%p144) target = $region28
      $region27: #{rfdn_forward.100} parent=23 // pred_region
        %s147 = smul.u32 2, %s17
        %p148 = scmp.lt.s32.totalorder %s16, 1
        %s149 = scalar_select %p148, %s16, 1
        %p150 = scmp.lt.s32.totalorder %s147, 1
        %s151 = scalar_select %p150, %s147, 1
        %s152 = smul.addr %s149, 8
        %s153 = sadd.s32 %s151, %s152
        %s154 = smul.addr %s153, 4
        %s155 = scalar_lea.vmem %s0, %s154
        %s156 = smul.u32 2, %s17
      $region28: #{rfdn_forward.100} parent=23 // pred_fallthru
        _
    $region24: #{rfdn_forward.100} parent=5 // pred_fallthru
      _
    %p157 = scmp.le.s32.totalorder 1, %s9
    %p158 = scmp.lt.s32.totalorder %s9, 3
    %p159 = pnand %p157, %p158
    %p160 = pneg %p159
    // Predicated region
    $region29: #{rfdn_forward.100} parent=5 // pred_check
      _
    $region30: #{rfdn_forward.100} parent=5 // pred_check_branch
      %162 = sbr.rel (%p159) target = $region32
    $region31: #{rfdn_forward.100} parent=5 // pred_region
      %s163 = ssub.s32 %s9, 1
      %s164 = smul.u32 2, %s19
      %p165 = scmp.lt.s32.totalorder %s18, 1
      %s166 = scalar_select %p165, %s18, 1
      %p167 = scmp.lt.s32.totalorder %s164, 1
      %s168 = scalar_select %p167, %s164, 1
      %s169 = smul.addr %s166, 8
      %s170 = sadd.s32 %s168, %s169
      %s171 = smul.addr %s170, 4
      %s172 = scalar_lea.vmem %s0, %s171
      %p173 = pneg %p49
      %p174 = pneg %p46
      %p175 = pneg %p70
      %p176 = pneg %p67
      %p177 = pneg %p91
      %p178 = pneg %p88
      %p179 = pneg %p119
      %p180 = pneg %p116
      %s181 = smul.u32 2, %s19
      %p182 = scmp.lt.s32.totalorder %s18, 1
      %s183 = scalar_select %p182, %s18, 1
      %p184 = scmp.lt.s32.totalorder %s181, 1
      %s185 = scalar_select %p184, %s181, 1
      %s186 = smul.addr %s183, 2
      %s187 = sadd.s32 %s185, %s186
      %s188 = smul.addr %s187, 8
      %s189 = scalar_lea.vmem %s3, %s188
      %s190 = smul.u32 2, %s19
      %p191 = scmp.lt.s32.totalorder %s18, 1
      %s192 = scalar_select %p191, %s18, 1
      %p193 = scmp.lt.s32.totalorder %s190, 1
      %s194 = scalar_select %p193, %s190, 1
      %s195 = smul.addr %s192, 8
      %s196 = sadd.s32 %s194, %s195
      %s197 = smul.addr %s196, 4
      %s198 = scalar_lea.vmem %s0, %s197
      %s199 = smul.u32 2, %s19
      %s200 = smul.u32 2, %s19
      %p201 = scmp.lt.s32.totalorder %s18, 1
      %s202 = scalar_select %p201, %s18, 1
      %p203 = scmp.lt.s32.totalorder %s200, 1
      %s204 = scalar_select %p203, %s200, 1
      %s205 = smul.addr %s202, 2
      %s206 = sadd.s32 %s204, %s205
      %s207 = smul.addr %s206, 8
      %s208 = scalar_lea.vmem %s3, %s207
      %s209 = smul.u32 2, %s19
      %v211 = vld [vmem:[%s1] sm:$0xf]
      %v212 = vld [vmem:[%s198] sm:$0xff]
      %v213 = vld [vmem:[%s198 + $0x8] sm:$0xff]
      %v214 = vld [vmem:[%s198 + $0x10] sm:$0xff]
      %v215 = vld [vmem:[%s198 + $0x18] sm:$0xff]
      %v216 = vld [vmem:[%s2] sm:$0xff]
      %218 = vset.pattern.permute.xlu0 0
      %219 = vperm.xlu0 %218, %v216
      %v220 = vpop.permute.xlu0 %219
      %v226 = vunpack.c.l.b16 %v212
      %v227 = vunpack.c.h.b16 %v212
      %v228 = vunpack.c.l.b16 %v213
      %v229 = vunpack.c.h.b16 %v213
      %v230 = vunpack.c.l.b16 %v214
      %v231 = vunpack.c.h.b16 %v214
      %v232 = vunpack.c.l.b16 %v215
      %v233 = vunpack.c.h.b16 %v215
      %v234 = vpack.c.b16 %v228, %v226
      %v235 = vpack.c.b16 %v229, %v227
      %v236 = vpack.c.b16 %v232, %v230
      %v237 = vpack.c.b16 %v233, %v231
      %vm242 = vcmask 261120
      %v244 = vsel %vm242, %v211, 0
      %246 = vmatpush.bf16.msra.mxu0 0
      %247 = vmatpush.bf16.msra.mxu0 0
      %248 = vmatpush.bf16.msra.mxu0 0
      %249 = vmatpush.bf16.msra.mxu0 0
      %250 = vmatpush.bf16.msra.mxu0 0
      %251 = vmatpush.bf16.msra.mxu0 0
      %252 = vmatpush.bf16.msra.mxu0 %v236
      %253 = vmatpush.bf16.msra.mxu0 %v234
      %254 = vmatmul.bf16.gmra.mxu0 %v244
      %v255 = vpop.f32.mrf.mxu0
      %v256 = vadd.f32 %v220, %v255
      %v257 = vpop.f32.mrf.mxu0
      %258 = vdwg.mxu0
      %259 = vmatpush.bf16.msra.mxu0 0
      %260 = vmatpush.bf16.msra.mxu0 0
      %261 = vmatpush.bf16.msra.mxu0 0
      %262 = vmatpush.bf16.msra.mxu0 0
      %263 = vmatpush.bf16.msra.mxu0 0
      %264 = vmatpush.bf16.msra.mxu0 0
      %265 = vmatpush.bf16.msra.mxu0 %v237
      %266 = vmatpush.bf16.msra.mxu0 %v235
      %267 = vmatmul.bf16.gmra.mxu0 %v244
      %v268 = vpop.f32.mrf.mxu0
      %v269 = vadd.f32 %v220, %v268
      %v270 = vpop.f32.mrf.mxu0
      %271 = vdwg.mxu0
      %vm272 = vcmp.ge.f32.partialorder %v256, 0.0
      %vm273 = vcmp.ge.f32.partialorder %v269, 0.0
      %v274 = vmul.f32 %v256, 0.05
      %v275 = vmul.f32 %v269, 0.05
      %v276 = vsel %vm272, %v256, %v274
      %v277 = vsel %vm273, %v269, %v275
      %278 = vst [vmem:[%s208] sm:$0xff] %v276
      %279 = vst [vmem:[%s208 + $0x8] sm:$0xff] %v277
      %s280 = smul.u32 2, %s19
      %p281 = scmp.lt.s32.totalorder %s18, 1
      %s282 = scalar_select %p281, %s18, 1
      %p283 = scmp.lt.s32.totalorder %s280, 1
      %s284 = scalar_select %p283, %s280, 1
      %s285 = smul.addr %s282, 2
      %s286 = sadd.s32 %s284, %s285
      %s287 = smul.addr %s286, 8
      %s288 = scalar_lea.vmem %s3, %s287
      // Predicated region
      $region33: #{rfdn_forward.100} parent=31 // pred_check
        %p289 = pneg %p116
      $region34: #{rfdn_forward.100} parent=31 // pred_check_branch
        %291 = sbr.rel (%p289) target = $region36
      $region35: #{rfdn_forward.100} parent=31 // pred_region
        %s292 = smul.u32 2, %s19
      $region36: #{rfdn_forward.100} parent=31 // pred_fallthru
        _
    $region32: #{rfdn_forward.100} parent=5 // pred_fallthru
      _
    %p293 = scmp.le.s32.totalorder 2, %s9
    // Predicated region
    $region37: #{rfdn_forward.100} parent=5 // pred_check
      %p294 = pneg %p293
    $region38: #{rfdn_forward.100} parent=5 // pred_check_branch
      %296 = sbr.rel (%p294) target = $region40
    $region39: #{rfdn_forward.100} parent=5 // pred_region
      %s297 = ssub.s32 %s9, 2
      // Predicated region
      $region41: #{rfdn_forward.100} parent=39 // pred_check
        %p298 = pneg %p122
      $region42: #{rfdn_forward.100} parent=39 // pred_check_branch
        %300 = sbr.rel (%p298) target = $region44
      $region43: #{rfdn_forward.100} parent=39 // pred_region
        %s301 = smul.u32 2, %s21
        %p302 = scmp.lt.s32.totalorder %s20, 1
        %s303 = scalar_select %p302, %s20, 1
        %p304 = scmp.lt.s32.totalorder %s301, 1
        %s305 = scalar_select %p304, %s301, 1
        %s306 = smul.addr %s303, 2
        %s307 = sadd.s32 %s305, %s306
        %s308 = smul.addr %s307, 8
        %s309 = scalar_lea.vmem %s3, %s308
      $region44: #{rfdn_forward.100} parent=39 // pred_fallthru
        _
    $region40: #{rfdn_forward.100} parent=5 // pred_fallthru
      _
  $region6: #{rfdn_forward.100} parent=0 // loop_footer
    %s13 = sadd.s32 1, %s9
  $region7: #{rfdn_forward.100} parent=0 // loop_footer_branch
    %8 = sbr.rel target = $region3
  $region8: #{rfdn_forward.100} parent=0 // loop_exit
    _

// kernel: rfdn_forward.101
$region0: #{rfdn_forward.101}
  #allocation0 [shape = 'u32[]', space=smem, size = 0x4, offset = 0x4, fixed_abs, tag = 'smem constant byte address 0x4 - core index']
  #allocation1 [shape = 'u32[72,128]{1,0:T(1,128)}', space=vmem, size = 0x9000, scoped, tag = 'internal scratch']
  %s0 = inlined_call_operand.vmem [shape: bf16[2,72,256], index: 0, kind: input, shape index: {}]
  %s1 = inlined_call_operand.vmem [shape: bf16[8,72], index: 1, kind: input, shape index: {}]
  %s2 = inlined_call_operand.vmem [shape: f32[8,1], index: 2, kind: input, shape index: {}]
  %s3 = inlined_call_operand.vmem [shape: f32[2,8,256], index: 3, kind: input, shape index: {}]
  %s4 = inlined_call_operand.vmem [shape: f32[2,8,256], index: 4, kind: output, shape index: {}]
  %s5 = sld [smem:[#allocation0]]
  $region49: #{rfdn_forward.101} parent=0
    _
  %s7 = ssub.s32 1, %s5
  %s8 = scalar_select 0, %s7, %s5
  loop: start=0, step=1, limit=4
  $region2: #{rfdn_forward.101} parent=0 // loop_pre_header
    _
  $region3: #{rfdn_forward.101} parent=0 // loop_header
    %s10 = sphi 0, %s14
    %p11 = scmp.ge.s32.totalorder %s10, 4
    %s17 = sphi 0, %s29
    %s18 = sphi 0, %s25
    %s19 = sphi 0, %s17
    %s20 = sphi 0, %s18
    %s21 = sphi 0, %s19
    %s22 = sphi 0, %s20
    %s34 = sphi 0, %s36
    %s37 = sphi 0, %s34
    %s38 = sphi 0, %s37
    %s54 = sphi 0, %s38
    %s58 = sphi 0, %s58
    %s60 = sphi 0, %s58
    %s61 = sphi 0, %s60
    %s75 = sphi 0, %s61
    %s79 = sphi 0, %s79
    %s81 = sphi 0, %s79
    %s82 = sphi 0, %s81
    %s96 = sphi 0, %s82
    %s104 = sphi 0, %s106
    %s107 = sphi 0, %s104
    %s108 = sphi 0, %s107
    %s124 = sphi 0, %s108
    %s132 = sphi 0, %s134
    %s135 = sphi 0, %s132
    %s136 = sphi 0, %s135
    %s152 = sphi 0, %s136
  $region4: #{rfdn_forward.101} parent=0 // loop_header_branch
    %13 = sbr.rel (%p11) target = $region8
  $region5: #{rfdn_forward.101} parent=0 // loop_body
    %s15 = ssub.s32 %s10, 1
    %s16 = ssub.s32 %s10, 2
    %s23 = sadd.s32 1, %s18
    %p24 = scmp.ge.s32.totalorder %s23, 1
    %s25 = scalar_select %p24, 0, %s23
    %s26 = sadd.s32 1, %s17
    %s27 = scalar_select %p24, %s26, %s17
    %p28 = scmp.ge.s32.totalorder %s27, 2
    %s29 = scalar_select %p28, 0, %s27
    %s30 = ssub.s32 %s17, %s29
    %s31 = ssub.s32 %s18, %s25
    %s32 = sor.u32 %s30, %s31
    %p33 = scmp.eq.s32.totalorder %s32, 0
    %s35 = sadd.s32 %s34, 1
    %s36 = scalar_select %p33, %s34, %s35
    %p39 = pneg %p33
    %p40 = scmp.eq.s32.totalorder %s10, 1
    %p41 = por %p39, %p40
    %p42 = scmp.ne.s32.totalorder %s34, %s37
    %p43 = scmp.eq.s32.totalorder %s10, 0
    %p44 = por %p42, %p43
    %p45 = scmp.ne.s32.totalorder %s34, %s37
    %p46 = scmp.eq.s32.totalorder %s15, 1
    %p47 = por %p45, %p46
    %p48 = scmp.ne.s32.totalorder %s37, %s38
    %p49 = scmp.eq.s32.totalorder %s15, 0
    %p50 = por %p48, %p49
    %p51 = scmp.ne.s32.totalorder %s37, %s38
    %p52 = scmp.eq.s32.totalorder %s16, 1
    %p53 = por %p51, %p52
    %p55 = scmp.ne.s32.totalorder %s38, %s54
    %p56 = scmp.eq.s32.totalorder %s16, 0
    %p57 = por %p55, %p56
    %s59 = sadd.s32 %s58, 1
    %p62 = scmp.eq.s32.totalorder %s10, 1
    %p63 = scmp.ne.s32.totalorder %s58, %s60
    %p64 = scmp.eq.s32.totalorder %s10, 0
    %p65 = por %p63, %p64
    %p66 = scmp.ne.s32.totalorder %s58, %s60
    %p67 = scmp.eq.s32.totalorder %s15, 1
    %p68 = por %p66, %p67
    %p69 = scmp.ne.s32.totalorder %s60, %s61
    %p70 = scmp.eq.s32.totalorder %s15, 0
    %p71 = por %p69, %p70
    %p72 = scmp.ne.s32.totalorder %s60, %s61
    %p73 = scmp.eq.s32.totalorder %s16, 1
    %p74 = por %p72, %p73
    %p76 = scmp.ne.s32.totalorder %s61, %s75
    %p77 = scmp.eq.s32.totalorder %s16, 0
    %p78 = por %p76, %p77
    %s80 = sadd.s32 %s79, 1
    %p83 = scmp.eq.s32.totalorder %s10, 1
    %p84 = scmp.ne.s32.totalorder %s79, %s81
    %p85 = scmp.eq.s32.totalorder %s10, 0
    %p86 = por %p84, %p85
    %p87 = scmp.ne.s32.totalorder %s79, %s81
    %p88 = scmp.eq.s32.totalorder %s15, 1
    %p89 = por %p87, %p88
    %p90 = scmp.ne.s32.totalorder %s81, %s82
    %p91 = scmp.eq.s32.totalorder %s15, 0
    %p92 = por %p90, %p91
    %p93 = scmp.ne.s32.totalorder %s81, %s82
    %p94 = scmp.eq.s32.totalorder %s16, 1
    %p95 = por %p93, %p94
    %p97 = scmp.ne.s32.totalorder %s82, %s96
    %p98 = scmp.eq.s32.totalorder %s16, 0
    %p99 = por %p97, %p98
    %s100 = ssub.s32 %s17, %s29
    %s101 = ssub.s32 %s18, %s25
    %s102 = sor.u32 %s100, %s101
    %p103 = scmp.eq.s32.totalorder %s102, 0
    %s105 = sadd.s32 %s104, 1
    %s106 = scalar_select %p103, %s104, %s105
    %p109 = pneg %p103
    %p110 = scmp.eq.s32.totalorder %s10, 1
    %p111 = por %p109, %p110
    %p112 = scmp.ne.s32.totalorder %s104, %s107
    %p113 = scmp.eq.s32.totalorder %s10, 0
    %p114 = por %p112, %p113
    %p115 = scmp.ne.s32.totalorder %s104, %s107
    %p116 = scmp.eq.s32.totalorder %s15, 1
    %p117 = por %p115, %p116
    %p118 = scmp.ne.s32.totalorder %s107, %s108
    %p119 = scmp.eq.s32.totalorder %s15, 0
    %p120 = por %p118, %p119
    %p121 = scmp.ne.s32.totalorder %s107, %s108
    %p122 = scmp.eq.s32.totalorder %s16, 1
    %p123 = por %p121, %p122
    %p125 = scmp.ne.s32.totalorder %s108, %s124
    %p126 = scmp.eq.s32.totalorder %s16, 0
    %p127 = por %p125, %p126
    %s128 = ssub.s32 %s17, %s29
    %s129 = ssub.s32 %s18, %s25
    %s130 = sor.u32 %s128, %s129
    %p131 = scmp.eq.s32.totalorder %s130, 0
    %s133 = sadd.s32 %s132, 1
    %s134 = scalar_select %p131, %s132, %s133
    %p137 = pneg %p131
    %p138 = scmp.eq.s32.totalorder %s10, 1
    %p139 = por %p137, %p138
    %p140 = scmp.ne.s32.totalorder %s132, %s135
    %p141 = scmp.eq.s32.totalorder %s10, 0
    %p142 = por %p140, %p141
    %p143 = scmp.ne.s32.totalorder %s132, %s135
    %p144 = scmp.eq.s32.totalorder %s15, 1
    %p145 = por %p143, %p144
    %p146 = scmp.ne.s32.totalorder %s135, %s136
    %p147 = scmp.eq.s32.totalorder %s15, 0
    %p148 = por %p146, %p147
    %p149 = scmp.ne.s32.totalorder %s135, %s136
    %p150 = scmp.eq.s32.totalorder %s16, 1
    %p151 = por %p149, %p150
    %p153 = scmp.ne.s32.totalorder %s136, %s152
    %p154 = scmp.eq.s32.totalorder %s16, 0
    %p155 = por %p153, %p154
    %p156 = scmp.le.s32.totalorder 1, %s10
    %p157 = scmp.lt.s32.totalorder %s10, 3
    %p158 = pnand %p156, %p157
    %p159 = pneg %p158
    // Predicated region
    $region9: #{rfdn_forward.101} parent=5 // pred_check
      _
    $region10: #{rfdn_forward.101} parent=5 // pred_check_branch
      %161 = sbr.rel (%p158) target = $region12
    $region11: #{rfdn_forward.101} parent=5 // pred_region
      %s162 = ssub.s32 %s10, 1
      // Predicated region
      $region13: #{rfdn_forward.101} parent=11 // pred_check
        %p163 = pneg %p71
      $region14: #{rfdn_forward.101} parent=11 // pred_check_branch
        %165 = sbr.rel (%p163) target = $region16
      $region15: #{rfdn_forward.101} parent=11 // pred_region
        _
      $region16: #{rfdn_forward.101} parent=11 // pred_fallthru
        _
      // Predicated region
      $region17: #{rfdn_forward.101} parent=11 // pred_check
        %p166 = pneg %p92
      $region18: #{rfdn_forward.101} parent=11 // pred_check_branch
        %168 = sbr.rel (%p166) target = $region20
      $region19: #{rfdn_forward.101} parent=11 // pred_region
        _
      $region20: #{rfdn_forward.101} parent=11 // pred_fallthru
        _
    $region12: #{rfdn_forward.101} parent=5 // pred_fallthru
      _
    %p169 = scmp.lt.s32.totalorder %s10, 2
    // Predicated region
    $region21: #{rfdn_forward.101} parent=5 // pred_check
      %p170 = pneg %p169
    $region22: #{rfdn_forward.101} parent=5 // pred_check_branch
      %172 = sbr.rel (%p170) target = $region24
    $region23: #{rfdn_forward.101} parent=5 // pred_region
      // Predicated region
      $region25: #{rfdn_forward.101} parent=23 // pred_check
        %p173 = pneg %p44
      $region26: #{rfdn_forward.101} parent=23 // pred_check_branch
        %175 = sbr.rel (%p173) target = $region28
      $region27: #{rfdn_forward.101} parent=23 // pred_region
        %s176 = smul.u32 2, %s18
        %p177 = scmp.lt.s32.totalorder %s17, 1
        %s178 = scalar_select %p177, %s17, 1
        %p179 = scmp.lt.s32.totalorder %s176, 1
        %s180 = scalar_select %p179, %s176, 1
        %s181 = smul.addr %s178, 18
        %s182 = sadd.s32 %s180, %s181
        %s183 = smul.addr %s182, 4
        %s184 = scalar_lea.vmem %s0, %s183
        %s185 = smul.u32 2, %s18
      $region28: #{rfdn_forward.101} parent=23 // pred_fallthru
        _
      // Predicated region
      $region29: #{rfdn_forward.101} parent=23 // pred_check
        %p186 = pneg %p114
      $region30: #{rfdn_forward.101} parent=23 // pred_check_branch
        %188 = sbr.rel (%p186) target = $region32
      $region31: #{rfdn_forward.101} parent=23 // pred_region
        %s189 = smul.u32 2, %s18
        %p190 = scmp.lt.s32.totalorder %s17, 1
        %s191 = scalar_select %p190, %s17, 1
        %p192 = scmp.lt.s32.totalorder %s189, 1
        %s193 = scalar_select %p192, %s189, 1
        %s194 = smul.addr %s191, 2
        %s195 = sadd.s32 %s193, %s194
        %s196 = smul.addr %s195, 8
        %s197 = scalar_lea.vmem %s3, %s196
        %s198 = smul.u32 2, %s18
      $region32: #{rfdn_forward.101} parent=23 // pred_fallthru
        _
    $region24: #{rfdn_forward.101} parent=5 // pred_fallthru
      _
    %p199 = scmp.le.s32.totalorder 1, %s10
    %p200 = scmp.lt.s32.totalorder %s10, 3
    %p201 = pnand %p199, %p200
    %p202 = pneg %p201
    // Predicated region
    $region33: #{rfdn_forward.101} parent=5 // pred_check
      _
    $region34: #{rfdn_forward.101} parent=5 // pred_check_branch
      %204 = sbr.rel (%p201) target = $region36
    $region35: #{rfdn_forward.101} parent=5 // pred_region
      %s205 = ssub.s32 %s10, 1
      %s206 = smul.u32 2, %s20
      %p207 = scmp.lt.s32.totalorder %s19, 1
      %s208 = scalar_select %p207, %s19, 1
      %p209 = scmp.lt.s32.totalorder %s206, 1
      %s210 = scalar_select %p209, %s206, 1
      %s211 = smul.addr %s208, 18
      %s212 = sadd.s32 %s210, %s211
      %s213 = smul.addr %s212, 4
      %s214 = scalar_lea.vmem %s0, %s213
      %p215 = pneg %p50
      %p216 = pneg %p47
      %p217 = pneg %p71
      %p218 = pneg %p68
      %p219 = pneg %p92
      %p220 = pneg %p89
      %s221 = smul.u32 2, %s20
      %p222 = scmp.lt.s32.totalorder %s19, 1
      %s223 = scalar_select %p222, %s19, 1
      %p224 = scmp.lt.s32.totalorder %s221, 1
      %s225 = scalar_select %p224, %s221, 1
      %s226 = smul.addr %s223, 2
      %s227 = sadd.s32 %s225, %s226
      %s228 = smul.addr %s227, 8
      %s229 = scalar_lea.vmem %s3, %s228
      %p230 = pneg %p120
      %p231 = pneg %p117
      %p232 = pneg %p148
      %p233 = pneg %p145
      %s234 = smul.u32 2, %s20
      %p235 = scmp.lt.s32.totalorder %s19, 1
      %s236 = scalar_select %p235, %s19, 1
      %p237 = scmp.lt.s32.totalorder %s234, 1
      %s238 = scalar_select %p237, %s234, 1
      %s239 = smul.addr %s236, 2
      %s240 = sadd.s32 %s238, %s239
      %s241 = smul.addr %s240, 8
      %s242 = scalar_lea.vmem %s4, %s241
      %s243 = smul.u32 2, %s20
      %p244 = scmp.lt.s32.totalorder %s19, 1
      %s245 = scalar_select %p244, %s19, 1
      %p246 = scmp.lt.s32.totalorder %s243, 1
      %s247 = scalar_select %p246, %s243, 1
      %s248 = smul.addr %s245, 18
      %s249 = sadd.s32 %s247, %s248
      %s250 = smul.addr %s249, 4
      %s251 = scalar_lea.vmem %s0, %s250
      %s252 = smul.u32 2, %s20
      %s253 = smul.u32 2, %s20
      %p254 = scmp.lt.s32.totalorder %s19, 1
      %s255 = scalar_select %p254, %s19, 1
      %p256 = scmp.lt.s32.totalorder %s253, 1
      %s257 = scalar_select %p256, %s253, 1
      %s258 = smul.addr %s255, 2
      %s259 = sadd.s32 %s257, %s258
      %s260 = smul.addr %s259, 8
      %s261 = scalar_lea.vmem %s3, %s260
      %s262 = smul.u32 2, %s20
      %s263 = smul.u32 2, %s20
      %p264 = scmp.lt.s32.totalorder %s19, 1
      %s265 = scalar_select %p264, %s19, 1
      %p266 = scmp.lt.s32.totalorder %s263, 1
      %s267 = scalar_select %p266, %s263, 1
      %s268 = smul.addr %s265, 2
      %s269 = sadd.s32 %s267, %s268
      %s270 = smul.addr %s269, 8
      %s271 = scalar_lea.vmem %s4, %s270
      %s272 = smul.u32 2, %s20
      %v274 = vld [vmem:[%s1] sm:$0xf]
      %v275 = vld [vmem:[%s251] sm:$0xff]
      %v276 = vld [vmem:[%s251 + $0x8] sm:$0xff]
      %v277 = vld [vmem:[%s251 + $0x10] sm:$0xff]
      %v278 = vld [vmem:[%s251 + $0x18] sm:$0xff]
      %v279 = vld [vmem:[%s251 + $0x20] sm:$0xff]
      %v280 = vld [vmem:[%s251 + $0x28] sm:$0xff]
      %v281 = vld [vmem:[%s251 + $0x30] sm:$0xff]
      %v282 = vld [vmem:[%s251 + $0x38] sm:$0xff]
      %v283 = vld [vmem:[%s251 + $0x40] sm:$0xff]
      %v284 = vld [vmem:[%s2] sm:$0xff]
      %286 = vset.pattern.permute.xlu0 0
      %287 = vperm.xlu0 %286, %v284
      %v288 = vpop.permute.xlu0 %287
      %v299 = vunpack.c.l.b16 %v275
      %v300 = vunpack.c.h.b16 %v275
      %v301 = vunpack.c.l.b16 %v276
      %v302 = vunpack.c.h.b16 %v276
      %v303 = vunpack.c.l.b16 %v277
      %v304 = vunpack.c.h.b16 %v277
      %v305 = vunpack.c.l.b16 %v278
      %v306 = vunpack.c.h.b16 %v278
      %v307 = vunpack.c.l.b16 %v279
      %v308 = vunpack.c.h.b16 %v279
      %v309 = vunpack.c.l.b16 %v280
      %v310 = vunpack.c.h.b16 %v280
      %v311 = vunpack.c.l.b16 %v281
      %v312 = vunpack.c.h.b16 %v281
      %v313 = vunpack.c.l.b16 %v282
      %v314 = vunpack.c.h.b16 %v282
      %v315 = vunpack.c.l.b16 %v283
      %v316 = vunpack.c.h.b16 %v283
      %v317 = vpack.c.b16 %v301, %v299
      %v318 = vpack.c.b16 %v302, %v300
      %v319 = vpack.c.b16 %v305, %v303
      %v320 = vpack.c.b16 %v306, %v304
      %v321 = vpack.c.b16 %v309, %v307
      %v322 = vpack.c.b16 %v310, %v308
      %v323 = vpack.c.b16 %v313, %v311
      %v324 = vpack.c.b16 %v314, %v312
      %v325 = vpack.c.b16 %v315, %v315
      %v326 = vpack.c.b16 %v316, %v316
      %vm335 = vcmask 588800
      %v337 = vsel %vm335, %v274, 0
      %vm339 = vcmask 1043456
      %v341 = vsel %vm339, %v325, 0
      %v344 = vsel %vm339, %v326, 0
      %346 = vmatpush.bf16.msra.mxu0 0
      %347 = vmatpush.bf16.msra.mxu0 0
      %348 = vmatpush.bf16.msra.mxu0 0
      %349 = vmatpush.bf16.msra.mxu0 %v341
      %350 = vmatpush.bf16.msra.mxu0 %v323
      %351 = vmatpush.bf16.msra.mxu0 %v321
      %352 = vmatpush.bf16.msra.mxu0 %v319
      %353 = vmatpush.bf16.msra.mxu0 %v317
      %354 = vmatmul.bf16.gmra.mxu0 %v337
      %v355 = vpop.f32.mrf.mxu0
      %v356 = vadd.f32 %v288, %v355
      %v357 = vpop.f32.mrf.mxu0
      %358 = vdwg.mxu0
      %359 = vmatpush.bf16.msra.mxu0 0
      %360 = vmatpush.bf16.msra.mxu0 0
      %361 = vmatpush.bf16.msra.mxu0 0
      %362 = vmatpush.bf16.msra.mxu0 %v344
      %363 = vmatpush.bf16.msra.mxu0 %v324
      %364 = vmatpush.bf16.msra.mxu0 %v322
      %365 = vmatpush.bf16.msra.mxu0 %v320
      %366 = vmatpush.bf16.msra.mxu0 %v318
      %367 = vmatmul.bf16.gmra.mxu0 %v337
      %v368 = vpop.f32.mrf.mxu0
      %v369 = vadd.f32 %v288, %v368
      %v370 = vpop.f32.mrf.mxu0
      %371 = vdwg.mxu0
      %v372 = vld [vmem:[%s261] sm:$0xff]
      %v373 = vld [vmem:[%s261 + $0x8] sm:$0xff]
      %v374 = vadd.f32 %v356, %v372
      %v375 = vadd.f32 %v369, %v373
      %376 = vst [vmem:[%s271] sm:$0xff] %v374
      %377 = vst [vmem:[%s271 + $0x8] sm:$0xff] %v375
      %s378 = smul.u32 2, %s20
      %p379 = scmp.lt.s32.totalorder %s19, 1
      %s380 = scalar_select %p379, %s19, 1
      %p381 = scmp.lt.s32.totalorder %s378, 1
      %s382 = scalar_select %p381, %s378, 1
      %s383 = smul.addr %s380, 2
      %s384 = sadd.s32 %s382, %s383
      %s385 = smul.addr %s384, 8
      %s386 = scalar_lea.vmem %s4, %s385
      // Predicated region
      $region37: #{rfdn_forward.101} parent=35 // pred_check
        %p387 = pneg %p145
      $region38: #{rfdn_forward.101} parent=35 // pred_check_branch
        %389 = sbr.rel (%p387) target = $region40
      $region39: #{rfdn_forward.101} parent=35 // pred_region
        %s390 = smul.u32 2, %s20
      $region40: #{rfdn_forward.101} parent=35 // pred_fallthru
        _
    $region36: #{rfdn_forward.101} parent=5 // pred_fallthru
      _
    %p391 = scmp.le.s32.totalorder 2, %s10
    // Predicated region
    $region41: #{rfdn_forward.101} parent=5 // pred_check
      %p392 = pneg %p391
    $region42: #{rfdn_forward.101} parent=5 // pred_check_branch
      %394 = sbr.rel (%p392) target = $region44
    $region43: #{rfdn_forward.101} parent=5 // pred_region
      %s395 = ssub.s32 %s10, 2
      // Predicated region
      $region45: #{rfdn_forward.101} parent=43 // pred_check
        %p396 = pneg %p151
      $region46: #{rfdn_forward.101} parent=43 // pred_check_branch
        %398 = sbr.rel (%p396) target = $region48
      $region47: #{rfdn_forward.101} parent=43 // pred_region
        %s399 = smul.u32 2, %s22
        %p400 = scmp.lt.s32.totalorder %s21, 1
        %s401 = scalar_select %p400, %s21, 1
        %p402 = scmp.lt.s32.totalorder %s399, 1
        %s403 = scalar_select %p402, %s399, 1
        %s404 = smul.addr %s401, 2
        %s405 = sadd.s32 %s403, %s404
        %s406 = smul.addr %s405, 8
        %s407 = scalar_lea.vmem %s4, %s406
      $region48: #{rfdn_forward.101} parent=43 // pred_fallthru
        _
    $region44: #{rfdn_forward.101} parent=5 // pred_fallthru
      _
  $region6: #{rfdn_forward.101} parent=0 // loop_footer
    %s14 = sadd.s32 1, %s10
  $region7: #{rfdn_forward.101} parent=0 // loop_footer_branch
    %9 = sbr.rel target = $region3
  $region8: #{rfdn_forward.101} parent=0 // loop_exit
    _

</llo_original>
